<compile_context>
chip_gen: v7x
topology: tpu7x:2x2x1
jax: 0.10.0
libtpu: 0.0.40
codegen_flags: <defaults>
</compile_context>

<pallas_src>
import functools

import numpy as np
import jax
import jax.numpy as jnp
from jax import lax
from jax.experimental import pallas as pl
from jax.experimental.pallas import tpu as pltpu


# ---------------------------------------------------------------------------
# in-kernel helpers (pure jnp, traced inside the Pallas body)
# ---------------------------------------------------------------------------
def _softplus(x):
    # numerically stable softplus: max(x,0) + log(1 + exp(-|x|))
    return jnp.maximum(x, 0.0) + jnp.log(1.0 + jnp.exp(-jnp.abs(x)))


def _softmax_rows(x):
    m = jnp.max(x, axis=1, keepdims=True)
    e = jnp.exp(x - m)
    return e * pl.reciprocal(jnp.sum(e, axis=1, keepdims=True), approx=True)


def _batchnorm_train(x, eps):
    # BatchNorm1d, training mode, weight=1 (frozen), bias=0, biased variance.
    mu = jnp.mean(x, axis=0, keepdims=True)
    xc = x - mu
    var = jnp.mean(xc * xc, axis=0, keepdims=True)
    return xc * lax.rsqrt(var + eps)


# ---------------------------------------------------------------------------
# fused forward kernel
# ---------------------------------------------------------------------------
def scholar_fwd_kernel(
    # inputs
    x_bow_ref,        # [B, V]      f32
    bert_ref,         # [B, 1024]   bf16
    noise_ref,        # [B, T]      f32  reparameterization noise
    w_adapt_ref,      # [1024, V]   bf16
    w_emb_bow_ref,    # [V, E]      f32  first half of embeddings_x_layer.weight.T
    w_emb_bert_ref,   # [V, E]      f32  second half
    w_mean_ref,       # [E, T]      f32
    w_logvar_ref,     # [E, T]      f32
    w_beta_ref,       # [T, V]      f32
    misc_ref,         # [8, W]      f32  packed biases / priors (see _pack_misc)
    # outputs
    theta_ref,        # [B, T]
    xrecon_ref,       # [B, V]
    stats_ref,        # [1, 128]  lane 0 = mean(NL), lane 1 = mean(KLD)
    *,
    eta_bn_prop,
    var_scale,
    bn_eps,
):
    f32 = jnp.float32
    B, V = x_bow_ref.shape
    T = noise_ref.shape[1]

    x_bow = x_bow_ref[...]

    # ---- unpack the fused small-parameter slab -----------------------------
    misc = misc_ref[...]
    b_adapt       = misc[0:1, :V]
    b_beta        = misc[1:2, :V]
    b_mean        = misc[2:3, :T]
    b_logvar      = misc[3:4, :T]
    prior_mean    = misc[4:5, :T]
    prior_logvar  = misc[5:6, :T]
    inv_prior_var = misc[6:7, :T]   # precomputed 1/exp(prior_logvar)

    # ---- adapt_bert: Linear(1024 -> V)  (bf16 inputs, f32 accumulation) ----
    x_bert = (
        jnp.dot(bert_ref[...], w_adapt_ref[...], preferred_element_type=f32)
        + b_adapt
    )

    # ---- embeddings_x_layer on cat(X_bow, x_bert)  (split matmul) ----------
    en0 = (
        jnp.dot(x_bow, w_emb_bow_ref[...], preferred_element_type=f32)
        + jnp.dot(x_bert, w_emb_bert_ref[...], preferred_element_type=f32)
    )
    enc = _softplus(en0)          # encoder dropout == identity (eval mode)

    # ---- mean / logvar heads + BatchNorm ------------------------------------
    post_mean = jnp.dot(enc, w_mean_ref[...], preferred_element_type=f32) + b_mean
    post_logvar = (
        jnp.dot(enc, w_logvar_ref[...], preferred_element_type=f32) + b_logvar
    )
    post_mean_bn = _batchnorm_train(post_mean, bn_eps)
    post_logvar_bn = _batchnorm_train(post_logvar, bn_eps)

    post_std = jnp.exp(0.5 * post_logvar_bn)     # sqrt(exp(lv)) == exp(lv/2)
    post_var = post_std * post_std

    # ---- reparameterization + theta -----------------------------------------
    z = post_mean_bn + post_std * noise_ref[...] * var_scale
    theta = _softmax_rows(z)      # z dropout == identity in eval mode
    theta_ref[...] = theta

    # ---- decoder: beta_layer + eta BatchNorm + reconstruction ---------------
    eta = jnp.dot(theta, w_beta_ref[...], preferred_element_type=f32) + b_beta
    eta_bn = _batchnorm_train(eta, bn_eps)

    if eta_bn_prop == 1.0:
        # statically drop the un-batch-normed softmax branch; NL via log-softmax
        m = jnp.max(eta_bn, axis=1, keepdims=True)
        e = jnp.exp(eta_bn - m)
        s = jnp.sum(e, axis=1, keepdims=True)
        x_recon = e * pl.reciprocal(s, approx=True)
        log_x_recon = (eta_bn - m) - jnp.log(s)
    else:
        x_recon_bn = _softmax_rows(eta_bn)
        x_recon_no_bn = _softmax_rows(eta)
        x_recon = eta_bn_prop * x_recon_bn + (1.0 - eta_bn_prop) * x_recon_no_bn
        log_x_recon = jnp.log(x_recon + 1e-10)
    xrecon_ref[...] = x_recon

    # ---- loss: NL + KL divergence, averaged in-kernel (do_average=True) -----
    nl_rows = -jnp.sum(x_bow * log_x_recon, axis=1, keepdims=True)       # [B,1]
    nl_mean = jnp.sum(nl_rows, axis=0, keepdims=True) * (1.0 / B)        # [1,1]

    diff = post_mean_bn - prior_mean
    kld_terms = (
        post_var * inv_prior_var
        + diff * diff * inv_prior_var
        + (prior_logvar - post_logvar_bn)
    )
    kld_rows = jnp.sum(kld_terms, axis=1, keepdims=True)                 # [B,1]
    kld_mean = 0.5 * (
        jnp.sum(kld_rows, axis=0, keepdims=True) * (1.0 / B) - float(T)
    )                                                                    # [1,1]

    # lane-dense [1,128] stats row: lane 0 = mean(NL), lane 1 = mean(KLD)
    lane = lax.broadcasted_iota(jnp.int32, stats_ref.shape, 1)
    stats_ref[...] = (
        jnp.where(lane == 0, nl_mean, 0.0) + jnp.where(lane == 1, kld_mean, 0.0)
    )


# ---------------------------------------------------------------------------
# wrapper: parameter setup (plain JAX glue) + pallas_call
# ---------------------------------------------------------------------------
def make_params(key, vocab_size, emb_dim, n_topics, bert_dim=1024):
    """Deterministic parameter init mimicking the shapes in torchScholar.__init__."""
    ks = jax.random.split(key, 8)

    def uniform(k, shape, limit):
        return jax.random.uniform(k, shape, jnp.float32, -limit, limit)

    # adapt_bert: Linear(1024, V) — PyTorch default init U(-1/sqrt(fan_in), ...)
    k_ab = 1.0 / np.sqrt(bert_dim)
    w_adapt = uniform(ks[0], (vocab_size, bert_dim), k_ab)
    b_adapt = uniform(ks[1], (1, vocab_size), k_ab)

    # embeddings_x_layer: Linear(2V, E, bias=False), xavier_uniform
    lim_emb = np.sqrt(6.0 / (2 * vocab_size + emb_dim))
    w_emb = uniform(ks[2], (emb_dim, 2 * vocab_size), lim_emb)

    # mean / logvar layers: Linear(E, T)
    k_mt = 1.0 / np.sqrt(emb_dim)
    w_mean = uniform(ks[3], (n_topics, emb_dim), k_mt)
    b_mean = uniform(ks[4], (1, n_topics), k_mt)
    w_logvar = uniform(ks[5], (n_topics, emb_dim), k_mt)
    b_logvar = uniform(ks[6], (1, n_topics), k_mt)

    # beta_layer: Linear(T, V), xavier_uniform weight, default bias
    lim_beta = np.sqrt(6.0 / (n_topics + vocab_size))
    kb = jax.random.split(ks[7], 2)
    w_beta = uniform(kb[0], (vocab_size, n_topics), lim_beta)
    b_beta = uniform(kb[1], (1, vocab_size), 1.0 / np.sqrt(n_topics))

    return dict(
        # dominant weight stored pre-transposed AND in bf16 (halves HBM bytes)
        w_adapt_t=w_adapt.T.astype(jnp.bfloat16),  # [1024, V] bf16
        b_adapt=b_adapt,                           # [1, V]
        w_emb_bow_t=w_emb[:, :vocab_size].T,       # [V, E]
        w_emb_bert_t=w_emb[:, vocab_size:].T,      # [V, E]
        w_mean_t=w_mean.T,                         # [E, T]
        b_mean=b_mean,                             # [1, T]
        w_logvar_t=w_logvar.T,                     # [E, T]
        b_logvar=b_logvar,                         # [1, T]
        w_beta_t=w_beta.T,                         # [T, V]
        b_beta=b_beta,                             # [1, V]
    )


def make_prior(alpha, n_topics):
    """Same arithmetic as torchScholar.__init__ (alpha: np.array [1, n_topics])."""
    log_alpha = np.log(alpha)
    prior_mean = (log_alpha.T - np.mean(log_alpha, 1)).T
    prior_var = (
        (1.0 / alpha * (1.0 - 2.0 / n_topics)).T
        + 1.0 / (n_topics * n_topics) * np.sum(1.0 / alpha, 1)
    ).T
    prior_mean = np.asarray(prior_mean, np.float32).reshape((1, n_topics))
    prior_logvar = np.log(np.asarray(prior_var)).astype(np.float32).reshape(
        (1, n_topics)
    )
    return jnp.asarray(prior_mean), jnp.asarray(prior_logvar)


def pack_misc_slab(params, prior_mean, prior_logvar):
    """Pack all small bias/prior vectors into one lane-padded [8, W] f32 slab.

    Row layout:
      0: b_adapt[V]   1: b_beta[V]   2: b_mean[T]   3: b_logvar[T]
      4: prior_mean[T]  5: prior_logvar[T]  6: 1/prior_var[T]  7: zero padding
    Built once on the host side so the kernel takes a single DMA'd input and
    never exponentiates / divides constants.
    """
    V = params["b_adapt"].shape[1]
    W = max(128, ((V + 127) // 128) * 128)

    def row(v):
        v = v.astype(jnp.float32)
        return jnp.pad(v, ((0, 0), (0, W - v.shape[1])))

    inv_prior_var = jnp.exp(-prior_logvar)
    rows = [
        row(params["b_adapt"]),
        row(params["b_beta"]),
        row(params["b_mean"]),
        row(params["b_logvar"]),
        row(prior_mean),
        row(prior_logvar),
        row(inv_prior_var),
        jnp.zeros((1, W), jnp.float32),
    ]
    return jnp.concatenate(rows, axis=0)  # [8, W]


def scholar_forward(
    x_bow, bert_emb, noise, params, misc,
    *, eta_bn_prop=1.0, var_scale=1.0, bn_eps=1e-3
):
    B, V = x_bow.shape
    T = noise.shape[1]

    kernel = functools.partial(
        scholar_fwd_kernel,
        eta_bn_prop=float(eta_bn_prop),
        var_scale=float(var_scale),
        bn_eps=float(bn_eps),
    )

    inputs = (
        x_bow,
        bert_emb.astype(jnp.bfloat16),   # bf16 at the MXU input; f32 accumulate
        noise,
        params["w_adapt_t"],             # bf16, pre-transposed
        params["w_emb_bow_t"], params["w_emb_bert_t"],
        params["w_mean_t"], params["w_logvar_t"],
        params["w_beta_t"],
        misc,
    )

    vmem_spec = pl.BlockSpec(memory_space=pltpu.MemorySpace.VMEM)

    theta, x_recon, stats = pl.pallas_call(
        kernel,
        out_shape=(
            jax.ShapeDtypeStruct((B, T), jnp.float32),   # theta
            jax.ShapeDtypeStruct((B, V), jnp.float32),   # X_recon
            jax.ShapeDtypeStruct((1, 128), jnp.float32), # [mean NL, mean KLD, 0...]
        ),
        in_specs=[vmem_spec] * len(inputs),
        out_specs=(vmem_spec, vmem_spec, vmem_spec),
    )(*inputs)

    # do_average=True path of _loss: means already computed in-kernel
    nl = stats[0, 0]
    kld = stats[0, 1]
    loss = nl + kld
    y_recon = None  # n_labels == 0
    return theta, x_recon, y_recon, (loss, nl, kld, jnp.asarray(0.0))


# ---------------------------------------------------------------------------
if __name__ == "__main__":
    # B=256: amortizes per-call/DMA overhead and fills the MXU M dimension
    # (perf-review item for v6e/v7x) while staying tiny VMEM-wise (<2 MiB).
    B = 256        # batch
    V = 128        # vocab_size
    E = 64         # embedding_dim
    T = 16         # n_topics
    BERT = 1024    # adapt_bert input dim (fixed in the module)

    root = jax.random.PRNGKey(0)
    k_param, k_bow, k_bert, k_noise = jax.random.split(root, 4)

    params = make_params(k_param, V, E, T, BERT)

    alpha = np.ones((1, T), dtype=np.float64)
    prior_mean, prior_logvar = make_prior(alpha, T)
    misc = pack_misc_slab(params, prior_mean, prior_logvar)

    # synthetic inputs: X_bow = word counts, bert_embeddings_ = dense features
    x_bow = jnp.floor(jax.random.uniform(k_bow, (B, V), jnp.float32) * 5.0)
    bert_emb = jax.random.normal(k_bert, (B, BERT), jnp.float32)
    noise = jax.random.normal(k_noise, (B, T), jnp.float32)  # reparam eps

    theta, x_recon, y_recon, (loss, nl, kld, zero) = scholar_forward(
        x_bow, bert_emb, noise, params, misc,
        eta_bn_prop=1.0, var_scale=1.0,
    )
    jax.block_until_ready((theta, x_recon, loss, nl, kld))

    # basic sanity: rows of theta and X_recon are probability distributions
    assert theta.shape == (B, T) and x_recon.shape == (B, V)
    assert np.allclose(np.asarray(jnp.sum(theta, axis=1)), 1.0, atol=5e-3)
    assert np.allclose(np.asarray(jnp.sum(x_recon, axis=1)), 1.0, atol=5e-3)
    assert np.isfinite(float(loss)) and np.isfinite(float(nl)) and np.isfinite(float(kld))

    print("KERNEL_OK")
</pallas_src>

<mosaic_0001>
module attributes {stable_mosaic.version = 11 : i64} {
  func.func @scholar_fwd_kernel(%arg0: memref<256x128xf32, #tpu.memory_space<vmem>>, %arg1: memref<256x1024xbf16, #tpu.memory_space<vmem>>, %arg2: memref<256x16xf32, #tpu.memory_space<vmem>>, %arg3: memref<1024x128xbf16, #tpu.memory_space<vmem>>, %arg4: memref<128x64xf32, #tpu.memory_space<vmem>>, %arg5: memref<128x64xf32, #tpu.memory_space<vmem>>, %arg6: memref<64x16xf32, #tpu.memory_space<vmem>>, %arg7: memref<64x16xf32, #tpu.memory_space<vmem>>, %arg8: memref<16x128xf32, #tpu.memory_space<vmem>>, %arg9: memref<8x128xf32, #tpu.memory_space<vmem>>, %arg10: memref<256x16xf32, #tpu.memory_space<vmem>>, %arg11: memref<256x128xf32, #tpu.memory_space<vmem>>, %arg12: memref<1x128xf32, #tpu.memory_space<vmem>>) attributes {dimension_semantics = [], scalar_prefetch = 0 : i64, scratch_operands = 0 : i64, tpu.core_type = #tpu.core_type<tc>} {
    %c0 = arith.constant 0 : index
    %c0_0 = arith.constant 0 : index
    %0 = vector.load %arg0[%c0, %c0_0] : memref<256x128xf32, #tpu.memory_space<vmem>>, vector<256x128xf32>
    %c0_1 = arith.constant 0 : index
    %c0_2 = arith.constant 0 : index
    %1 = vector.load %arg9[%c0_1, %c0_2] : memref<8x128xf32, #tpu.memory_space<vmem>>, vector<8x128xf32>
    %2 = vector.extract_strided_slice %1 {offsets = [0, 0], sizes = [1, 128], strides = [1, 1]} : vector<8x128xf32> to vector<1x128xf32>
    %3 = vector.extract_strided_slice %1 {offsets = [1, 0], sizes = [1, 128], strides = [1, 1]} : vector<8x128xf32> to vector<1x128xf32>
    %4 = vector.extract_strided_slice %1 {offsets = [2, 0], sizes = [1, 16], strides = [1, 1]} : vector<8x128xf32> to vector<1x16xf32>
    %5 = vector.extract_strided_slice %1 {offsets = [3, 0], sizes = [1, 16], strides = [1, 1]} : vector<8x128xf32> to vector<1x16xf32>
    %6 = vector.extract_strided_slice %1 {offsets = [4, 0], sizes = [1, 16], strides = [1, 1]} : vector<8x128xf32> to vector<1x16xf32>
    %7 = vector.extract_strided_slice %1 {offsets = [5, 0], sizes = [1, 16], strides = [1, 1]} : vector<8x128xf32> to vector<1x16xf32>
    %8 = vector.extract_strided_slice %1 {offsets = [6, 0], sizes = [1, 16], strides = [1, 1]} : vector<8x128xf32> to vector<1x16xf32>
    %c0_3 = arith.constant 0 : index
    %c0_4 = arith.constant 0 : index
    %9 = vector.load %arg1[%c0_3, %c0_4] : memref<256x1024xbf16, #tpu.memory_space<vmem>>, vector<256x1024xbf16>
    %c0_5 = arith.constant 0 : index
    %c0_6 = arith.constant 0 : index
    %10 = vector.load %arg3[%c0_5, %c0_6] : memref<1024x128xbf16, #tpu.memory_space<vmem>>, vector<1024x128xbf16>
    %cst = arith.constant dense<0.000000e+00> : vector<256x128xf32>
    %11 = tpu.matmul %9, %10, %cst {dimension_numbers = #tpu.dot_dimension_numbers<[1], [0], [0], [1], [0, 0, 1, 1], [], []>} : vector<256x1024xbf16>, vector<1024x128xbf16>, vector<256x128xf32> -> vector<256x128xf32>
    %12 = vector.broadcast %2 : vector<1x128xf32> to vector<256x128xf32>
    %13 = arith.addf %11, %12 : vector<256x128xf32>
    %c0_7 = arith.constant 0 : index
    %c0_8 = arith.constant 0 : index
    %14 = vector.load %arg4[%c0_7, %c0_8] : memref<128x64xf32, #tpu.memory_space<vmem>>, vector<128x64xf32>
    %cst_9 = arith.constant dense<0.000000e+00> : vector<256x64xf32>
    %15 = tpu.matmul %0, %14, %cst_9 {dimension_numbers = #tpu.dot_dimension_numbers<[1], [0], [0], [1], [0, 0, 1, 1], [], []>} : vector<256x128xf32>, vector<128x64xf32>, vector<256x64xf32> -> vector<256x64xf32>
    %c0_10 = arith.constant 0 : index
    %c0_11 = arith.constant 0 : index
    %16 = vector.load %arg5[%c0_10, %c0_11] : memref<128x64xf32, #tpu.memory_space<vmem>>, vector<128x64xf32>
    %cst_12 = arith.constant dense<0.000000e+00> : vector<256x64xf32>
    %17 = tpu.matmul %13, %16, %cst_12 {dimension_numbers = #tpu.dot_dimension_numbers<[1], [0], [0], [1], [0, 0, 1, 1], [], []>} : vector<256x128xf32>, vector<128x64xf32>, vector<256x64xf32> -> vector<256x64xf32>
    %18 = arith.addf %15, %17 : vector<256x64xf32>
    %cst_13 = arith.constant 0.000000e+00 : f32
    %19 = vector.broadcast %cst_13 : f32 to vector<256x64xf32>
    %20 = arith.maximumf %18, %19 : vector<256x64xf32>
    %21 = math.absf %18 : vector<256x64xf32>
    %cst_14 = arith.constant 0.000000e+00 : f32
    %22 = vector.broadcast %cst_14 : f32 to vector<256x64xf32>
    %23 = arith.subf %22, %21 : vector<256x64xf32>
    %24 = math.exp %23 : vector<256x64xf32>
    %cst_15 = arith.constant 1.000000e+00 : f32
    %25 = vector.broadcast %cst_15 : f32 to vector<256x64xf32>
    %26 = arith.addf %25, %24 : vector<256x64xf32>
    %27 = math.log %26 : vector<256x64xf32>
    %28 = arith.addf %20, %27 : vector<256x64xf32>
    %c0_16 = arith.constant 0 : index
    %c0_17 = arith.constant 0 : index
    %29 = vector.load %arg6[%c0_16, %c0_17] : memref<64x16xf32, #tpu.memory_space<vmem>>, vector<64x16xf32>
    %cst_18 = arith.constant dense<0.000000e+00> : vector<256x16xf32>
    %30 = tpu.matmul %28, %29, %cst_18 {dimension_numbers = #tpu.dot_dimension_numbers<[1], [0], [0], [1], [0, 0, 1, 1], [], []>} : vector<256x64xf32>, vector<64x16xf32>, vector<256x16xf32> -> vector<256x16xf32>
    %31 = vector.broadcast %4 : vector<1x16xf32> to vector<256x16xf32>
    %32 = arith.addf %30, %31 : vector<256x16xf32>
    %c0_19 = arith.constant 0 : index
    %c0_20 = arith.constant 0 : index
    %33 = vector.load %arg7[%c0_19, %c0_20] : memref<64x16xf32, #tpu.memory_space<vmem>>, vector<64x16xf32>
    %cst_21 = arith.constant dense<0.000000e+00> : vector<256x16xf32>
    %34 = tpu.matmul %28, %33, %cst_21 {dimension_numbers = #tpu.dot_dimension_numbers<[1], [0], [0], [1], [0, 0, 1, 1], [], []>} : vector<256x64xf32>, vector<64x16xf32>, vector<256x16xf32> -> vector<256x16xf32>
    %35 = vector.broadcast %5 : vector<1x16xf32> to vector<256x16xf32>
    %36 = arith.addf %34, %35 : vector<256x16xf32>
    %cst_22 = arith.constant dense<0.000000e+00> : vector<16xf32>
    %37 = vector.multi_reduction <add>, %32, %cst_22 [0] : vector<256x16xf32> to vector<16xf32>
    %38 = vector.shape_cast %37 : vector<16xf32> to vector<1x16xf32>
    %cst_23 = arith.constant 2.560000e+02 : f32
    %39 = vector.broadcast %cst_23 : f32 to vector<1x16xf32>
    %40 = arith.divf %38, %39 : vector<1x16xf32>
    %41 = vector.broadcast %40 : vector<1x16xf32> to vector<256x16xf32>
    %42 = arith.subf %32, %41 : vector<256x16xf32>
    %43 = arith.mulf %42, %42 : vector<256x16xf32>
    %cst_24 = arith.constant dense<0.000000e+00> : vector<16xf32>
    %44 = vector.multi_reduction <add>, %43, %cst_24 [0] : vector<256x16xf32> to vector<16xf32>
    %45 = vector.shape_cast %44 : vector<16xf32> to vector<1x16xf32>
    %cst_25 = arith.constant 2.560000e+02 : f32
    %46 = vector.broadcast %cst_25 : f32 to vector<1x16xf32>
    %47 = arith.divf %45, %46 : vector<1x16xf32>
    %cst_26 = arith.constant 1.000000e-03 : f32
    %48 = vector.broadcast %cst_26 : f32 to vector<1x16xf32>
    %49 = arith.addf %47, %48 : vector<1x16xf32>
    %50 = math.rsqrt %49 : vector<1x16xf32>
    %51 = vector.broadcast %50 : vector<1x16xf32> to vector<256x16xf32>
    %52 = arith.mulf %42, %51 : vector<256x16xf32>
    %cst_27 = arith.constant dense<0.000000e+00> : vector<16xf32>
    %53 = vector.multi_reduction <add>, %36, %cst_27 [0] : vector<256x16xf32> to vector<16xf32>
    %54 = vector.shape_cast %53 : vector<16xf32> to vector<1x16xf32>
    %cst_28 = arith.constant 2.560000e+02 : f32
    %55 = vector.broadcast %cst_28 : f32 to vector<1x16xf32>
    %56 = arith.divf %54, %55 : vector<1x16xf32>
    %57 = vector.broadcast %56 : vector<1x16xf32> to vector<256x16xf32>
    %58 = arith.subf %36, %57 : vector<256x16xf32>
    %59 = arith.mulf %58, %58 : vector<256x16xf32>
    %cst_29 = arith.constant dense<0.000000e+00> : vector<16xf32>
    %60 = vector.multi_reduction <add>, %59, %cst_29 [0] : vector<256x16xf32> to vector<16xf32>
    %61 = vector.shape_cast %60 : vector<16xf32> to vector<1x16xf32>
    %cst_30 = arith.constant 2.560000e+02 : f32
    %62 = vector.broadcast %cst_30 : f32 to vector<1x16xf32>
    %63 = arith.divf %61, %62 : vector<1x16xf32>
    %cst_31 = arith.constant 1.000000e-03 : f32
    %64 = vector.broadcast %cst_31 : f32 to vector<1x16xf32>
    %65 = arith.addf %63, %64 : vector<1x16xf32>
    %66 = math.rsqrt %65 : vector<1x16xf32>
    %67 = vector.broadcast %66 : vector<1x16xf32> to vector<256x16xf32>
    %68 = arith.mulf %58, %67 : vector<256x16xf32>
    %cst_32 = arith.constant 5.000000e-01 : f32
    %69 = vector.broadcast %cst_32 : f32 to vector<256x16xf32>
    %70 = arith.mulf %69, %68 : vector<256x16xf32>
    %71 = math.exp %70 : vector<256x16xf32>
    %72 = arith.mulf %71, %71 : vector<256x16xf32>
    %c0_33 = arith.constant 0 : index
    %c0_34 = arith.constant 0 : index
    %73 = vector.load %arg2[%c0_33, %c0_34] : memref<256x16xf32, #tpu.memory_space<vmem>>, vector<256x16xf32>
    %74 = arith.mulf %71, %73 : vector<256x16xf32>
    %cst_35 = arith.constant 1.000000e+00 : f32
    %75 = vector.broadcast %cst_35 : f32 to vector<256x16xf32>
    %76 = arith.mulf %74, %75 : vector<256x16xf32>
    %77 = arith.addf %52, %76 : vector<256x16xf32>
    %cst_36 = arith.constant dense<0xFF800000> : vector<256xf32>
    %78 = vector.multi_reduction <maximumf>, %77, %cst_36 [1] : vector<256x16xf32> to vector<256xf32>
    %79 = vector.shape_cast %78 : vector<256xf32> to vector<256x1xf32>
    %80 = vector.broadcast %79 : vector<256x1xf32> to vector<256x16xf32>
    %81 = arith.subf %77, %80 : vector<256x16xf32>
    %82 = math.exp %81 : vector<256x16xf32>
    %cst_37 = arith.constant dense<0.000000e+00> : vector<256xf32>
    %83 = vector.multi_reduction <add>, %82, %cst_37 [1] : vector<256x16xf32> to vector<256xf32>
    %84 = vector.shape_cast %83 : vector<256xf32> to vector<256x1xf32>
    %85 = tpu.reciprocal %84 {approx = true} : vector<256x1xf32> -> vector<256x1xf32>
    %86 = vector.broadcast %85 : vector<256x1xf32> to vector<256x16xf32>
    %87 = arith.mulf %82, %86 : vector<256x16xf32>
    %c0_38 = arith.constant 0 : index
    %c0_39 = arith.constant 0 : index
    %88 = vector.load %arg10[%c0_38, %c0_39] : memref<256x16xf32, #tpu.memory_space<vmem>>, vector<256x16xf32>
    tpu.vector_store %arg10[%c0_38, %c0_39], %87 {strides = array<i32>} : memref<256x16xf32, #tpu.memory_space<vmem>>, vector<256x16xf32>,
    %c0_40 = arith.constant 0 : index
    %c0_41 = arith.constant 0 : index
    %89 = vector.load %arg8[%c0_40, %c0_41] : memref<16x128xf32, #tpu.memory_space<vmem>>, vector<16x128xf32>
    %cst_42 = arith.constant dense<0.000000e+00> : vector<256x128xf32>
    %90 = tpu.matmul %87, %89, %cst_42 {dimension_numbers = #tpu.dot_dimension_numbers<[1], [0], [0], [1], [0, 0, 1, 1], [], []>} : vector<256x16xf32>, vector<16x128xf32>, vector<256x128xf32> -> vector<256x128xf32>
    %91 = vector.broadcast %3 : vector<1x128xf32> to vector<256x128xf32>
    %92 = arith.addf %90, %91 : vector<256x128xf32>
    %cst_43 = arith.constant dense<0.000000e+00> : vector<128xf32>
    %93 = vector.multi_reduction <add>, %92, %cst_43 [0] : vector<256x128xf32> to vector<128xf32>
    %94 = vector.shape_cast %93 : vector<128xf32> to vector<1x128xf32>
    %cst_44 = arith.constant 2.560000e+02 : f32
    %95 = vector.broadcast %cst_44 : f32 to vector<1x128xf32>
    %96 = arith.divf %94, %95 : vector<1x128xf32>
    %97 = vector.broadcast %96 : vector<1x128xf32> to vector<256x128xf32>
    %98 = arith.subf %92, %97 : vector<256x128xf32>
    %99 = arith.mulf %98, %98 : vector<256x128xf32>
    %cst_45 = arith.constant dense<0.000000e+00> : vector<128xf32>
    %100 = vector.multi_reduction <add>, %99, %cst_45 [0] : vector<256x128xf32> to vector<128xf32>
    %101 = vector.shape_cast %100 : vector<128xf32> to vector<1x128xf32>
    %cst_46 = arith.constant 2.560000e+02 : f32
    %102 = vector.broadcast %cst_46 : f32 to vector<1x128xf32>
    %103 = arith.divf %101, %102 : vector<1x128xf32>
    %cst_47 = arith.constant 1.000000e-03 : f32
    %104 = vector.broadcast %cst_47 : f32 to vector<1x128xf32>
    %105 = arith.addf %103, %104 : vector<1x128xf32>
    %106 = math.rsqrt %105 : vector<1x128xf32>
    %107 = vector.broadcast %106 : vector<1x128xf32> to vector<256x128xf32>
    %108 = arith.mulf %98, %107 : vector<256x128xf32>
    %cst_48 = arith.constant dense<0xFF800000> : vector<256xf32>
    %109 = vector.multi_reduction <maximumf>, %108, %cst_48 [1] : vector<256x128xf32> to vector<256xf32>
    %110 = vector.shape_cast %109 : vector<256xf32> to vector<256x1xf32>
    %111 = vector.broadcast %110 : vector<256x1xf32> to vector<256x128xf32>
    %112 = arith.subf %108, %111 : vector<256x128xf32>
    %113 = math.exp %112 : vector<256x128xf32>
    %cst_49 = arith.constant dense<0.000000e+00> : vector<256xf32>
    %114 = vector.multi_reduction <add>, %113, %cst_49 [1] : vector<256x128xf32> to vector<256xf32>
    %115 = vector.shape_cast %114 : vector<256xf32> to vector<256x1xf32>
    %116 = tpu.reciprocal %115 {approx = true} : vector<256x1xf32> -> vector<256x1xf32>
    %117 = vector.broadcast %116 : vector<256x1xf32> to vector<256x128xf32>
    %118 = arith.mulf %113, %117 : vector<256x128xf32>
    %119 = vector.broadcast %110 : vector<256x1xf32> to vector<256x128xf32>
    %120 = arith.subf %108, %119 : vector<256x128xf32>
    %121 = math.log %115 : vector<256x1xf32>
    %122 = vector.broadcast %121 : vector<256x1xf32> to vector<256x128xf32>
    %123 = arith.subf %120, %122 : vector<256x128xf32>
    %c0_50 = arith.constant 0 : index
    %c0_51 = arith.constant 0 : index
    %124 = vector.load %arg11[%c0_50, %c0_51] : memref<256x128xf32, #tpu.memory_space<vmem>>, vector<256x128xf32>
    tpu.vector_store %arg11[%c0_50, %c0_51], %118 {strides = array<i32>} : memref<256x128xf32, #tpu.memory_space<vmem>>, vector<256x128xf32>,
    %125 = arith.mulf %0, %123 : vector<256x128xf32>
    %cst_52 = arith.constant dense<0.000000e+00> : vector<256xf32>
    %126 = vector.multi_reduction <add>, %125, %cst_52 [1] : vector<256x128xf32> to vector<256xf32>
    %127 = vector.shape_cast %126 : vector<256xf32> to vector<256x1xf32>
    %cst_53 = arith.constant 0.000000e+00 : f32
    %128 = vector.broadcast %cst_53 : f32 to vector<256x1xf32>
    %129 = arith.subf %128, %127 : vector<256x1xf32>
    %cst_54 = arith.constant dense<0.000000e+00> : vector<1xf32>
    %130 = vector.multi_reduction <add>, %129, %cst_54 [0] : vector<256x1xf32> to vector<1xf32>
    %131 = vector.shape_cast %130 : vector<1xf32> to vector<1x1xf32>
    %cst_55 = arith.constant 3.906250e-03 : f32
    %132 = vector.broadcast %cst_55 : f32 to vector<1x1xf32>
    %133 = arith.mulf %131, %132 : vector<1x1xf32>
    %134 = vector.broadcast %6 : vector<1x16xf32> to vector<256x16xf32>
    %135 = arith.subf %52, %134 : vector<256x16xf32>
    %136 = vector.broadcast %8 : vector<1x16xf32> to vector<256x16xf32>
    %137 = arith.mulf %72, %136 : vector<256x16xf32>
    %138 = arith.mulf %135, %135 : vector<256x16xf32>
    %139 = vector.broadcast %8 : vector<1x16xf32> to vector<256x16xf32>
    %140 = arith.mulf %138, %139 : vector<256x16xf32>
    %141 = arith.addf %137, %140 : vector<256x16xf32>
    %142 = vector.broadcast %7 : vector<1x16xf32> to vector<256x16xf32>
    %143 = arith.subf %142, %68 : vector<256x16xf32>
    %144 = arith.addf %141, %143 : vector<256x16xf32>
    %cst_56 = arith.constant dense<0.000000e+00> : vector<256xf32>
    %145 = vector.multi_reduction <add>, %144, %cst_56 [1] : vector<256x16xf32> to vector<256xf32>
    %146 = vector.shape_cast %145 : vector<256xf32> to vector<256x1xf32>
    %cst_57 = arith.constant dense<0.000000e+00> : vector<1xf32>
    %147 = vector.multi_reduction <add>, %146, %cst_57 [0] : vector<256x1xf32> to vector<1xf32>
    %148 = vector.shape_cast %147 : vector<1xf32> to vector<1x1xf32>
    %cst_58 = arith.constant 3.906250e-03 : f32
    %149 = vector.broadcast %cst_58 : f32 to vector<1x1xf32>
    %150 = arith.mulf %148, %149 : vector<1x1xf32>
    %cst_59 = arith.constant 1.600000e+01 : f32
    %151 = vector.broadcast %cst_59 : f32 to vector<1x1xf32>
    %152 = arith.subf %150, %151 : vector<1x1xf32>
    %cst_60 = arith.constant 5.000000e-01 : f32
    %153 = vector.broadcast %cst_60 : f32 to vector<1x1xf32>
    %154 = arith.mulf %153, %152 : vector<1x1xf32>
    %155 = tpu.iota {dimensions = array<i32: 1>} : vector<1x128xi32>
    %c0_i32 = arith.constant 0 : i32
    %156 = vector.broadcast %c0_i32 : i32 to vector<1x128xi32>
    %157 = arith.cmpi eq, %155, %156 : vector<1x128xi32>
    %cst_61 = arith.constant 0.000000e+00 : f32
    %158 = vector.shape_cast %133 : vector<1x1xf32> to vector<1x1xf32>
    %159 = vector.broadcast %158 : vector<1x1xf32> to vector<1x128xf32>
    %160 = vector.broadcast %cst_61 : f32 to vector<1x128xf32>
    %161 = arith.select %157, %159, %160 : vector<1x128xi1>, vector<1x128xf32>
    %c1_i32 = arith.constant 1 : i32
    %162 = vector.broadcast %c1_i32 : i32 to vector<1x128xi32>
    %163 = arith.cmpi eq, %155, %162 : vector<1x128xi32>
    %cst_62 = arith.constant 0.000000e+00 : f32
    %164 = vector.shape_cast %154 : vector<1x1xf32> to vector<1x1xf32>
    %165 = vector.broadcast %164 : vector<1x1xf32> to vector<1x128xf32>
    %166 = vector.broadcast %cst_62 : f32 to vector<1x128xf32>
    %167 = arith.select %163, %165, %166 : vector<1x128xi1>, vector<1x128xf32>
    %168 = arith.addf %161, %167 : vector<1x128xf32>
    %c0_63 = arith.constant 0 : index
    %c0_64 = arith.constant 0 : index
    %169 = vector.load %arg12[%c0_63, %c0_64] : memref<1x128xf32, #tpu.memory_space<vmem>>, vector<1x128xf32>
    tpu.vector_store %arg12[%c0_63, %c0_64], %168 {strides = array<i32>} : memref<1x128xf32, #tpu.memory_space<vmem>>, vector<1x128xf32>,
    return
  }
}

</mosaic_0001>

<llo_original>
// kernel: tpu_custom_call.1
$region0: #{tpu_custom_call.1}
  #allocation0 [shape = 'u32[]', space=smem, size = 0x4, offset = 0x4, fixed_abs, tag = 'smem constant byte address 0x4 - core index']
  #allocation1 [shape = 'u32[144,128]{1,0:T(1,128)}', space=vmem, size = 0x12000, scoped, tag = 'internal scratch']
  %s0 = inlined_call_operand.vmem [shape: f32[256,128], index: 0, kind: input, shape index: {}]
  %s1 = inlined_call_operand.hbm [shape: bf16[256,1024], index: 1, kind: input, shape index: {}]
  %s2 = inlined_call_operand.vmem [shape: f32[256,16], index: 2, kind: input, shape index: {}]
  %s3 = inlined_call_operand.vmem [shape: bf16[1024,128], index: 3, kind: input, shape index: {}]
  %s4 = inlined_call_operand.vmem [shape: f32[128,64], index: 4, kind: input, shape index: {}]
  %s5 = inlined_call_operand.vmem [shape: f32[128,64], index: 5, kind: input, shape index: {}]
  %s6 = inlined_call_operand.vmem [shape: f32[64,16], index: 6, kind: input, shape index: {}]
  %s7 = inlined_call_operand.vmem [shape: f32[64,16], index: 7, kind: input, shape index: {}]
  %s8 = inlined_call_operand.vmem [shape: f32[16,128], index: 8, kind: input, shape index: {}]
  %s9 = inlined_call_operand.vmem [shape: f32[8,128], index: 9, kind: input, shape index: {}]
  %s10 = inlined_call_operand.vmem [shape: f32[256,16], index: 10, kind: output, shape index: {0}]
  %s11 = inlined_call_operand.hbm [shape: f32[256,128], index: 11, kind: output, shape index: {1}]
  %s12 = inlined_call_operand.hbm [shape: f32[1,128], index: 12, kind: output, shape index: {2}]
  %13 = xla_tuple %s10, %s11, %s12
  %s14 = sld [smem:[#allocation0]]
  $region70: #{tpu_custom_call.1} parent=0
    _
  %s16 = ssub.s32 1, %s14
  %s17 = scalar_select 0, %s16, %s14
  $region1: #{tpu_custom_call.1} parent=0
    #allocation2 [shape = 'u8[524288]{0}', space=vmem, size = 0x80000, scoped, tag = 'input window, operand 1, single buffered']
    #allocation3 [shape = 's32[1]{0}', space=sflag, size = 0x4, scoped, tag = 'scoped memory for tpu_custom_call.1']
    #allocation4 [shape = 's32[1]{0}', space=sflag, size = 0x4, scoped, tag = 'scoped memory for tpu_custom_call.1']
    #allocation5 [shape = 'u8[131072]{0}', space=vmem, size = 0x20000, scoped, tag = 'output window, operand 1, single buffered']
    #allocation6 [shape = 'u8[512]{0}', space=vmem, size = 0x400, scoped, tag = 'output window, operand 2, single buffered']
    #allocation7 [shape = 's32[1]{0}', space=sflag, size = 0x4, scoped, tag = 'scoped memory for tpu_custom_call.1']
    %18 = vsyncpa [#allocation3], 0
    %19 = vsyncpa [#allocation4], 0
    %20 = vsyncpa [#allocation7], 0
    // Predicated region
    $region2: #{tpu_custom_call.1} parent=1 // pred_check
      _
    $region3: #{tpu_custom_call.1} parent=1 // pred_check_branch
      %22 = sbr.rel (0) target = $region5
    $region4: #{tpu_custom_call.1} parent=1 // pred_region
      _
    $region5: #{tpu_custom_call.1} parent=1 // pred_fallthru
      _
    // Predicated region
    $region6: #{tpu_custom_call.1} parent=1 // pred_check
      _
    $region7: #{tpu_custom_call.1} parent=1 // pred_check_branch
      %24 = sbr.rel (0) target = $region9
    $region8: #{tpu_custom_call.1} parent=1 // pred_region
      %s26 = ssub.s32 16384, 16384
      %27 = vsyncadd [#allocation3], %s26
      %s28 = sshll.u32 [#allocation2], 4
      %s29 = int_to_ptr.vmem [resolvable:$true] %s28
      %34 = dma.hbm_to_vmem [thread:$0]  %s1, 16384, %s29, [#allocation3], 512, 512, 32
    $region9: #{tpu_custom_call.1} parent=1 // pred_fallthru
      _
    // Predicated region
    $region10: #{tpu_custom_call.1} parent=1 // pred_check
      _
    $region11: #{tpu_custom_call.1} parent=1 // pred_check_branch
      %36 = sbr.rel (0) target = $region13
    $region12: #{tpu_custom_call.1} parent=1 // pred_region
      _
    $region13: #{tpu_custom_call.1} parent=1 // pred_fallthru
      _
    // Predicated region
    $region14: #{tpu_custom_call.1} parent=1 // pred_check
      _
    $region15: #{tpu_custom_call.1} parent=1 // pred_check_branch
      %38 = sbr.rel (0) target = $region17
    $region16: #{tpu_custom_call.1} parent=1 // pred_region
      _
    $region17: #{tpu_custom_call.1} parent=1 // pred_fallthru
      _
    // Predicated region
    $region18: #{tpu_custom_call.1} parent=1 // pred_check
      _
    $region19: #{tpu_custom_call.1} parent=1 // pred_check_branch
      %40 = sbr.rel (0) target = $region21
    $region20: #{tpu_custom_call.1} parent=1 // pred_region
      _
    $region21: #{tpu_custom_call.1} parent=1 // pred_fallthru
      _
    // Predicated region
    $region22: #{tpu_custom_call.1} parent=1 // pred_check
      _
    $region23: #{tpu_custom_call.1} parent=1 // pred_check_branch
      %42 = sbr.rel (0) target = $region25
    $region24: #{tpu_custom_call.1} parent=1 // pred_region
      _
    $region25: #{tpu_custom_call.1} parent=1 // pred_fallthru
      _
    // Predicated region
    $region26: #{tpu_custom_call.1} parent=1 // pred_check
      _
    $region27: #{tpu_custom_call.1} parent=1 // pred_check_branch
      %44 = sbr.rel (0) target = $region29
    $region28: #{tpu_custom_call.1} parent=1 // pred_region
      _
    $region29: #{tpu_custom_call.1} parent=1 // pred_fallthru
      _
    // Predicated region
    $region30: #{tpu_custom_call.1} parent=1 // pred_check
      _
    $region31: #{tpu_custom_call.1} parent=1 // pred_check_branch
      %46 = sbr.rel (0) target = $region33
    $region32: #{tpu_custom_call.1} parent=1 // pred_region
      _
    $region33: #{tpu_custom_call.1} parent=1 // pred_fallthru
      _
    // Predicated region
    $region34: #{tpu_custom_call.1} parent=1 // pred_check
      _
    $region35: #{tpu_custom_call.1} parent=1 // pred_check_branch
      %48 = sbr.rel (0) target = $region37
    $region36: #{tpu_custom_call.1} parent=1 // pred_region
      _
    $region37: #{tpu_custom_call.1} parent=1 // pred_fallthru
      _
    // Predicated region
    $region38: #{tpu_custom_call.1} parent=1 // pred_check
      _
    $region39: #{tpu_custom_call.1} parent=1 // pred_check_branch
      %50 = sbr.rel (0) target = $region41
    $region40: #{tpu_custom_call.1} parent=1 // pred_region
      _
    $region41: #{tpu_custom_call.1} parent=1 // pred_fallthru
      _
    // Predicated region
    $region42: #{tpu_custom_call.1} parent=1 // pred_check
      _
    $region43: #{tpu_custom_call.1} parent=1 // pred_check_branch
      %52 = sbr.rel (0) target = $region45
    $region44: #{tpu_custom_call.1} parent=1 // pred_region
      %53 = dma.done [#allocation3], 16384
    $region45: #{tpu_custom_call.1} parent=1 // pred_fallthru
      _
    %v55 = vld [vmem:[%s0] sm:$0xff]
    %v56 = vld [vmem:[%s0 + $0x8] sm:$0xff]
    %v57 = vld [vmem:[%s0 + $0x10] sm:$0xff]
    %v58 = vld [vmem:[%s0 + $0x18] sm:$0xff]
    %v59 = vld [vmem:[%s0 + $0x20] sm:$0xff]
    %v60 = vld [vmem:[%s0 + $0x28] sm:$0xff]
    %v61 = vld [vmem:[%s0 + $0x30] sm:$0xff]
    %v62 = vld [vmem:[%s0 + $0x38] sm:$0xff]
    %v63 = vld [vmem:[%s0 + $0x40] sm:$0xff]
    %v64 = vld [vmem:[%s0 + $0x48] sm:$0xff]
    %v65 = vld [vmem:[%s0 + $0x50] sm:$0xff]
    %v66 = vld [vmem:[%s0 + $0x58] sm:$0xff]
    %v67 = vld [vmem:[%s0 + $0x60] sm:$0xff]
    %v68 = vld [vmem:[%s0 + $0x68] sm:$0xff]
    %v69 = vld [vmem:[%s0 + $0x70] sm:$0xff]
    %v70 = vld [vmem:[%s0 + $0x78] sm:$0xff]
    %v71 = vld [vmem:[%s0 + $0x80] sm:$0xff]
    %v72 = vld [vmem:[%s0 + $0x88] sm:$0xff]
    %v73 = vld [vmem:[%s0 + $0x90] sm:$0xff]
    %v74 = vld [vmem:[%s0 + $0x98] sm:$0xff]
    %v75 = vld [vmem:[%s0 + $0xa0] sm:$0xff]
    %v76 = vld [vmem:[%s0 + $0xa8] sm:$0xff]
    %v77 = vld [vmem:[%s0 + $0xb0] sm:$0xff]
    %v78 = vld [vmem:[%s0 + $0xb8] sm:$0xff]
    %v79 = vld [vmem:[%s0 + $0xc0] sm:$0xff]
    %v80 = vld [vmem:[%s0 + $0xc8] sm:$0xff]
    %v81 = vld [vmem:[%s0 + $0xd0] sm:$0xff]
    %v82 = vld [vmem:[%s0 + $0xd8] sm:$0xff]
    %v83 = vld [vmem:[%s0 + $0xe0] sm:$0xff]
    %v84 = vld [vmem:[%s0 + $0xe8] sm:$0xff]
    %v85 = vld [vmem:[%s0 + $0xf0] sm:$0xff]
    %v86 = vld [vmem:[%s0 + $0xf8] sm:$0xff]
    %v87 = vld [vmem:[%s9] sm:$0xff]
    %v88 = vld [vmem:[#allocation2] sm:$0xff]
    %v89 = vld [vmem:[#allocation2 + $0x8] sm:$0xff]
    %v90 = vld [vmem:[#allocation2 + $0x10] sm:$0xff]
    %v91 = vld [vmem:[#allocation2 + $0x18] sm:$0xff]
    %v92 = vld [vmem:[#allocation2 + $0x20] sm:$0xff]
    %v93 = vld [vmem:[#allocation2 + $0x28] sm:$0xff]
    %v94 = vld [vmem:[#allocation2 + $0x30] sm:$0xff]
    %v95 = vld [vmem:[#allocation2 + $0x38] sm:$0xff]
    %v96 = vld [vmem:[#allocation2 + $0x40] sm:$0xff]
    %v97 = vld [vmem:[#allocation2 + $0x48] sm:$0xff]
    %v98 = vld [vmem:[#allocation2 + $0x50] sm:$0xff]
    %v99 = vld [vmem:[#allocation2 + $0x58] sm:$0xff]
    %v100 = vld [vmem:[#allocation2 + $0x60] sm:$0xff]
    %v101 = vld [vmem:[#allocation2 + $0x68] sm:$0xff]
    %v102 = vld [vmem:[#allocation2 + $0x70] sm:$0xff]
    %v103 = vld [vmem:[#allocation2 + $0x78] sm:$0xff]
    %v104 = vld [vmem:[#allocation2 + $0x80] sm:$0xff]
    %v105 = vld [vmem:[#allocation2 + $0x88] sm:$0xff]
    %v106 = vld [vmem:[#allocation2 + $0x90] sm:$0xff]
    %v107 = vld [vmem:[#allocation2 + $0x98] sm:$0xff]
    %v108 = vld [vmem:[#allocation2 + $0xa0] sm:$0xff]
    %v109 = vld [vmem:[#allocation2 + $0xa8] sm:$0xff]
    %v110 = vld [vmem:[#allocation2 + $0xb0] sm:$0xff]
    %v111 = vld [vmem:[#allocation2 + $0xb8] sm:$0xff]
    %v112 = vld [vmem:[#allocation2 + $0xc0] sm:$0xff]
    %v113 = vld [vmem:[#allocation2 + $0xc8] sm:$0xff]
    %v114 = vld [vmem:[#allocation2 + $0xd0] sm:$0xff]
    %v115 = vld [vmem:[#allocation2 + $0xd8] sm:$0xff]
    %v116 = vld [vmem:[#allocation2 + $0xe0] sm:$0xff]
    %v117 = vld [vmem:[#allocation2 + $0xe8] sm:$0xff]
    %v118 = vld [vmem:[#allocation2 + $0xf0] sm:$0xff]
    %v119 = vld [vmem:[#allocation2 + $0xf8] sm:$0xff]
    %v120 = vld [vmem:[#allocation2 + $0x100] sm:$0xff]
    %v121 = vld [vmem:[#allocation2 + $0x108] sm:$0xff]
    %v122 = vld [vmem:[#allocation2 + $0x110] sm:$0xff]
    %v123 = vld [vmem:[#allocation2 + $0x118] sm:$0xff]
    %v124 = vld [vmem:[#allocation2 + $0x120] sm:$0xff]
    %v125 = vld [vmem:[#allocation2 + $0x128] sm:$0xff]
    %v126 = vld [vmem:[#allocation2 + $0x130] sm:$0xff]
    %v127 = vld [vmem:[#allocation2 + $0x138] sm:$0xff]
    %v128 = vld [vmem:[#allocation2 + $0x140] sm:$0xff]
    %v129 = vld [vmem:[#allocation2 + $0x148] sm:$0xff]
    %v130 = vld [vmem:[#allocation2 + $0x150] sm:$0xff]
    %v131 = vld [vmem:[#allocation2 + $0x158] sm:$0xff]
    %v132 = vld [vmem:[#allocation2 + $0x160] sm:$0xff]
    %v133 = vld [vmem:[#allocation2 + $0x168] sm:$0xff]
    %v134 = vld [vmem:[#allocation2 + $0x170] sm:$0xff]
    %v135 = vld [vmem:[#allocation2 + $0x178] sm:$0xff]
    %v136 = vld [vmem:[#allocation2 + $0x180] sm:$0xff]
    %v137 = vld [vmem:[#allocation2 + $0x188] sm:$0xff]
    %v138 = vld [vmem:[#allocation2 + $0x190] sm:$0xff]
    %v139 = vld [vmem:[#allocation2 + $0x198] sm:$0xff]
    %v140 = vld [vmem:[#allocation2 + $0x1a0] sm:$0xff]
    %v141 = vld [vmem:[#allocation2 + $0x1a8] sm:$0xff]
    %v142 = vld [vmem:[#allocation2 + $0x1b0] sm:$0xff]
    %v143 = vld [vmem:[#allocation2 + $0x1b8] sm:$0xff]
    %v144 = vld [vmem:[#allocation2 + $0x1c0] sm:$0xff]
    %v145 = vld [vmem:[#allocation2 + $0x1c8] sm:$0xff]
    %v146 = vld [vmem:[#allocation2 + $0x1d0] sm:$0xff]
    %v147 = vld [vmem:[#allocation2 + $0x1d8] sm:$0xff]
    %v148 = vld [vmem:[#allocation2 + $0x1e0] sm:$0xff]
    %v149 = vld [vmem:[#allocation2 + $0x1e8] sm:$0xff]
    %v150 = vld [vmem:[#allocation2 + $0x1f0] sm:$0xff]
    %v151 = vld [vmem:[#allocation2 + $0x1f8] sm:$0xff]
    %v152 = vld [vmem:[#allocation2 + $0x200] sm:$0xff]
    %v153 = vld [vmem:[#allocation2 + $0x208] sm:$0xff]
    %v154 = vld [vmem:[#allocation2 + $0x210] sm:$0xff]
    %v155 = vld [vmem:[#allocation2 + $0x218] sm:$0xff]
    %v156 = vld [vmem:[#allocation2 + $0x220] sm:$0xff]
    %v157 = vld [vmem:[#allocation2 + $0x228] sm:$0xff]
    %v158 = vld [vmem:[#allocation2 + $0x230] sm:$0xff]
    %v159 = vld [vmem:[#allocation2 + $0x238] sm:$0xff]
    %v160 = vld [vmem:[#allocation2 + $0x240] sm:$0xff]
    %v161 = vld [vmem:[#allocation2 + $0x248] sm:$0xff]
    %v162 = vld [vmem:[#allocation2 + $0x250] sm:$0xff]
    %v163 = vld [vmem:[#allocation2 + $0x258] sm:$0xff]
    %v164 = vld [vmem:[#allocation2 + $0x260] sm:$0xff]
    %v165 = vld [vmem:[#allocation2 + $0x268] sm:$0xff]
    %v166 = vld [vmem:[#allocation2 + $0x270] sm:$0xff]
    %v167 = vld [vmem:[#allocation2 + $0x278] sm:$0xff]
    %v168 = vld [vmem:[#allocation2 + $0x280] sm:$0xff]
    %v169 = vld [vmem:[#allocation2 + $0x288] sm:$0xff]
    %v170 = vld [vmem:[#allocation2 + $0x290] sm:$0xff]
    %v171 = vld [vmem:[#allocation2 + $0x298] sm:$0xff]
    %v172 = vld [vmem:[#allocation2 + $0x2a0] sm:$0xff]
    %v173 = vld [vmem:[#allocation2 + $0x2a8] sm:$0xff]
    %v174 = vld [vmem:[#allocation2 + $0x2b0] sm:$0xff]
    %v175 = vld [vmem:[#allocation2 + $0x2b8] sm:$0xff]
    %v176 = vld [vmem:[#allocation2 + $0x2c0] sm:$0xff]
    %v177 = vld [vmem:[#allocation2 + $0x2c8] sm:$0xff]
    %v178 = vld [vmem:[#allocation2 + $0x2d0] sm:$0xff]
    %v179 = vld [vmem:[#allocation2 + $0x2d8] sm:$0xff]
    %v180 = vld [vmem:[#allocation2 + $0x2e0] sm:$0xff]
    %v181 = vld [vmem:[#allocation2 + $0x2e8] sm:$0xff]
    %v182 = vld [vmem:[#allocation2 + $0x2f0] sm:$0xff]
    %v183 = vld [vmem:[#allocation2 + $0x2f8] sm:$0xff]
    %v184 = vld [vmem:[#allocation2 + $0x300] sm:$0xff]
    %v185 = vld [vmem:[#allocation2 + $0x308] sm:$0xff]
    %v186 = vld [vmem:[#allocation2 + $0x310] sm:$0xff]
    %v187 = vld [vmem:[#allocation2 + $0x318] sm:$0xff]
    %v188 = vld [vmem:[#allocation2 + $0x320] sm:$0xff]
    %v189 = vld [vmem:[#allocation2 + $0x328] sm:$0xff]
    %v190 = vld [vmem:[#allocation2 + $0x330] sm:$0xff]
    %v191 = vld [vmem:[#allocation2 + $0x338] sm:$0xff]
    %v192 = vld [vmem:[#allocation2 + $0x340] sm:$0xff]
    %v193 = vld [vmem:[#allocation2 + $0x348] sm:$0xff]
    %v194 = vld [vmem:[#allocation2 + $0x350] sm:$0xff]
    %v195 = vld [vmem:[#allocation2 + $0x358] sm:$0xff]
    %v196 = vld [vmem:[#allocation2 + $0x360] sm:$0xff]
    %v197 = vld [vmem:[#allocation2 + $0x368] sm:$0xff]
    %v198 = vld [vmem:[#allocation2 + $0x370] sm:$0xff]
    %v199 = vld [vmem:[#allocation2 + $0x378] sm:$0xff]
    %v200 = vld [vmem:[#allocation2 + $0x380] sm:$0xff]
    %v201 = vld [vmem:[#allocation2 + $0x388] sm:$0xff]
    %v202 = vld [vmem:[#allocation2 + $0x390] sm:$0xff]
    %v203 = vld [vmem:[#allocation2 + $0x398] sm:$0xff]
    %v204 = vld [vmem:[#allocation2 + $0x3a0] sm:$0xff]
    %v205 = vld [vmem:[#allocation2 + $0x3a8] sm:$0xff]
    %v206 = vld [vmem:[#allocation2 + $0x3b0] sm:$0xff]
    %v207 = vld [vmem:[#allocation2 + $0x3b8] sm:$0xff]
    %v208 = vld [vmem:[#allocation2 + $0x3c0] sm:$0xff]
    %v209 = vld [vmem:[#allocation2 + $0x3c8] sm:$0xff]
    %v210 = vld [vmem:[#allocation2 + $0x3d0] sm:$0xff]
    %v211 = vld [vmem:[#allocation2 + $0x3d8] sm:$0xff]
    %v212 = vld [vmem:[#allocation2 + $0x3e0] sm:$0xff]
    %v213 = vld [vmem:[#allocation2 + $0x3e8] sm:$0xff]
    %v214 = vld [vmem:[#allocation2 + $0x3f0] sm:$0xff]
    %v215 = vld [vmem:[#allocation2 + $0x3f8] sm:$0xff]
    %v216 = vld [vmem:[%s3] sm:$0xf]
    %v217 = vld [vmem:[%s3 + $0x4] sm:$0xf]
    %v218 = vld [vmem:[%s3 + $0x8] sm:$0xf]
    %v219 = vld [vmem:[%s3 + $0xc] sm:$0xf]
    %v220 = vld [vmem:[%s3 + $0x10] sm:$0xf]
    %v221 = vld [vmem:[%s3 + $0x14] sm:$0xf]
    %v222 = vld [vmem:[%s3 + $0x18] sm:$0xf]
    %v223 = vld [vmem:[%s3 + $0x1c] sm:$0xf]
    %v224 = vld [vmem:[%s3 + $0x20] sm:$0xf]
    %v225 = vld [vmem:[%s3 + $0x24] sm:$0xf]
    %v226 = vld [vmem:[%s3 + $0x28] sm:$0xf]
    %v227 = vld [vmem:[%s3 + $0x2c] sm:$0xf]
    %v228 = vld [vmem:[%s3 + $0x30] sm:$0xf]
    %v229 = vld [vmem:[%s3 + $0x34] sm:$0xf]
    %v230 = vld [vmem:[%s3 + $0x38] sm:$0xf]
    %v231 = vld [vmem:[%s3 + $0x3c] sm:$0xf]
    %v232 = vld [vmem:[%s3 + $0x40] sm:$0xf]
    %v233 = vld [vmem:[%s3 + $0x44] sm:$0xf]
    %v234 = vld [vmem:[%s3 + $0x48] sm:$0xf]
    %v235 = vld [vmem:[%s3 + $0x4c] sm:$0xf]
    %v236 = vld [vmem:[%s3 + $0x50] sm:$0xf]
    %v237 = vld [vmem:[%s3 + $0x54] sm:$0xf]
    %v238 = vld [vmem:[%s3 + $0x58] sm:$0xf]
    %v239 = vld [vmem:[%s3 + $0x5c] sm:$0xf]
    %v240 = vld [vmem:[%s3 + $0x60] sm:$0xf]
    %v241 = vld [vmem:[%s3 + $0x64] sm:$0xf]
    %v242 = vld [vmem:[%s3 + $0x68] sm:$0xf]
    %v243 = vld [vmem:[%s3 + $0x6c] sm:$0xf]
    %v244 = vld [vmem:[%s3 + $0x70] sm:$0xf]
    %v245 = vld [vmem:[%s3 + $0x74] sm:$0xf]
    %v246 = vld [vmem:[%s3 + $0x78] sm:$0xf]
    %v247 = vld [vmem:[%s3 + $0x7c] sm:$0xf]
    %v248 = vld [vmem:[%s3 + $0x80] sm:$0xf]
    %v249 = vld [vmem:[%s3 + $0x84] sm:$0xf]
    %v250 = vld [vmem:[%s3 + $0x88] sm:$0xf]
    %v251 = vld [vmem:[%s3 + $0x8c] sm:$0xf]
    %v252 = vld [vmem:[%s3 + $0x90] sm:$0xf]
    %v253 = vld [vmem:[%s3 + $0x94] sm:$0xf]
    %v254 = vld [vmem:[%s3 + $0x98] sm:$0xf]
    %v255 = vld [vmem:[%s3 + $0x9c] sm:$0xf]
    %v256 = vld [vmem:[%s3 + $0xa0] sm:$0xf]
    %v257 = vld [vmem:[%s3 + $0xa4] sm:$0xf]
    %v258 = vld [vmem:[%s3 + $0xa8] sm:$0xf]
    %v259 = vld [vmem:[%s3 + $0xac] sm:$0xf]
    %v260 = vld [vmem:[%s3 + $0xb0] sm:$0xf]
    %v261 = vld [vmem:[%s3 + $0xb4] sm:$0xf]
    %v262 = vld [vmem:[%s3 + $0xb8] sm:$0xf]
    %v263 = vld [vmem:[%s3 + $0xbc] sm:$0xf]
    %v264 = vld [vmem:[%s3 + $0xc0] sm:$0xf]
    %v265 = vld [vmem:[%s3 + $0xc4] sm:$0xf]
    %v266 = vld [vmem:[%s3 + $0xc8] sm:$0xf]
    %v267 = vld [vmem:[%s3 + $0xcc] sm:$0xf]
    %v268 = vld [vmem:[%s3 + $0xd0] sm:$0xf]
    %v269 = vld [vmem:[%s3 + $0xd4] sm:$0xf]
    %v270 = vld [vmem:[%s3 + $0xd8] sm:$0xf]
    %v271 = vld [vmem:[%s3 + $0xdc] sm:$0xf]
    %v272 = vld [vmem:[%s3 + $0xe0] sm:$0xf]
    %v273 = vld [vmem:[%s3 + $0xe4] sm:$0xf]
    %v274 = vld [vmem:[%s3 + $0xe8] sm:$0xf]
    %v275 = vld [vmem:[%s3 + $0xec] sm:$0xf]
    %v276 = vld [vmem:[%s3 + $0xf0] sm:$0xf]
    %v277 = vld [vmem:[%s3 + $0xf4] sm:$0xf]
    %v278 = vld [vmem:[%s3 + $0xf8] sm:$0xf]
    %v279 = vld [vmem:[%s3 + $0xfc] sm:$0xf]
    %v280 = vld [vmem:[%s3 + $0x100] sm:$0xf]
    %v281 = vld [vmem:[%s3 + $0x104] sm:$0xf]
    %v282 = vld [vmem:[%s3 + $0x108] sm:$0xf]
    %v283 = vld [vmem:[%s3 + $0x10c] sm:$0xf]
    %v284 = vld [vmem:[%s3 + $0x110] sm:$0xf]
    %v285 = vld [vmem:[%s3 + $0x114] sm:$0xf]
    %v286 = vld [vmem:[%s3 + $0x118] sm:$0xf]
    %v287 = vld [vmem:[%s3 + $0x11c] sm:$0xf]
    %v288 = vld [vmem:[%s3 + $0x120] sm:$0xf]
    %v289 = vld [vmem:[%s3 + $0x124] sm:$0xf]
    %v290 = vld [vmem:[%s3 + $0x128] sm:$0xf]
    %v291 = vld [vmem:[%s3 + $0x12c] sm:$0xf]
    %v292 = vld [vmem:[%s3 + $0x130] sm:$0xf]
    %v293 = vld [vmem:[%s3 + $0x134] sm:$0xf]
    %v294 = vld [vmem:[%s3 + $0x138] sm:$0xf]
    %v295 = vld [vmem:[%s3 + $0x13c] sm:$0xf]
    %v296 = vld [vmem:[%s3 + $0x140] sm:$0xf]
    %v297 = vld [vmem:[%s3 + $0x144] sm:$0xf]
    %v298 = vld [vmem:[%s3 + $0x148] sm:$0xf]
    %v299 = vld [vmem:[%s3 + $0x14c] sm:$0xf]
    %v300 = vld [vmem:[%s3 + $0x150] sm:$0xf]
    %v301 = vld [vmem:[%s3 + $0x154] sm:$0xf]
    %v302 = vld [vmem:[%s3 + $0x158] sm:$0xf]
    %v303 = vld [vmem:[%s3 + $0x15c] sm:$0xf]
    %v304 = vld [vmem:[%s3 + $0x160] sm:$0xf]
    %v305 = vld [vmem:[%s3 + $0x164] sm:$0xf]
    %v306 = vld [vmem:[%s3 + $0x168] sm:$0xf]
    %v307 = vld [vmem:[%s3 + $0x16c] sm:$0xf]
    %v308 = vld [vmem:[%s3 + $0x170] sm:$0xf]
    %v309 = vld [vmem:[%s3 + $0x174] sm:$0xf]
    %v310 = vld [vmem:[%s3 + $0x178] sm:$0xf]
    %v311 = vld [vmem:[%s3 + $0x17c] sm:$0xf]
    %v312 = vld [vmem:[%s3 + $0x180] sm:$0xf]
    %v313 = vld [vmem:[%s3 + $0x184] sm:$0xf]
    %v314 = vld [vmem:[%s3 + $0x188] sm:$0xf]
    %v315 = vld [vmem:[%s3 + $0x18c] sm:$0xf]
    %v316 = vld [vmem:[%s3 + $0x190] sm:$0xf]
    %v317 = vld [vmem:[%s3 + $0x194] sm:$0xf]
    %v318 = vld [vmem:[%s3 + $0x198] sm:$0xf]
    %v319 = vld [vmem:[%s3 + $0x19c] sm:$0xf]
    %v320 = vld [vmem:[%s3 + $0x1a0] sm:$0xf]
    %v321 = vld [vmem:[%s3 + $0x1a4] sm:$0xf]
    %v322 = vld [vmem:[%s3 + $0x1a8] sm:$0xf]
    %v323 = vld [vmem:[%s3 + $0x1ac] sm:$0xf]
    %v324 = vld [vmem:[%s3 + $0x1b0] sm:$0xf]
    %v325 = vld [vmem:[%s3 + $0x1b4] sm:$0xf]
    %v326 = vld [vmem:[%s3 + $0x1b8] sm:$0xf]
    %v327 = vld [vmem:[%s3 + $0x1bc] sm:$0xf]
    %v328 = vld [vmem:[%s3 + $0x1c0] sm:$0xf]
    %v329 = vld [vmem:[%s3 + $0x1c4] sm:$0xf]
    %v330 = vld [vmem:[%s3 + $0x1c8] sm:$0xf]
    %v331 = vld [vmem:[%s3 + $0x1cc] sm:$0xf]
    %v332 = vld [vmem:[%s3 + $0x1d0] sm:$0xf]
    %v333 = vld [vmem:[%s3 + $0x1d4] sm:$0xf]
    %v334 = vld [vmem:[%s3 + $0x1d8] sm:$0xf]
    %v335 = vld [vmem:[%s3 + $0x1dc] sm:$0xf]
    %v336 = vld [vmem:[%s3 + $0x1e0] sm:$0xf]
    %v337 = vld [vmem:[%s3 + $0x1e4] sm:$0xf]
    %v338 = vld [vmem:[%s3 + $0x1e8] sm:$0xf]
    %v339 = vld [vmem:[%s3 + $0x1ec] sm:$0xf]
    %v340 = vld [vmem:[%s3 + $0x1f0] sm:$0xf]
    %v341 = vld [vmem:[%s3 + $0x1f4] sm:$0xf]
    %v342 = vld [vmem:[%s3 + $0x1f8] sm:$0xf]
    %v343 = vld [vmem:[%s3 + $0x1fc] sm:$0xf]
    %v344 = vlaneseq
    %v345 = vshrl.u32 %v344, 7
    %v346 = vsub.s32 0, %v345
    %v347 = vrot.slane %v87, %v346
    %v476 = vunpack.c.l.b16 %v88
    %v477 = vunpack.c.h.b16 %v88
    %v478 = vunpack.c.l.b16 %v89
    %v479 = vunpack.c.h.b16 %v89
    %v480 = vunpack.c.l.b16 %v90
    %v481 = vunpack.c.h.b16 %v90
    %v482 = vunpack.c.l.b16 %v91
    %v483 = vunpack.c.h.b16 %v91
    %v484 = vunpack.c.l.b16 %v92
    %v485 = vunpack.c.h.b16 %v92
    %v486 = vunpack.c.l.b16 %v93
    %v487 = vunpack.c.h.b16 %v93
    %v488 = vunpack.c.l.b16 %v94
    %v489 = vunpack.c.h.b16 %v94
    %v490 = vunpack.c.l.b16 %v95
    %v491 = vunpack.c.h.b16 %v95
    %v492 = vunpack.c.l.b16 %v96
    %v493 = vunpack.c.h.b16 %v96
    %v494 = vunpack.c.l.b16 %v97
    %v495 = vunpack.c.h.b16 %v97
    %v496 = vunpack.c.l.b16 %v98
    %v497 = vunpack.c.h.b16 %v98
    %v498 = vunpack.c.l.b16 %v99
    %v499 = vunpack.c.h.b16 %v99
    %v500 = vunpack.c.l.b16 %v100
    %v501 = vunpack.c.h.b16 %v100
    %v502 = vunpack.c.l.b16 %v101
    %v503 = vunpack.c.h.b16 %v101
    %v504 = vunpack.c.l.b16 %v102
    %v505 = vunpack.c.h.b16 %v102
    %v506 = vunpack.c.l.b16 %v103
    %v507 = vunpack.c.h.b16 %v103
    %v508 = vunpack.c.l.b16 %v104
    %v509 = vunpack.c.h.b16 %v104
    %v510 = vunpack.c.l.b16 %v105
    %v511 = vunpack.c.h.b16 %v105
    %v512 = vunpack.c.l.b16 %v106
    %v513 = vunpack.c.h.b16 %v106
    %v514 = vunpack.c.l.b16 %v107
    %v515 = vunpack.c.h.b16 %v107
    %v516 = vunpack.c.l.b16 %v108
    %v517 = vunpack.c.h.b16 %v108
    %v518 = vunpack.c.l.b16 %v109
    %v519 = vunpack.c.h.b16 %v109
    %v520 = vunpack.c.l.b16 %v110
    %v521 = vunpack.c.h.b16 %v110
    %v522 = vunpack.c.l.b16 %v111
    %v523 = vunpack.c.h.b16 %v111
    %v524 = vunpack.c.l.b16 %v112
    %v525 = vunpack.c.h.b16 %v112
    %v526 = vunpack.c.l.b16 %v113
    %v527 = vunpack.c.h.b16 %v113
    %v528 = vunpack.c.l.b16 %v114
    %v529 = vunpack.c.h.b16 %v114
    %v530 = vunpack.c.l.b16 %v115
    %v531 = vunpack.c.h.b16 %v115
    %v532 = vunpack.c.l.b16 %v116
    %v533 = vunpack.c.h.b16 %v116
    %v534 = vunpack.c.l.b16 %v117
    %v535 = vunpack.c.h.b16 %v117
    %v536 = vunpack.c.l.b16 %v118
    %v537 = vunpack.c.h.b16 %v118
    %v538 = vunpack.c.l.b16 %v119
    %v539 = vunpack.c.h.b16 %v119
    %v540 = vunpack.c.l.b16 %v120
    %v541 = vunpack.c.h.b16 %v120
    %v542 = vunpack.c.l.b16 %v121
    %v543 = vunpack.c.h.b16 %v121
    %v544 = vunpack.c.l.b16 %v122
    %v545 = vunpack.c.h.b16 %v122
    %v546 = vunpack.c.l.b16 %v123
    %v547 = vunpack.c.h.b16 %v123
    %v548 = vunpack.c.l.b16 %v124
    %v549 = vunpack.c.h.b16 %v124
    %v550 = vunpack.c.l.b16 %v125
    %v551 = vunpack.c.h.b16 %v125
    %v552 = vunpack.c.l.b16 %v126
    %v553 = vunpack.c.h.b16 %v126
    %v554 = vunpack.c.l.b16 %v127
    %v555 = vunpack.c.h.b16 %v127
    %v556 = vunpack.c.l.b16 %v128
    %v557 = vunpack.c.h.b16 %v128
    %v558 = vunpack.c.l.b16 %v129
    %v559 = vunpack.c.h.b16 %v129
    %v560 = vunpack.c.l.b16 %v130
    %v561 = vunpack.c.h.b16 %v130
    %v562 = vunpack.c.l.b16 %v131
    %v563 = vunpack.c.h.b16 %v131
    %v564 = vunpack.c.l.b16 %v132
    %v565 = vunpack.c.h.b16 %v132
    %v566 = vunpack.c.l.b16 %v133
    %v567 = vunpack.c.h.b16 %v133
    %v568 = vunpack.c.l.b16 %v134
    %v569 = vunpack.c.h.b16 %v134
    %v570 = vunpack.c.l.b16 %v135
    %v571 = vunpack.c.h.b16 %v135
    %v572 = vunpack.c.l.b16 %v136
    %v573 = vunpack.c.h.b16 %v136
    %v574 = vunpack.c.l.b16 %v137
    %v575 = vunpack.c.h.b16 %v137
    %v576 = vunpack.c.l.b16 %v138
    %v577 = vunpack.c.h.b16 %v138
    %v578 = vunpack.c.l.b16 %v139
    %v579 = vunpack.c.h.b16 %v139
    %v580 = vunpack.c.l.b16 %v140
    %v581 = vunpack.c.h.b16 %v140
    %v582 = vunpack.c.l.b16 %v141
    %v583 = vunpack.c.h.b16 %v141
    %v584 = vunpack.c.l.b16 %v142
    %v585 = vunpack.c.h.b16 %v142
    %v586 = vunpack.c.l.b16 %v143
    %v587 = vunpack.c.h.b16 %v143
    %v588 = vunpack.c.l.b16 %v144
    %v589 = vunpack.c.h.b16 %v144
    %v590 = vunpack.c.l.b16 %v145
    %v591 = vunpack.c.h.b16 %v145
    %v592 = vunpack.c.l.b16 %v146
    %v593 = vunpack.c.h.b16 %v146
    %v594 = vunpack.c.l.b16 %v147
    %v595 = vunpack.c.h.b16 %v147
    %v596 = vunpack.c.l.b16 %v148
    %v597 = vunpack.c.h.b16 %v148
    %v598 = vunpack.c.l.b16 %v149
    %v599 = vunpack.c.h.b16 %v149
    %v600 = vunpack.c.l.b16 %v150
    %v601 = vunpack.c.h.b16 %v150
    %v602 = vunpack.c.l.b16 %v151
    %v603 = vunpack.c.h.b16 %v151
    %v604 = vunpack.c.l.b16 %v152
    %v605 = vunpack.c.h.b16 %v152
    %v606 = vunpack.c.l.b16 %v153
    %v607 = vunpack.c.h.b16 %v153
    %v608 = vunpack.c.l.b16 %v154
    %v609 = vunpack.c.h.b16 %v154
    %v610 = vunpack.c.l.b16 %v155
    %v611 = vunpack.c.h.b16 %v155
    %v612 = vunpack.c.l.b16 %v156
    %v613 = vunpack.c.h.b16 %v156
    %v614 = vunpack.c.l.b16 %v157
    %v615 = vunpack.c.h.b16 %v157
    %v616 = vunpack.c.l.b16 %v158
    %v617 = vunpack.c.h.b16 %v158
    %v618 = vunpack.c.l.b16 %v159
    %v619 = vunpack.c.h.b16 %v159
    %v620 = vunpack.c.l.b16 %v160
    %v621 = vunpack.c.h.b16 %v160
    %v622 = vunpack.c.l.b16 %v161
    %v623 = vunpack.c.h.b16 %v161
    %v624 = vunpack.c.l.b16 %v162
    %v625 = vunpack.c.h.b16 %v162
    %v626 = vunpack.c.l.b16 %v163
    %v627 = vunpack.c.h.b16 %v163
    %v628 = vunpack.c.l.b16 %v164
    %v629 = vunpack.c.h.b16 %v164
    %v630 = vunpack.c.l.b16 %v165
    %v631 = vunpack.c.h.b16 %v165
    %v632 = vunpack.c.l.b16 %v166
    %v633 = vunpack.c.h.b16 %v166
    %v634 = vunpack.c.l.b16 %v167
    %v635 = vunpack.c.h.b16 %v167
    %v636 = vunpack.c.l.b16 %v168
    %v637 = vunpack.c.h.b16 %v168
    %v638 = vunpack.c.l.b16 %v169
    %v639 = vunpack.c.h.b16 %v169
    %v640 = vunpack.c.l.b16 %v170
    %v641 = vunpack.c.h.b16 %v170
    %v642 = vunpack.c.l.b16 %v171
    %v643 = vunpack.c.h.b16 %v171
    %v644 = vunpack.c.l.b16 %v172
    %v645 = vunpack.c.h.b16 %v172
    %v646 = vunpack.c.l.b16 %v173
    %v647 = vunpack.c.h.b16 %v173
    %v648 = vunpack.c.l.b16 %v174
    %v649 = vunpack.c.h.b16 %v174
    %v650 = vunpack.c.l.b16 %v175
    %v651 = vunpack.c.h.b16 %v175
    %v652 = vunpack.c.l.b16 %v176
    %v653 = vunpack.c.h.b16 %v176
    %v654 = vunpack.c.l.b16 %v177
    %v655 = vunpack.c.h.b16 %v177
    %v656 = vunpack.c.l.b16 %v178
    %v657 = vunpack.c.h.b16 %v178
    %v658 = vunpack.c.l.b16 %v179
    %v659 = vunpack.c.h.b16 %v179
    %v660 = vunpack.c.l.b16 %v180
    %v661 = vunpack.c.h.b16 %v180
    %v662 = vunpack.c.l.b16 %v181
    %v663 = vunpack.c.h.b16 %v181
    %v664 = vunpack.c.l.b16 %v182
    %v665 = vunpack.c.h.b16 %v182
    %v666 = vunpack.c.l.b16 %v183
    %v667 = vunpack.c.h.b16 %v183
    %v668 = vunpack.c.l.b16 %v184
    %v669 = vunpack.c.h.b16 %v184
    %v670 = vunpack.c.l.b16 %v185
    %v671 = vunpack.c.h.b16 %v185
    %v672 = vunpack.c.l.b16 %v186
    %v673 = vunpack.c.h.b16 %v186
    %v674 = vunpack.c.l.b16 %v187
    %v675 = vunpack.c.h.b16 %v187
    %v676 = vunpack.c.l.b16 %v188
    %v677 = vunpack.c.h.b16 %v188
    %v678 = vunpack.c.l.b16 %v189
    %v679 = vunpack.c.h.b16 %v189
    %v680 = vunpack.c.l.b16 %v190
    %v681 = vunpack.c.h.b16 %v190
    %v682 = vunpack.c.l.b16 %v191
    %v683 = vunpack.c.h.b16 %v191
    %v684 = vunpack.c.l.b16 %v192
    %v685 = vunpack.c.h.b16 %v192
    %v686 = vunpack.c.l.b16 %v193
    %v687 = vunpack.c.h.b16 %v193
    %v688 = vunpack.c.l.b16 %v194
    %v689 = vunpack.c.h.b16 %v194
    %v690 = vunpack.c.l.b16 %v195
    %v691 = vunpack.c.h.b16 %v195
    %v692 = vunpack.c.l.b16 %v196
    %v693 = vunpack.c.h.b16 %v196
    %v694 = vunpack.c.l.b16 %v197
    %v695 = vunpack.c.h.b16 %v197
    %v696 = vunpack.c.l.b16 %v198
    %v697 = vunpack.c.h.b16 %v198
    %v698 = vunpack.c.l.b16 %v199
    %v699 = vunpack.c.h.b16 %v199
    %v700 = vunpack.c.l.b16 %v200
    %v701 = vunpack.c.h.b16 %v200
    %v702 = vunpack.c.l.b16 %v201
    %v703 = vunpack.c.h.b16 %v201
    %v704 = vunpack.c.l.b16 %v202
    %v705 = vunpack.c.h.b16 %v202
    %v706 = vunpack.c.l.b16 %v203
    %v707 = vunpack.c.h.b16 %v203
    %v708 = vunpack.c.l.b16 %v204
    %v709 = vunpack.c.h.b16 %v204
    %v710 = vunpack.c.l.b16 %v205
    %v711 = vunpack.c.h.b16 %v205
    %v712 = vunpack.c.l.b16 %v206
    %v713 = vunpack.c.h.b16 %v206
    %v714 = vunpack.c.l.b16 %v207
    %v715 = vunpack.c.h.b16 %v207
    %v716 = vunpack.c.l.b16 %v208
    %v717 = vunpack.c.h.b16 %v208
    %v718 = vunpack.c.l.b16 %v209
    %v719 = vunpack.c.h.b16 %v209
    %v720 = vunpack.c.l.b16 %v210
    %v721 = vunpack.c.h.b16 %v210
    %v722 = vunpack.c.l.b16 %v211
    %v723 = vunpack.c.h.b16 %v211
    %v724 = vunpack.c.l.b16 %v212
    %v725 = vunpack.c.h.b16 %v212
    %v726 = vunpack.c.l.b16 %v213
    %v727 = vunpack.c.h.b16 %v213
    %v728 = vunpack.c.l.b16 %v214
    %v729 = vunpack.c.h.b16 %v214
    %v730 = vunpack.c.l.b16 %v215
    %v731 = vunpack.c.h.b16 %v215
    %v732 = vpack.c.b16 %v484, %v476
    %v733 = vpack.c.b16 %v485, %v477
    %v734 = vpack.c.b16 %v486, %v478
    %v735 = vpack.c.b16 %v487, %v479
    %v736 = vpack.c.b16 %v488, %v480
    %v737 = vpack.c.b16 %v489, %v481
    %v738 = vpack.c.b16 %v490, %v482
    %v739 = vpack.c.b16 %v491, %v483
    %v740 = vpack.c.b16 %v500, %v492
    %v741 = vpack.c.b16 %v501, %v493
    %v742 = vpack.c.b16 %v502, %v494
    %v743 = vpack.c.b16 %v503, %v495
    %v744 = vpack.c.b16 %v504, %v496
    %v745 = vpack.c.b16 %v505, %v497
    %v746 = vpack.c.b16 %v506, %v498
    %v747 = vpack.c.b16 %v507, %v499
    %v748 = vpack.c.b16 %v516, %v508
    %v749 = vpack.c.b16 %v517, %v509
    %v750 = vpack.c.b16 %v518, %v510
    %v751 = vpack.c.b16 %v519, %v511
    %v752 = vpack.c.b16 %v520, %v512
    %v753 = vpack.c.b16 %v521, %v513
    %v754 = vpack.c.b16 %v522, %v514
    %v755 = vpack.c.b16 %v523, %v515
    %v756 = vpack.c.b16 %v532, %v524
    %v757 = vpack.c.b16 %v533, %v525
    %v758 = vpack.c.b16 %v534, %v526
    %v759 = vpack.c.b16 %v535, %v527
    %v760 = vpack.c.b16 %v536, %v528
    %v761 = vpack.c.b16 %v537, %v529
    %v762 = vpack.c.b16 %v538, %v530
    %v763 = vpack.c.b16 %v539, %v531
    %v764 = vpack.c.b16 %v548, %v540
    %v765 = vpack.c.b16 %v549, %v541
    %v766 = vpack.c.b16 %v550, %v542
    %v767 = vpack.c.b16 %v551, %v543
    %v768 = vpack.c.b16 %v552, %v544
    %v769 = vpack.c.b16 %v553, %v545
    %v770 = vpack.c.b16 %v554, %v546
    %v771 = vpack.c.b16 %v555, %v547
    %v772 = vpack.c.b16 %v564, %v556
    %v773 = vpack.c.b16 %v565, %v557
    %v774 = vpack.c.b16 %v566, %v558
    %v775 = vpack.c.b16 %v567, %v559
    %v776 = vpack.c.b16 %v568, %v560
    %v777 = vpack.c.b16 %v569, %v561
    %v778 = vpack.c.b16 %v570, %v562
    %v779 = vpack.c.b16 %v571, %v563
    %v780 = vpack.c.b16 %v580, %v572
    %v781 = vpack.c.b16 %v581, %v573
    %v782 = vpack.c.b16 %v582, %v574
    %v783 = vpack.c.b16 %v583, %v575
    %v784 = vpack.c.b16 %v584, %v576
    %v785 = vpack.c.b16 %v585, %v577
    %v786 = vpack.c.b16 %v586, %v578
    %v787 = vpack.c.b16 %v587, %v579
    %v788 = vpack.c.b16 %v596, %v588
    %v789 = vpack.c.b16 %v597, %v589
    %v790 = vpack.c.b16 %v598, %v590
    %v791 = vpack.c.b16 %v599, %v591
    %v792 = vpack.c.b16 %v600, %v592
    %v793 = vpack.c.b16 %v601, %v593
    %v794 = vpack.c.b16 %v602, %v594
    %v795 = vpack.c.b16 %v603, %v595
    %v796 = vpack.c.b16 %v612, %v604
    %v797 = vpack.c.b16 %v613, %v605
    %v798 = vpack.c.b16 %v614, %v606
    %v799 = vpack.c.b16 %v615, %v607
    %v800 = vpack.c.b16 %v616, %v608
    %v801 = vpack.c.b16 %v617, %v609
    %v802 = vpack.c.b16 %v618, %v610
    %v803 = vpack.c.b16 %v619, %v611
    %v804 = vpack.c.b16 %v628, %v620
    %v805 = vpack.c.b16 %v629, %v621
    %v806 = vpack.c.b16 %v630, %v622
    %v807 = vpack.c.b16 %v631, %v623
    %v808 = vpack.c.b16 %v632, %v624
    %v809 = vpack.c.b16 %v633, %v625
    %v810 = vpack.c.b16 %v634, %v626
    %v811 = vpack.c.b16 %v635, %v627
    %v812 = vpack.c.b16 %v644, %v636
    %v813 = vpack.c.b16 %v645, %v637
    %v814 = vpack.c.b16 %v646, %v638
    %v815 = vpack.c.b16 %v647, %v639
    %v816 = vpack.c.b16 %v648, %v640
    %v817 = vpack.c.b16 %v649, %v641
    %v818 = vpack.c.b16 %v650, %v642
    %v819 = vpack.c.b16 %v651, %v643
    %v820 = vpack.c.b16 %v660, %v652
    %v821 = vpack.c.b16 %v661, %v653
    %v822 = vpack.c.b16 %v662, %v654
    %v823 = vpack.c.b16 %v663, %v655
    %v824 = vpack.c.b16 %v664, %v656
    %v825 = vpack.c.b16 %v665, %v657
    %v826 = vpack.c.b16 %v666, %v658
    %v827 = vpack.c.b16 %v667, %v659
    %v828 = vpack.c.b16 %v676, %v668
    %v829 = vpack.c.b16 %v677, %v669
    %v830 = vpack.c.b16 %v678, %v670
    %v831 = vpack.c.b16 %v679, %v671
    %v832 = vpack.c.b16 %v680, %v672
    %v833 = vpack.c.b16 %v681, %v673
    %v834 = vpack.c.b16 %v682, %v674
    %v835 = vpack.c.b16 %v683, %v675
    %v836 = vpack.c.b16 %v692, %v684
    %v837 = vpack.c.b16 %v693, %v685
    %v838 = vpack.c.b16 %v694, %v686
    %v839 = vpack.c.b16 %v695, %v687
    %v840 = vpack.c.b16 %v696, %v688
    %v841 = vpack.c.b16 %v697, %v689
    %v842 = vpack.c.b16 %v698, %v690
    %v843 = vpack.c.b16 %v699, %v691
    %v844 = vpack.c.b16 %v708, %v700
    %v845 = vpack.c.b16 %v709, %v701
    %v846 = vpack.c.b16 %v710, %v702
    %v847 = vpack.c.b16 %v711, %v703
    %v848 = vpack.c.b16 %v712, %v704
    %v849 = vpack.c.b16 %v713, %v705
    %v850 = vpack.c.b16 %v714, %v706
    %v851 = vpack.c.b16 %v715, %v707
    %v852 = vpack.c.b16 %v724, %v716
    %v853 = vpack.c.b16 %v725, %v717
    %v854 = vpack.c.b16 %v726, %v718
    %v855 = vpack.c.b16 %v727, %v719
    %v856 = vpack.c.b16 %v728, %v720
    %v857 = vpack.c.b16 %v729, %v721
    %v858 = vpack.c.b16 %v730, %v722
    %v859 = vpack.c.b16 %v731, %v723
    %v1116 = vunpack.c.l.b16 %v216
    %v1117 = vunpack.c.l.b16 %v217
    %v1118 = vunpack.c.l.b16 %v218
    %v1119 = vunpack.c.l.b16 %v219
    %v1120 = vunpack.c.l.b16 %v220
    %v1121 = vunpack.c.l.b16 %v221
    %v1122 = vunpack.c.l.b16 %v222
    %v1123 = vunpack.c.l.b16 %v223
    %v1124 = vunpack.c.l.b16 %v224
    %v1125 = vunpack.c.l.b16 %v225
    %v1126 = vunpack.c.l.b16 %v226
    %v1127 = vunpack.c.l.b16 %v227
    %v1128 = vunpack.c.l.b16 %v228
    %v1129 = vunpack.c.l.b16 %v229
    %v1130 = vunpack.c.l.b16 %v230
    %v1131 = vunpack.c.l.b16 %v231
    %v1132 = vunpack.c.l.b16 %v232
    %v1133 = vunpack.c.l.b16 %v233
    %v1134 = vunpack.c.l.b16 %v234
    %v1135 = vunpack.c.l.b16 %v235
    %v1136 = vunpack.c.l.b16 %v236
    %v1137 = vunpack.c.l.b16 %v237
    %v1138 = vunpack.c.l.b16 %v238
    %v1139 = vunpack.c.l.b16 %v239
    %v1140 = vunpack.c.l.b16 %v240
    %v1141 = vunpack.c.l.b16 %v241
    %v1142 = vunpack.c.l.b16 %v242
    %v1143 = vunpack.c.l.b16 %v243
    %v1144 = vunpack.c.l.b16 %v244
    %v1145 = vunpack.c.l.b16 %v245
    %v1146 = vunpack.c.l.b16 %v246
    %v1147 = vunpack.c.l.b16 %v247
    %v1148 = vunpack.c.l.b16 %v248
    %v1149 = vunpack.c.l.b16 %v249
    %v1150 = vunpack.c.l.b16 %v250
    %v1151 = vunpack.c.l.b16 %v251
    %v1152 = vunpack.c.l.b16 %v252
    %v1153 = vunpack.c.l.b16 %v253
    %v1154 = vunpack.c.l.b16 %v254
    %v1155 = vunpack.c.l.b16 %v255
    %v1156 = vunpack.c.l.b16 %v256
    %v1157 = vunpack.c.l.b16 %v257
    %v1158 = vunpack.c.l.b16 %v258
    %v1159 = vunpack.c.l.b16 %v259
    %v1160 = vunpack.c.l.b16 %v260
    %v1161 = vunpack.c.l.b16 %v261
    %v1162 = vunpack.c.l.b16 %v262
    %v1163 = vunpack.c.l.b16 %v263
    %v1164 = vunpack.c.l.b16 %v264
    %v1165 = vunpack.c.l.b16 %v265
    %v1166 = vunpack.c.l.b16 %v266
    %v1167 = vunpack.c.l.b16 %v267
    %v1168 = vunpack.c.l.b16 %v268
    %v1169 = vunpack.c.l.b16 %v269
    %v1170 = vunpack.c.l.b16 %v270
    %v1171 = vunpack.c.l.b16 %v271
    %v1172 = vunpack.c.l.b16 %v272
    %v1173 = vunpack.c.l.b16 %v273
    %v1174 = vunpack.c.l.b16 %v274
    %v1175 = vunpack.c.l.b16 %v275
    %v1176 = vunpack.c.l.b16 %v276
    %v1177 = vunpack.c.l.b16 %v277
    %v1178 = vunpack.c.l.b16 %v278
    %v1179 = vunpack.c.l.b16 %v279
    %v1180 = vunpack.c.l.b16 %v280
    %v1181 = vunpack.c.l.b16 %v281
    %v1182 = vunpack.c.l.b16 %v282
    %v1183 = vunpack.c.l.b16 %v283
    %v1184 = vunpack.c.l.b16 %v284
    %v1185 = vunpack.c.l.b16 %v285
    %v1186 = vunpack.c.l.b16 %v286
    %v1187 = vunpack.c.l.b16 %v287
    %v1188 = vunpack.c.l.b16 %v288
    %v1189 = vunpack.c.l.b16 %v289
    %v1190 = vunpack.c.l.b16 %v290
    %v1191 = vunpack.c.l.b16 %v291
    %v1192 = vunpack.c.l.b16 %v292
    %v1193 = vunpack.c.l.b16 %v293
    %v1194 = vunpack.c.l.b16 %v294
    %v1195 = vunpack.c.l.b16 %v295
    %v1196 = vunpack.c.l.b16 %v296
    %v1197 = vunpack.c.l.b16 %v297
    %v1198 = vunpack.c.l.b16 %v298
    %v1199 = vunpack.c.l.b16 %v299
    %v1200 = vunpack.c.l.b16 %v300
    %v1201 = vunpack.c.l.b16 %v301
    %v1202 = vunpack.c.l.b16 %v302
    %v1203 = vunpack.c.l.b16 %v303
    %v1204 = vunpack.c.l.b16 %v304
    %v1205 = vunpack.c.l.b16 %v305
    %v1206 = vunpack.c.l.b16 %v306
    %v1207 = vunpack.c.l.b16 %v307
    %v1208 = vunpack.c.l.b16 %v308
    %v1209 = vunpack.c.l.b16 %v309
    %v1210 = vunpack.c.l.b16 %v310
    %v1211 = vunpack.c.l.b16 %v311
    %v1212 = vunpack.c.l.b16 %v312
    %v1213 = vunpack.c.l.b16 %v313
    %v1214 = vunpack.c.l.b16 %v314
    %v1215 = vunpack.c.l.b16 %v315
    %v1216 = vunpack.c.l.b16 %v316
    %v1217 = vunpack.c.l.b16 %v317
    %v1218 = vunpack.c.l.b16 %v318
    %v1219 = vunpack.c.l.b16 %v319
    %v1220 = vunpack.c.l.b16 %v320
    %v1221 = vunpack.c.l.b16 %v321
    %v1222 = vunpack.c.l.b16 %v322
    %v1223 = vunpack.c.l.b16 %v323
    %v1224 = vunpack.c.l.b16 %v324
    %v1225 = vunpack.c.l.b16 %v325
    %v1226 = vunpack.c.l.b16 %v326
    %v1227 = vunpack.c.l.b16 %v327
    %v1228 = vunpack.c.l.b16 %v328
    %v1229 = vunpack.c.l.b16 %v329
    %v1230 = vunpack.c.l.b16 %v330
    %v1231 = vunpack.c.l.b16 %v331
    %v1232 = vunpack.c.l.b16 %v332
    %v1233 = vunpack.c.l.b16 %v333
    %v1234 = vunpack.c.l.b16 %v334
    %v1235 = vunpack.c.l.b16 %v335
    %v1236 = vunpack.c.l.b16 %v336
    %v1237 = vunpack.c.l.b16 %v337
    %v1238 = vunpack.c.l.b16 %v338
    %v1239 = vunpack.c.l.b16 %v339
    %v1240 = vunpack.c.l.b16 %v340
    %v1241 = vunpack.c.l.b16 %v341
    %v1242 = vunpack.c.l.b16 %v342
    %v1243 = vunpack.c.l.b16 %v343
    %v1244 = vpack.c.b16 %v1117, %v1116
    %v1245 = vpack.c.b16 %v1119, %v1118
    %v1246 = vpack.c.b16 %v1121, %v1120
    %v1247 = vpack.c.b16 %v1123, %v1122
    %v1248 = vpack.c.b16 %v1125, %v1124
    %v1249 = vpack.c.b16 %v1127, %v1126
    %v1250 = vpack.c.b16 %v1129, %v1128
    %v1251 = vpack.c.b16 %v1131, %v1130
    %v1252 = vpack.c.b16 %v1133, %v1132
    %v1253 = vpack.c.b16 %v1135, %v1134
    %v1254 = vpack.c.b16 %v1137, %v1136
    %v1255 = vpack.c.b16 %v1139, %v1138
    %v1256 = vpack.c.b16 %v1141, %v1140
    %v1257 = vpack.c.b16 %v1143, %v1142
    %v1258 = vpack.c.b16 %v1145, %v1144
    %v1259 = vpack.c.b16 %v1147, %v1146
    %v1260 = vpack.c.b16 %v1149, %v1148
    %v1261 = vpack.c.b16 %v1151, %v1150
    %v1262 = vpack.c.b16 %v1153, %v1152
    %v1263 = vpack.c.b16 %v1155, %v1154
    %v1264 = vpack.c.b16 %v1157, %v1156
    %v1265 = vpack.c.b16 %v1159, %v1158
    %v1266 = vpack.c.b16 %v1161, %v1160
    %v1267 = vpack.c.b16 %v1163, %v1162
    %v1268 = vpack.c.b16 %v1165, %v1164
    %v1269 = vpack.c.b16 %v1167, %v1166
    %v1270 = vpack.c.b16 %v1169, %v1168
    %v1271 = vpack.c.b16 %v1171, %v1170
    %v1272 = vpack.c.b16 %v1173, %v1172
    %v1273 = vpack.c.b16 %v1175, %v1174
    %v1274 = vpack.c.b16 %v1177, %v1176
    %v1275 = vpack.c.b16 %v1179, %v1178
    %v1276 = vpack.c.b16 %v1181, %v1180
    %v1277 = vpack.c.b16 %v1183, %v1182
    %v1278 = vpack.c.b16 %v1185, %v1184
    %v1279 = vpack.c.b16 %v1187, %v1186
    %v1280 = vpack.c.b16 %v1189, %v1188
    %v1281 = vpack.c.b16 %v1191, %v1190
    %v1282 = vpack.c.b16 %v1193, %v1192
    %v1283 = vpack.c.b16 %v1195, %v1194
    %v1284 = vpack.c.b16 %v1197, %v1196
    %v1285 = vpack.c.b16 %v1199, %v1198
    %v1286 = vpack.c.b16 %v1201, %v1200
    %v1287 = vpack.c.b16 %v1203, %v1202
    %v1288 = vpack.c.b16 %v1205, %v1204
    %v1289 = vpack.c.b16 %v1207, %v1206
    %v1290 = vpack.c.b16 %v1209, %v1208
    %v1291 = vpack.c.b16 %v1211, %v1210
    %v1292 = vpack.c.b16 %v1213, %v1212
    %v1293 = vpack.c.b16 %v1215, %v1214
    %v1294 = vpack.c.b16 %v1217, %v1216
    %v1295 = vpack.c.b16 %v1219, %v1218
    %v1296 = vpack.c.b16 %v1221, %v1220
    %v1297 = vpack.c.b16 %v1223, %v1222
    %v1298 = vpack.c.b16 %v1225, %v1224
    %v1299 = vpack.c.b16 %v1227, %v1226
    %v1300 = vpack.c.b16 %v1229, %v1228
    %v1301 = vpack.c.b16 %v1231, %v1230
    %v1302 = vpack.c.b16 %v1233, %v1232
    %v1303 = vpack.c.b16 %v1235, %v1234
    %v1304 = vpack.c.b16 %v1237, %v1236
    %v1305 = vpack.c.b16 %v1239, %v1238
    %v1306 = vpack.c.b16 %v1241, %v1240
    %v1307 = vpack.c.b16 %v1243, %v1242
    %1372 = vmatprep.subr.bf16.mxu0 0
    %1373 = vmatpush1.bf16.msra.mxu0 %v1244
    %1374 = vmatprep.subr.bf16.mxu0 0
    %1375 = vmatpush1.bf16.msra.mxu0 %v1245
    %1376 = vmatprep.subr.bf16.mxu0 0
    %1377 = vmatpush1.bf16.msra.mxu0 %v1246
    %1378 = vmatprep.subr.bf16.mxu0 0
    %1379 = vmatpush1.bf16.msra.mxu0 %v1247
    %1380 = vmatprep.subr.bf16.mxu0 0
    %1381 = vmatpush1.bf16.msra.mxu0 %v1248
    %1382 = vmatprep.subr.bf16.mxu0 0
    %1383 = vmatpush1.bf16.msra.mxu0 %v1249
    %1384 = vmatprep.subr.bf16.mxu0 0
    %1385 = vmatpush1.bf16.msra.mxu0 %v1250
    %1386 = vmatprep.subr.bf16.mxu0 0
    %1387 = vmatpush1.bf16.msra.mxu0 %v1251
    %1388 = vmatprep.subr.bf16.mxu0 0
    %1389 = vmatpush1.bf16.msra.mxu0 %v1252
    %1390 = vmatprep.subr.bf16.mxu0 0
    %1391 = vmatpush1.bf16.msra.mxu0 %v1253
    %1392 = vmatprep.subr.bf16.mxu0 0
    %1393 = vmatpush1.bf16.msra.mxu0 %v1254
    %1394 = vmatprep.subr.bf16.mxu0 0
    %1395 = vmatpush1.bf16.msra.mxu0 %v1255
    %1396 = vmatprep.subr.bf16.mxu0 0
    %1397 = vmatpush1.bf16.msra.mxu0 %v1256
    %1398 = vmatprep.subr.bf16.mxu0 0
    %1399 = vmatpush1.bf16.msra.mxu0 %v1257
    %1400 = vmatprep.subr.bf16.mxu0 0
    %1401 = vmatpush1.bf16.msra.mxu0 %v1258
    %1402 = vmatprep.subr.bf16.mxu0 0
    %1403 = vmatpush1.bf16.msra.mxu0 %v1259
    %1404 = vmatprep.mubr.bf16.mxu0 %v733
    %1405 = vmatmul.mubr.bf16.gmra.mrb[0].mxu0 %v732
    %v1406 = vpop.f32.mrb[0].mxu0
    %v1407 = vadd.f32 %v347, %v1406
    %v1408 = vpop.f32.mrb[0].mxu0
    %v1409 = vpop.f32.mrb[0].mxu0
    %v1410 = vadd.f32 %v347, %v1409
    %v1411 = vpop.f32.mrb[0].mxu0
    %1412 = vmatprep.mubr.bf16.mxu0 %v741
    %1413 = vmatmul.mubr.bf16.gmra.mrb[0].mxu0 %v740
    %v1414 = vpop.f32.mrb[0].mxu0
    %v1415 = vadd.f32 %v347, %v1414
    %v1416 = vpop.f32.mrb[0].mxu0
    %v1417 = vpop.f32.mrb[0].mxu0
    %v1418 = vadd.f32 %v347, %v1417
    %v1419 = vpop.f32.mrb[0].mxu0
    %1420 = vmatprep.mubr.bf16.mxu0 %v749
    %1421 = vmatmul.mubr.bf16.gmra.mrb[0].mxu0 %v748
    %v1422 = vpop.f32.mrb[0].mxu0
    %v1423 = vadd.f32 %v347, %v1422
    %v1424 = vpop.f32.mrb[0].mxu0
    %v1425 = vpop.f32.mrb[0].mxu0
    %v1426 = vadd.f32 %v347, %v1425
    %v1427 = vpop.f32.mrb[0].mxu0
    %1428 = vmatprep.mubr.bf16.mxu0 %v757
    %1429 = vmatmul.mubr.bf16.gmra.mrb[0].mxu0 %v756
    %v1430 = vpop.f32.mrb[0].mxu0
    %v1431 = vadd.f32 %v347, %v1430
    %v1432 = vpop.f32.mrb[0].mxu0
    %v1433 = vpop.f32.mrb[0].mxu0
    %v1434 = vadd.f32 %v347, %v1433
    %v1435 = vpop.f32.mrb[0].mxu0
    %1436 = vmatprep.mubr.bf16.mxu0 %v765
    %1437 = vmatmul.mubr.bf16.gmra.mrb[0].mxu0 %v764
    %v1438 = vpop.f32.mrb[0].mxu0
    %v1439 = vadd.f32 %v347, %v1438
    %v1440 = vpop.f32.mrb[0].mxu0
    %v1441 = vpop.f32.mrb[0].mxu0
    %v1442 = vadd.f32 %v347, %v1441
    %v1443 = vpop.f32.mrb[0].mxu0
    %1444 = vmatprep.mubr.bf16.mxu0 %v773
    %1445 = vmatmul.mubr.bf16.gmra.mrb[0].mxu0 %v772
    %v1446 = vpop.f32.mrb[0].mxu0
    %v1447 = vadd.f32 %v347, %v1446
    %v1448 = vpop.f32.mrb[0].mxu0
    %v1449 = vpop.f32.mrb[0].mxu0
    %v1450 = vadd.f32 %v347, %v1449
    %v1451 = vpop.f32.mrb[0].mxu0
    %1452 = vmatprep.mubr.bf16.mxu0 %v781
    %1453 = vmatmul.mubr.bf16.gmra.mrb[0].mxu0 %v780
    %v1454 = vpop.f32.mrb[0].mxu0
    %v1455 = vadd.f32 %v347, %v1454
    %v1456 = vpop.f32.mrb[0].mxu0
    %v1457 = vpop.f32.mrb[0].mxu0
    %v1458 = vadd.f32 %v347, %v1457
    %v1459 = vpop.f32.mrb[0].mxu0
    %1460 = vmatprep.mubr.bf16.mxu0 %v789
    %1461 = vmatmul.mubr.bf16.gmra.mrb[0].mxu0 %v788
    %v1462 = vpop.f32.mrb[0].mxu0
    %v1463 = vadd.f32 %v347, %v1462
    %v1464 = vpop.f32.mrb[0].mxu0
    %v1465 = vpop.f32.mrb[0].mxu0
    %v1466 = vadd.f32 %v347, %v1465
    %v1467 = vpop.f32.mrb[0].mxu0
    %1468 = vmatprep.mubr.bf16.mxu0 %v797
    %1469 = vmatmul.mubr.bf16.gmra.mrb[0].mxu0 %v796
    %v1470 = vpop.f32.mrb[0].mxu0
    %v1471 = vadd.f32 %v347, %v1470
    %v1472 = vpop.f32.mrb[0].mxu0
    %v1473 = vpop.f32.mrb[0].mxu0
    %v1474 = vadd.f32 %v347, %v1473
    %v1475 = vpop.f32.mrb[0].mxu0
    %1476 = vmatprep.mubr.bf16.mxu0 %v805
    %1477 = vmatmul.mubr.bf16.gmra.mrb[0].mxu0 %v804
    %v1478 = vpop.f32.mrb[0].mxu0
    %v1479 = vadd.f32 %v347, %v1478
    %v1480 = vpop.f32.mrb[0].mxu0
    %v1481 = vpop.f32.mrb[0].mxu0
    %v1482 = vadd.f32 %v347, %v1481
    %v1483 = vpop.f32.mrb[0].mxu0
    %1484 = vmatprep.mubr.bf16.mxu0 %v813
    %1485 = vmatmul.mubr.bf16.gmra.mrb[0].mxu0 %v812
    %v1486 = vpop.f32.mrb[0].mxu0
    %v1487 = vadd.f32 %v347, %v1486
    %v1488 = vpop.f32.mrb[0].mxu0
    %v1489 = vpop.f32.mrb[0].mxu0
    %v1490 = vadd.f32 %v347, %v1489
    %v1491 = vpop.f32.mrb[0].mxu0
    %1492 = vmatprep.mubr.bf16.mxu0 %v821
    %1493 = vmatmul.mubr.bf16.gmra.mrb[0].mxu0 %v820
    %v1494 = vpop.f32.mrb[0].mxu0
    %v1495 = vadd.f32 %v347, %v1494
    %v1496 = vpop.f32.mrb[0].mxu0
    %v1497 = vpop.f32.mrb[0].mxu0
    %v1498 = vadd.f32 %v347, %v1497
    %v1499 = vpop.f32.mrb[0].mxu0
    %1500 = vmatprep.mubr.bf16.mxu0 %v829
    %1501 = vmatmul.mubr.bf16.gmra.mrb[0].mxu0 %v828
    %v1502 = vpop.f32.mrb[0].mxu0
    %v1503 = vadd.f32 %v347, %v1502
    %v1504 = vpop.f32.mrb[0].mxu0
    %v1505 = vpop.f32.mrb[0].mxu0
    %v1506 = vadd.f32 %v347, %v1505
    %v1507 = vpop.f32.mrb[0].mxu0
    %1508 = vmatprep.mubr.bf16.mxu0 %v837
    %1509 = vmatmul.mubr.bf16.gmra.mrb[0].mxu0 %v836
    %v1510 = vpop.f32.mrb[0].mxu0
    %v1511 = vadd.f32 %v347, %v1510
    %v1512 = vpop.f32.mrb[0].mxu0
    %v1513 = vpop.f32.mrb[0].mxu0
    %v1514 = vadd.f32 %v347, %v1513
    %v1515 = vpop.f32.mrb[0].mxu0
    %1516 = vmatprep.mubr.bf16.mxu0 %v845
    %1517 = vmatmul.mubr.bf16.gmra.mrb[0].mxu0 %v844
    %v1518 = vpop.f32.mrb[0].mxu0
    %v1519 = vadd.f32 %v347, %v1518
    %v1520 = vpop.f32.mrb[0].mxu0
    %v1521 = vpop.f32.mrb[0].mxu0
    %v1522 = vadd.f32 %v347, %v1521
    %v1523 = vpop.f32.mrb[0].mxu0
    %1524 = vmatprep.mubr.bf16.mxu0 %v853
    %1525 = vmatmul.mubr.bf16.gmra.mrb[0].mxu0 %v852
    %v1526 = vpop.f32.mrb[0].mxu0
    %v1527 = vadd.f32 %v347, %v1526
    %v1528 = vpop.f32.mrb[0].mxu0
    %v1529 = vpop.f32.mrb[0].mxu0
    %v1530 = vadd.f32 %v347, %v1529
    %v1531 = vpop.f32.mrb[0].mxu0
    %1532 = vdwg.mxu0
    %1533 = vmatprep.subr.bf16.mxu0 0
    %1534 = vmatpush1.bf16.msra.mxu0 %v1260
    %1535 = vmatprep.subr.bf16.mxu0 0
    %1536 = vmatpush1.bf16.msra.mxu0 %v1261
    %1537 = vmatprep.subr.bf16.mxu0 0
    %1538 = vmatpush1.bf16.msra.mxu0 %v1262
    %1539 = vmatprep.subr.bf16.mxu0 0
    %1540 = vmatpush1.bf16.msra.mxu0 %v1263
    %1541 = vmatprep.subr.bf16.mxu0 0
    %1542 = vmatpush1.bf16.msra.mxu0 %v1264
    %1543 = vmatprep.subr.bf16.mxu0 0
    %1544 = vmatpush1.bf16.msra.mxu0 %v1265
    %1545 = vmatprep.subr.bf16.mxu0 0
    %1546 = vmatpush1.bf16.msra.mxu0 %v1266
    %1547 = vmatprep.subr.bf16.mxu0 0
    %1548 = vmatpush1.bf16.msra.mxu0 %v1267
    %1549 = vmatprep.subr.bf16.mxu0 0
    %1550 = vmatpush1.bf16.msra.mxu0 %v1268
    %1551 = vmatprep.subr.bf16.mxu0 0
    %1552 = vmatpush1.bf16.msra.mxu0 %v1269
    %1553 = vmatprep.subr.bf16.mxu0 0
    %1554 = vmatpush1.bf16.msra.mxu0 %v1270
    %1555 = vmatprep.subr.bf16.mxu0 0
    %1556 = vmatpush1.bf16.msra.mxu0 %v1271
    %1557 = vmatprep.subr.bf16.mxu0 0
    %1558 = vmatpush1.bf16.msra.mxu0 %v1272
    %1559 = vmatprep.subr.bf16.mxu0 0
    %1560 = vmatpush1.bf16.msra.mxu0 %v1273
    %1561 = vmatprep.subr.bf16.mxu0 0
    %1562 = vmatpush1.bf16.msra.mxu0 %v1274
    %1563 = vmatprep.subr.bf16.mxu0 0
    %1564 = vmatpush1.bf16.msra.mxu0 %v1275
    %1565 = vmatprep.mubr.bf16.mxu0 %v735
    %1566 = vmatmul.mubr.bf16.gmra.mrb[0].mxu0 %v734
    %v1567 = vpop.f32.mrb[0].mxu0
    %v1568 = vadd.f32 %v1407, %v1567
    %v1569 = vpop.f32.mrb[0].mxu0
    %v1570 = vpop.f32.mrb[0].mxu0
    %v1571 = vadd.f32 %v1410, %v1570
    %v1572 = vpop.f32.mrb[0].mxu0
    %1573 = vmatprep.mubr.bf16.mxu0 %v743
    %1574 = vmatmul.mubr.bf16.gmra.mrb[0].mxu0 %v742
    %v1575 = vpop.f32.mrb[0].mxu0
    %v1576 = vadd.f32 %v1415, %v1575
    %v1577 = vpop.f32.mrb[0].mxu0
    %v1578 = vpop.f32.mrb[0].mxu0
    %v1579 = vadd.f32 %v1418, %v1578
    %v1580 = vpop.f32.mrb[0].mxu0
    %1581 = vmatprep.mubr.bf16.mxu0 %v751
    %1582 = vmatmul.mubr.bf16.gmra.mrb[0].mxu0 %v750
    %v1583 = vpop.f32.mrb[0].mxu0
    %v1584 = vadd.f32 %v1423, %v1583
    %v1585 = vpop.f32.mrb[0].mxu0
    %v1586 = vpop.f32.mrb[0].mxu0
    %v1587 = vadd.f32 %v1426, %v1586
    %v1588 = vpop.f32.mrb[0].mxu0
    %1589 = vmatprep.mubr.bf16.mxu0 %v759
    %1590 = vmatmul.mubr.bf16.gmra.mrb[0].mxu0 %v758
    %v1591 = vpop.f32.mrb[0].mxu0
    %v1592 = vadd.f32 %v1431, %v1591
    %v1593 = vpop.f32.mrb[0].mxu0
    %v1594 = vpop.f32.mrb[0].mxu0
    %v1595 = vadd.f32 %v1434, %v1594
    %v1596 = vpop.f32.mrb[0].mxu0
    %1597 = vmatprep.mubr.bf16.mxu0 %v767
    %1598 = vmatmul.mubr.bf16.gmra.mrb[0].mxu0 %v766
    %v1599 = vpop.f32.mrb[0].mxu0
    %v1600 = vadd.f32 %v1439, %v1599
    %v1601 = vpop.f32.mrb[0].mxu0
    %v1602 = vpop.f32.mrb[0].mxu0
    %v1603 = vadd.f32 %v1442, %v1602
    %v1604 = vpop.f32.mrb[0].mxu0
    %1605 = vmatprep.mubr.bf16.mxu0 %v775
    %1606 = vmatmul.mubr.bf16.gmra.mrb[0].mxu0 %v774
    %v1607 = vpop.f32.mrb[0].mxu0
    %v1608 = vadd.f32 %v1447, %v1607
    %v1609 = vpop.f32.mrb[0].mxu0
    %v1610 = vpop.f32.mrb[0].mxu0
    %v1611 = vadd.f32 %v1450, %v1610
    %v1612 = vpop.f32.mrb[0].mxu0
    %1613 = vmatprep.mubr.bf16.mxu0 %v783
    %1614 = vmatmul.mubr.bf16.gmra.mrb[0].mxu0 %v782
    %v1615 = vpop.f32.mrb[0].mxu0
    %v1616 = vadd.f32 %v1455, %v1615
    %v1617 = vpop.f32.mrb[0].mxu0
    %v1618 = vpop.f32.mrb[0].mxu0
    %v1619 = vadd.f32 %v1458, %v1618
    %v1620 = vpop.f32.mrb[0].mxu0
    %1621 = vmatprep.mubr.bf16.mxu0 %v791
    %1622 = vmatmul.mubr.bf16.gmra.mrb[0].mxu0 %v790
    %v1623 = vpop.f32.mrb[0].mxu0
    %v1624 = vadd.f32 %v1463, %v1623
    %v1625 = vpop.f32.mrb[0].mxu0
    %v1626 = vpop.f32.mrb[0].mxu0
    %v1627 = vadd.f32 %v1466, %v1626
    %v1628 = vpop.f32.mrb[0].mxu0
    %1629 = vmatprep.mubr.bf16.mxu0 %v799
    %1630 = vmatmul.mubr.bf16.gmra.mrb[0].mxu0 %v798
    %v1631 = vpop.f32.mrb[0].mxu0
    %v1632 = vadd.f32 %v1471, %v1631
    %v1633 = vpop.f32.mrb[0].mxu0
    %v1634 = vpop.f32.mrb[0].mxu0
    %v1635 = vadd.f32 %v1474, %v1634
    %v1636 = vpop.f32.mrb[0].mxu0
    %1637 = vmatprep.mubr.bf16.mxu0 %v807
    %1638 = vmatmul.mubr.bf16.gmra.mrb[0].mxu0 %v806
    %v1639 = vpop.f32.mrb[0].mxu0
    %v1640 = vadd.f32 %v1479, %v1639
    %v1641 = vpop.f32.mrb[0].mxu0
    %v1642 = vpop.f32.mrb[0].mxu0
    %v1643 = vadd.f32 %v1482, %v1642
    %v1644 = vpop.f32.mrb[0].mxu0
    %1645 = vmatprep.mubr.bf16.mxu0 %v815
    %1646 = vmatmul.mubr.bf16.gmra.mrb[0].mxu0 %v814
    %v1647 = vpop.f32.mrb[0].mxu0
    %v1648 = vadd.f32 %v1487, %v1647
    %v1649 = vpop.f32.mrb[0].mxu0
    %v1650 = vpop.f32.mrb[0].mxu0
    %v1651 = vadd.f32 %v1490, %v1650
    %v1652 = vpop.f32.mrb[0].mxu0
    %1653 = vmatprep.mubr.bf16.mxu0 %v823
    %1654 = vmatmul.mubr.bf16.gmra.mrb[0].mxu0 %v822
    %v1655 = vpop.f32.mrb[0].mxu0
    %v1656 = vadd.f32 %v1495, %v1655
    %v1657 = vpop.f32.mrb[0].mxu0
    %v1658 = vpop.f32.mrb[0].mxu0
    %v1659 = vadd.f32 %v1498, %v1658
    %v1660 = vpop.f32.mrb[0].mxu0
    %1661 = vmatprep.mubr.bf16.mxu0 %v831
    %1662 = vmatmul.mubr.bf16.gmra.mrb[0].mxu0 %v830
    %v1663 = vpop.f32.mrb[0].mxu0
    %v1664 = vadd.f32 %v1503, %v1663
    %v1665 = vpop.f32.mrb[0].mxu0
    %v1666 = vpop.f32.mrb[0].mxu0
    %v1667 = vadd.f32 %v1506, %v1666
    %v1668 = vpop.f32.mrb[0].mxu0
    %1669 = vmatprep.mubr.bf16.mxu0 %v839
    %1670 = vmatmul.mubr.bf16.gmra.mrb[0].mxu0 %v838
    %v1671 = vpop.f32.mrb[0].mxu0
    %v1672 = vadd.f32 %v1511, %v1671
    %v1673 = vpop.f32.mrb[0].mxu0
    %v1674 = vpop.f32.mrb[0].mxu0
    %v1675 = vadd.f32 %v1514, %v1674
    %v1676 = vpop.f32.mrb[0].mxu0
    %1677 = vmatprep.mubr.bf16.mxu0 %v847
    %1678 = vmatmul.mubr.bf16.gmra.mrb[0].mxu0 %v846
    %v1679 = vpop.f32.mrb[0].mxu0
    %v1680 = vadd.f32 %v1519, %v1679
    %v1681 = vpop.f32.mrb[0].mxu0
    %v1682 = vpop.f32.mrb[0].mxu0
    %v1683 = vadd.f32 %v1522, %v1682
    %v1684 = vpop.f32.mrb[0].mxu0
    %1685 = vmatprep.mubr.bf16.mxu0 %v855
    %1686 = vmatmul.mubr.bf16.gmra.mrb[0].mxu0 %v854
    %v1687 = vpop.f32.mrb[0].mxu0
    %v1688 = vadd.f32 %v1527, %v1687
    %v1689 = vpop.f32.mrb[0].mxu0
    %v1690 = vpop.f32.mrb[0].mxu0
    %v1691 = vadd.f32 %v1530, %v1690
    %v1692 = vpop.f32.mrb[0].mxu0
    %1693 = vdwg.mxu0
    %1694 = vmatprep.subr.bf16.mxu0 0
    %1695 = vmatpush1.bf16.msra.mxu0 %v1276
    %1696 = vmatprep.subr.bf16.mxu0 0
    %1697 = vmatpush1.bf16.msra.mxu0 %v1277
    %1698 = vmatprep.subr.bf16.mxu0 0
    %1699 = vmatpush1.bf16.msra.mxu0 %v1278
    %1700 = vmatprep.subr.bf16.mxu0 0
    %1701 = vmatpush1.bf16.msra.mxu0 %v1279
    %1702 = vmatprep.subr.bf16.mxu0 0
    %1703 = vmatpush1.bf16.msra.mxu0 %v1280
    %1704 = vmatprep.subr.bf16.mxu0 0
    %1705 = vmatpush1.bf16.msra.mxu0 %v1281
    %1706 = vmatprep.subr.bf16.mxu0 0
    %1707 = vmatpush1.bf16.msra.mxu0 %v1282
    %1708 = vmatprep.subr.bf16.mxu0 0
    %1709 = vmatpush1.bf16.msra.mxu0 %v1283
    %1710 = vmatprep.subr.bf16.mxu0 0
    %1711 = vmatpush1.bf16.msra.mxu0 %v1284
    %1712 = vmatprep.subr.bf16.mxu0 0
    %1713 = vmatpush1.bf16.msra.mxu0 %v1285
    %1714 = vmatprep.subr.bf16.mxu0 0
    %1715 = vmatpush1.bf16.msra.mxu0 %v1286
    %1716 = vmatprep.subr.bf16.mxu0 0
    %1717 = vmatpush1.bf16.msra.mxu0 %v1287
    %1718 = vmatprep.subr.bf16.mxu0 0
    %1719 = vmatpush1.bf16.msra.mxu0 %v1288
    %1720 = vmatprep.subr.bf16.mxu0 0
    %1721 = vmatpush1.bf16.msra.mxu0 %v1289
    %1722 = vmatprep.subr.bf16.mxu0 0
    %1723 = vmatpush1.bf16.msra.mxu0 %v1290
    %1724 = vmatprep.subr.bf16.mxu0 0
    %1725 = vmatpush1.bf16.msra.mxu0 %v1291
    %1726 = vmatprep.mubr.bf16.mxu0 %v737
    %1727 = vmatmul.mubr.bf16.gmra.mrb[0].mxu0 %v736
    %v1728 = vpop.f32.mrb[0].mxu0
    %v1729 = vadd.f32 %v1568, %v1728
    %v1730 = vpop.f32.mrb[0].mxu0
    %v1731 = vpop.f32.mrb[0].mxu0
    %v1732 = vadd.f32 %v1571, %v1731
    %v1733 = vpop.f32.mrb[0].mxu0
    %1734 = vmatprep.mubr.bf16.mxu0 %v745
    %1735 = vmatmul.mubr.bf16.gmra.mrb[0].mxu0 %v744
    %v1736 = vpop.f32.mrb[0].mxu0
    %v1737 = vadd.f32 %v1576, %v1736
    %v1738 = vpop.f32.mrb[0].mxu0
    %v1739 = vpop.f32.mrb[0].mxu0
    %v1740 = vadd.f32 %v1579, %v1739
    %v1741 = vpop.f32.mrb[0].mxu0
    %1742 = vmatprep.mubr.bf16.mxu0 %v753
    %1743 = vmatmul.mubr.bf16.gmra.mrb[0].mxu0 %v752
    %v1744 = vpop.f32.mrb[0].mxu0
    %v1745 = vadd.f32 %v1584, %v1744
    %v1746 = vpop.f32.mrb[0].mxu0
    %v1747 = vpop.f32.mrb[0].mxu0
    %v1748 = vadd.f32 %v1587, %v1747
    %v1749 = vpop.f32.mrb[0].mxu0
    %1750 = vmatprep.mubr.bf16.mxu0 %v761
    %1751 = vmatmul.mubr.bf16.gmra.mrb[0].mxu0 %v760
    %v1752 = vpop.f32.mrb[0].mxu0
    %v1753 = vadd.f32 %v1592, %v1752
    %v1754 = vpop.f32.mrb[0].mxu0
    %v1755 = vpop.f32.mrb[0].mxu0
    %v1756 = vadd.f32 %v1595, %v1755
    %v1757 = vpop.f32.mrb[0].mxu0
    %1758 = vmatprep.mubr.bf16.mxu0 %v769
    %1759 = vmatmul.mubr.bf16.gmra.mrb[0].mxu0 %v768
    %v1760 = vpop.f32.mrb[0].mxu0
    %v1761 = vadd.f32 %v1600, %v1760
    %v1762 = vpop.f32.mrb[0].mxu0
    %v1763 = vpop.f32.mrb[0].mxu0
    %v1764 = vadd.f32 %v1603, %v1763
    %v1765 = vpop.f32.mrb[0].mxu0
    %1766 = vmatprep.mubr.bf16.mxu0 %v777
    %1767 = vmatmul.mubr.bf16.gmra.mrb[0].mxu0 %v776
    %v1768 = vpop.f32.mrb[0].mxu0
    %v1769 = vadd.f32 %v1608, %v1768
    %v1770 = vpop.f32.mrb[0].mxu0
    %v1771 = vpop.f32.mrb[0].mxu0
    %v1772 = vadd.f32 %v1611, %v1771
    %v1773 = vpop.f32.mrb[0].mxu0
    %1774 = vmatprep.mubr.bf16.mxu0 %v785
    %1775 = vmatmul.mubr.bf16.gmra.mrb[0].mxu0 %v784
    %v1776 = vpop.f32.mrb[0].mxu0
    %v1777 = vadd.f32 %v1616, %v1776
    %v1778 = vpop.f32.mrb[0].mxu0
    %v1779 = vpop.f32.mrb[0].mxu0
    %v1780 = vadd.f32 %v1619, %v1779
    %v1781 = vpop.f32.mrb[0].mxu0
    %1782 = vmatprep.mubr.bf16.mxu0 %v793
    %1783 = vmatmul.mubr.bf16.gmra.mrb[0].mxu0 %v792
    %v1784 = vpop.f32.mrb[0].mxu0
    %v1785 = vadd.f32 %v1624, %v1784
    %v1786 = vpop.f32.mrb[0].mxu0
    %v1787 = vpop.f32.mrb[0].mxu0
    %v1788 = vadd.f32 %v1627, %v1787
    %v1789 = vpop.f32.mrb[0].mxu0
    %1790 = vmatprep.mubr.bf16.mxu0 %v801
    %1791 = vmatmul.mubr.bf16.gmra.mrb[0].mxu0 %v800
    %v1792 = vpop.f32.mrb[0].mxu0
    %v1793 = vadd.f32 %v1632, %v1792
    %v1794 = vpop.f32.mrb[0].mxu0
    %v1795 = vpop.f32.mrb[0].mxu0
    %v1796 = vadd.f32 %v1635, %v1795
    %v1797 = vpop.f32.mrb[0].mxu0
    %1798 = vmatprep.mubr.bf16.mxu0 %v809
    %1799 = vmatmul.mubr.bf16.gmra.mrb[0].mxu0 %v808
    %v1800 = vpop.f32.mrb[0].mxu0
    %v1801 = vadd.f32 %v1640, %v1800
    %v1802 = vpop.f32.mrb[0].mxu0
    %v1803 = vpop.f32.mrb[0].mxu0
    %v1804 = vadd.f32 %v1643, %v1803
    %v1805 = vpop.f32.mrb[0].mxu0
    %1806 = vmatprep.mubr.bf16.mxu0 %v817
    %1807 = vmatmul.mubr.bf16.gmra.mrb[0].mxu0 %v816
    %v1808 = vpop.f32.mrb[0].mxu0
    %v1809 = vadd.f32 %v1648, %v1808
    %v1810 = vpop.f32.mrb[0].mxu0
    %v1811 = vpop.f32.mrb[0].mxu0
    %v1812 = vadd.f32 %v1651, %v1811
    %v1813 = vpop.f32.mrb[0].mxu0
    %1814 = vmatprep.mubr.bf16.mxu0 %v825
    %1815 = vmatmul.mubr.bf16.gmra.mrb[0].mxu0 %v824
    %v1816 = vpop.f32.mrb[0].mxu0
    %v1817 = vadd.f32 %v1656, %v1816
    %v1818 = vpop.f32.mrb[0].mxu0
    %v1819 = vpop.f32.mrb[0].mxu0
    %v1820 = vadd.f32 %v1659, %v1819
    %v1821 = vpop.f32.mrb[0].mxu0
    %1822 = vmatprep.mubr.bf16.mxu0 %v833
    %1823 = vmatmul.mubr.bf16.gmra.mrb[0].mxu0 %v832
    %v1824 = vpop.f32.mrb[0].mxu0
    %v1825 = vadd.f32 %v1664, %v1824
    %v1826 = vpop.f32.mrb[0].mxu0
    %v1827 = vpop.f32.mrb[0].mxu0
    %v1828 = vadd.f32 %v1667, %v1827
    %v1829 = vpop.f32.mrb[0].mxu0
    %1830 = vmatprep.mubr.bf16.mxu0 %v841
    %1831 = vmatmul.mubr.bf16.gmra.mrb[0].mxu0 %v840
    %v1832 = vpop.f32.mrb[0].mxu0
    %v1833 = vadd.f32 %v1672, %v1832
    %v1834 = vpop.f32.mrb[0].mxu0
    %v1835 = vpop.f32.mrb[0].mxu0
    %v1836 = vadd.f32 %v1675, %v1835
    %v1837 = vpop.f32.mrb[0].mxu0
    %1838 = vmatprep.mubr.bf16.mxu0 %v849
    %1839 = vmatmul.mubr.bf16.gmra.mrb[0].mxu0 %v848
    %v1840 = vpop.f32.mrb[0].mxu0
    %v1841 = vadd.f32 %v1680, %v1840
    %v1842 = vpop.f32.mrb[0].mxu0
    %v1843 = vpop.f32.mrb[0].mxu0
    %v1844 = vadd.f32 %v1683, %v1843
    %v1845 = vpop.f32.mrb[0].mxu0
    %1846 = vmatprep.mubr.bf16.mxu0 %v857
    %1847 = vmatmul.mubr.bf16.gmra.mrb[0].mxu0 %v856
    %v1848 = vpop.f32.mrb[0].mxu0
    %v1849 = vadd.f32 %v1688, %v1848
    %v1850 = vpop.f32.mrb[0].mxu0
    %v1851 = vpop.f32.mrb[0].mxu0
    %v1852 = vadd.f32 %v1691, %v1851
    %v1853 = vpop.f32.mrb[0].mxu0
    %1854 = vdwg.mxu0
    %1855 = vmatprep.subr.bf16.mxu0 0
    %1856 = vmatpush1.bf16.msra.mxu0 %v1292
    %1857 = vmatprep.subr.bf16.mxu0 0
    %1858 = vmatpush1.bf16.msra.mxu0 %v1293
    %1859 = vmatprep.subr.bf16.mxu0 0
    %1860 = vmatpush1.bf16.msra.mxu0 %v1294
    %1861 = vmatprep.subr.bf16.mxu0 0
    %1862 = vmatpush1.bf16.msra.mxu0 %v1295
    %1863 = vmatprep.subr.bf16.mxu0 0
    %1864 = vmatpush1.bf16.msra.mxu0 %v1296
    %1865 = vmatprep.subr.bf16.mxu0 0
    %1866 = vmatpush1.bf16.msra.mxu0 %v1297
    %1867 = vmatprep.subr.bf16.mxu0 0
    %1868 = vmatpush1.bf16.msra.mxu0 %v1298
    %1869 = vmatprep.subr.bf16.mxu0 0
    %1870 = vmatpush1.bf16.msra.mxu0 %v1299
    %1871 = vmatprep.subr.bf16.mxu0 0
    %1872 = vmatpush1.bf16.msra.mxu0 %v1300
    %1873 = vmatprep.subr.bf16.mxu0 0
    %1874 = vmatpush1.bf16.msra.mxu0 %v1301
    %1875 = vmatprep.subr.bf16.mxu0 0
    %1876 = vmatpush1.bf16.msra.mxu0 %v1302
    %1877 = vmatprep.subr.bf16.mxu0 0
    %1878 = vmatpush1.bf16.msra.mxu0 %v1303
    %1879 = vmatprep.subr.bf16.mxu0 0
    %1880 = vmatpush1.bf16.msra.mxu0 %v1304
    %1881 = vmatprep.subr.bf16.mxu0 0
    %1882 = vmatpush1.bf16.msra.mxu0 %v1305
    %1883 = vmatprep.subr.bf16.mxu0 0
    %1884 = vmatpush1.bf16.msra.mxu0 %v1306
    %1885 = vmatprep.subr.bf16.mxu0 0
    %1886 = vmatpush1.bf16.msra.mxu0 %v1307
    %1887 = vmatprep.mubr.bf16.mxu0 %v739
    %1888 = vmatmul.mubr.bf16.gmra.mrb[0].mxu0 %v738
    %v1889 = vpop.f32.mrb[0].mxu0
    %v1890 = vadd.f32 %v1729, %v1889
    %v1891 = vpop.f32.mrb[0].mxu0
    %v1892 = vpop.f32.mrb[0].mxu0
    %v1893 = vadd.f32 %v1732, %v1892
    %v1894 = vpop.f32.mrb[0].mxu0
    %1895 = vmatprep.mubr.bf16.mxu0 %v747
    %1896 = vmatmul.mubr.bf16.gmra.mrb[0].mxu0 %v746
    %v1897 = vpop.f32.mrb[0].mxu0
    %v1898 = vadd.f32 %v1737, %v1897
    %v1899 = vpop.f32.mrb[0].mxu0
    %v1900 = vpop.f32.mrb[0].mxu0
    %v1901 = vadd.f32 %v1740, %v1900
    %v1902 = vpop.f32.mrb[0].mxu0
    %1903 = vmatprep.mubr.bf16.mxu0 %v755
    %1904 = vmatmul.mubr.bf16.gmra.mrb[0].mxu0 %v754
    %v1905 = vpop.f32.mrb[0].mxu0
    %v1906 = vadd.f32 %v1745, %v1905
    %v1907 = vpop.f32.mrb[0].mxu0
    %v1908 = vpop.f32.mrb[0].mxu0
    %v1909 = vadd.f32 %v1748, %v1908
    %v1910 = vpop.f32.mrb[0].mxu0
    %1911 = vmatprep.mubr.bf16.mxu0 %v763
    %1912 = vmatmul.mubr.bf16.gmra.mrb[0].mxu0 %v762
    %v1913 = vpop.f32.mrb[0].mxu0
    %v1914 = vadd.f32 %v1753, %v1913
    %v1915 = vpop.f32.mrb[0].mxu0
    %v1916 = vpop.f32.mrb[0].mxu0
    %v1917 = vadd.f32 %v1756, %v1916
    %v1918 = vpop.f32.mrb[0].mxu0
    %1919 = vmatprep.mubr.bf16.mxu0 %v771
    %1920 = vmatmul.mubr.bf16.gmra.mrb[0].mxu0 %v770
    %v1921 = vpop.f32.mrb[0].mxu0
    %v1922 = vadd.f32 %v1761, %v1921
    %v1923 = vpop.f32.mrb[0].mxu0
    %v1924 = vpop.f32.mrb[0].mxu0
    %v1925 = vadd.f32 %v1764, %v1924
    %v1926 = vpop.f32.mrb[0].mxu0
    %1927 = vmatprep.mubr.bf16.mxu0 %v779
    %1928 = vmatmul.mubr.bf16.gmra.mrb[0].mxu0 %v778
    %v1929 = vpop.f32.mrb[0].mxu0
    %v1930 = vadd.f32 %v1769, %v1929
    %v1931 = vpop.f32.mrb[0].mxu0
    %v1932 = vpop.f32.mrb[0].mxu0
    %v1933 = vadd.f32 %v1772, %v1932
    %v1934 = vpop.f32.mrb[0].mxu0
    %1935 = vmatprep.mubr.bf16.mxu0 %v787
    %1936 = vmatmul.mubr.bf16.gmra.mrb[0].mxu0 %v786
    %v1937 = vpop.f32.mrb[0].mxu0
    %v1938 = vadd.f32 %v1777, %v1937
    %v1939 = vpop.f32.mrb[0].mxu0
    %v1940 = vpop.f32.mrb[0].mxu0
    %v1941 = vadd.f32 %v1780, %v1940
    %v1942 = vpop.f32.mrb[0].mxu0
    %1943 = vmatprep.mubr.bf16.mxu0 %v795
    %1944 = vmatmul.mubr.bf16.gmra.mrb[0].mxu0 %v794
    %v1945 = vpop.f32.mrb[0].mxu0
    %v1946 = vadd.f32 %v1785, %v1945
    %v1947 = vpop.f32.mrb[0].mxu0
    %v1948 = vpop.f32.mrb[0].mxu0
    %v1949 = vadd.f32 %v1788, %v1948
    %v1950 = vpop.f32.mrb[0].mxu0
    %1951 = vmatprep.mubr.bf16.mxu0 %v803
    %1952 = vmatmul.mubr.bf16.gmra.mrb[0].mxu0 %v802
    %v1953 = vpop.f32.mrb[0].mxu0
    %v1954 = vadd.f32 %v1793, %v1953
    %v1955 = vpop.f32.mrb[0].mxu0
    %v1956 = vpop.f32.mrb[0].mxu0
    %v1957 = vadd.f32 %v1796, %v1956
    %v1958 = vpop.f32.mrb[0].mxu0
    %1959 = vmatprep.mubr.bf16.mxu0 %v811
    %1960 = vmatmul.mubr.bf16.gmra.mrb[0].mxu0 %v810
    %v1961 = vpop.f32.mrb[0].mxu0
    %v1962 = vadd.f32 %v1801, %v1961
    %v1963 = vpop.f32.mrb[0].mxu0
    %v1964 = vpop.f32.mrb[0].mxu0
    %v1965 = vadd.f32 %v1804, %v1964
    %v1966 = vpop.f32.mrb[0].mxu0
    %1967 = vmatprep.mubr.bf16.mxu0 %v819
    %1968 = vmatmul.mubr.bf16.gmra.mrb[0].mxu0 %v818
    %v1969 = vpop.f32.mrb[0].mxu0
    %v1970 = vadd.f32 %v1809, %v1969
    %v1971 = vpop.f32.mrb[0].mxu0
    %v1972 = vpop.f32.mrb[0].mxu0
    %v1973 = vadd.f32 %v1812, %v1972
    %v1974 = vpop.f32.mrb[0].mxu0
    %1975 = vmatprep.mubr.bf16.mxu0 %v827
    %1976 = vmatmul.mubr.bf16.gmra.mrb[0].mxu0 %v826
    %v1977 = vpop.f32.mrb[0].mxu0
    %v1978 = vadd.f32 %v1817, %v1977
    %v1979 = vpop.f32.mrb[0].mxu0
    %v1980 = vpop.f32.mrb[0].mxu0
    %v1981 = vadd.f32 %v1820, %v1980
    %v1982 = vpop.f32.mrb[0].mxu0
    %1983 = vmatprep.mubr.bf16.mxu0 %v835
    %1984 = vmatmul.mubr.bf16.gmra.mrb[0].mxu0 %v834
    %v1985 = vpop.f32.mrb[0].mxu0
    %v1986 = vadd.f32 %v1825, %v1985
    %v1987 = vpop.f32.mrb[0].mxu0
    %v1988 = vpop.f32.mrb[0].mxu0
    %v1989 = vadd.f32 %v1828, %v1988
    %v1990 = vpop.f32.mrb[0].mxu0
    %1991 = vmatprep.mubr.bf16.mxu0 %v843
    %1992 = vmatmul.mubr.bf16.gmra.mrb[0].mxu0 %v842
    %v1993 = vpop.f32.mrb[0].mxu0
    %v1994 = vadd.f32 %v1833, %v1993
    %v1995 = vpop.f32.mrb[0].mxu0
    %v1996 = vpop.f32.mrb[0].mxu0
    %v1997 = vadd.f32 %v1836, %v1996
    %v1998 = vpop.f32.mrb[0].mxu0
    %1999 = vmatprep.mubr.bf16.mxu0 %v851
    %2000 = vmatmul.mubr.bf16.gmra.mrb[0].mxu0 %v850
    %v2001 = vpop.f32.mrb[0].mxu0
    %v2002 = vadd.f32 %v1841, %v2001
    %v2003 = vpop.f32.mrb[0].mxu0
    %v2004 = vpop.f32.mrb[0].mxu0
    %v2005 = vadd.f32 %v1844, %v2004
    %v2006 = vpop.f32.mrb[0].mxu0
    %2007 = vmatprep.mubr.bf16.mxu0 %v859
    %2008 = vmatmul.mubr.bf16.gmra.mrb[0].mxu0 %v858
    %v2009 = vpop.f32.mrb[0].mxu0
    %v2010 = vadd.f32 %v1849, %v2009
    %v2011 = vpop.f32.mrb[0].mxu0
    %v2012 = vpop.f32.mrb[0].mxu0
    %v2013 = vadd.f32 %v1852, %v2012
    %v2014 = vpop.f32.mrb[0].mxu0
    %2015 = vdwg.mxu0
    %v2016 = vld [vmem:[%s4] sm:$0xff]
    %v2017 = vld [vmem:[%s4 + $0x8] sm:$0xff]
    %v2018 = vld [vmem:[%s4 + $0x10] sm:$0xff]
    %v2019 = vld [vmem:[%s4 + $0x18] sm:$0xff]
    %v2020 = vld [vmem:[%s4 + $0x20] sm:$0xff]
    %v2021 = vld [vmem:[%s4 + $0x28] sm:$0xff]
    %v2022 = vld [vmem:[%s4 + $0x30] sm:$0xff]
    %v2023 = vld [vmem:[%s4 + $0x38] sm:$0xff]
    %v2024 = vld [vmem:[%s4 + $0x40] sm:$0xff]
    %v2025 = vld [vmem:[%s4 + $0x48] sm:$0xff]
    %v2026 = vld [vmem:[%s4 + $0x50] sm:$0xff]
    %v2027 = vld [vmem:[%s4 + $0x58] sm:$0xff]
    %v2028 = vld [vmem:[%s4 + $0x60] sm:$0xff]
    %v2029 = vld [vmem:[%s4 + $0x68] sm:$0xff]
    %v2030 = vld [vmem:[%s4 + $0x70] sm:$0xff]
    %v2031 = vld [vmem:[%s4 + $0x78] sm:$0xff]
    %v2032 = vld [vmem:[%s5] sm:$0xff]
    %v2033 = vld [vmem:[%s5 + $0x8] sm:$0xff]
    %v2034 = vld [vmem:[%s5 + $0x10] sm:$0xff]
    %v2035 = vld [vmem:[%s5 + $0x18] sm:$0xff]
    %v2036 = vld [vmem:[%s5 + $0x20] sm:$0xff]
    %v2037 = vld [vmem:[%s5 + $0x28] sm:$0xff]
    %v2038 = vld [vmem:[%s5 + $0x30] sm:$0xff]
    %v2039 = vld [vmem:[%s5 + $0x38] sm:$0xff]
    %v2040 = vld [vmem:[%s5 + $0x40] sm:$0xff]
    %v2041 = vld [vmem:[%s5 + $0x48] sm:$0xff]
    %v2042 = vld [vmem:[%s5 + $0x50] sm:$0xff]
    %v2043 = vld [vmem:[%s5 + $0x58] sm:$0xff]
    %v2044 = vld [vmem:[%s5 + $0x60] sm:$0xff]
    %v2045 = vld [vmem:[%s5 + $0x68] sm:$0xff]
    %v2046 = vld [vmem:[%s5 + $0x70] sm:$0xff]
    %v2047 = vld [vmem:[%s5 + $0x78] sm:$0xff]
    %2048 = vmatprep.subr.mxu0 0.0
    %2049 = vmatpush1.msra.mxu0 %v2032
    %2050 = vmatprep.subr.mxu0 0.0
    %2051 = vmatpush1.msra.mxu0 %v2033
    %2052 = vmatprep.subr.mxu0 0.0
    %2053 = vmatpush1.msra.mxu0 %v2034
    %2054 = vmatprep.subr.mxu0 0.0
    %2055 = vmatpush1.msra.mxu0 %v2035
    %2056 = vmatprep.subr.mxu0 0.0
    %2057 = vmatpush1.msra.mxu0 %v2036
    %2058 = vmatprep.subr.mxu0 0.0
    %2059 = vmatpush1.msra.mxu0 %v2037
    %2060 = vmatprep.subr.mxu0 0.0
    %2061 = vmatpush1.msra.mxu0 %v2038
    %2062 = vmatprep.subr.mxu0 0.0
    %2063 = vmatpush1.msra.mxu0 %v2039
    %2064 = vmatprep.subr.mxu0 0.0
    %2065 = vmatpush1.msra.mxu0 %v2040
    %2066 = vmatprep.subr.mxu0 0.0
    %2067 = vmatpush1.msra.mxu0 %v2041
    %2068 = vmatprep.subr.mxu0 0.0
    %2069 = vmatpush1.msra.mxu0 %v2042
    %2070 = vmatprep.subr.mxu0 0.0
    %2071 = vmatpush1.msra.mxu0 %v2043
    %2072 = vmatprep.subr.mxu0 0.0
    %2073 = vmatpush1.msra.mxu0 %v2044
    %2074 = vmatprep.subr.mxu0 0.0
    %2075 = vmatpush1.msra.mxu0 %v2045
    %2076 = vmatprep.subr.mxu0 0.0
    %2077 = vmatpush1.msra.mxu0 %v2046
    %2078 = vmatprep.subr.mxu0 0.0
    %2079 = vmatpush1.msra.mxu0 %v2047
    %2080 = vmatprep.subr.mxu0 0.0
    %2081 = vmatpush1.msra.mxu0 0.0
    %2082 = vmatprep.subr.mxu0 0.0
    %2083 = vmatpush1.msra.mxu0 0.0
    %2084 = vmatprep.subr.mxu0 0.0
    %2085 = vmatpush1.msra.mxu0 0.0
    %2086 = vmatprep.subr.mxu0 0.0
    %2087 = vmatpush1.msra.mxu0 0.0
    %2088 = vmatprep.subr.mxu0 0.0
    %2089 = vmatpush1.msra.mxu0 0.0
    %2090 = vmatprep.subr.mxu0 0.0
    %2091 = vmatpush1.msra.mxu0 0.0
    %2092 = vmatprep.subr.mxu0 0.0
    %2093 = vmatpush1.msra.mxu0 0.0
    %2094 = vmatprep.subr.mxu0 0.0
    %2095 = vmatpush1.msra.mxu0 0.0
    %2096 = vmatprep.subr.mxu0 0.0
    %2097 = vmatpush1.msra.mxu0 0.0
    %2098 = vmatprep.subr.mxu0 0.0
    %2099 = vmatpush1.msra.mxu0 0.0
    %2100 = vmatprep.subr.mxu0 0.0
    %2101 = vmatpush1.msra.mxu0 0.0
    %2102 = vmatprep.subr.mxu0 0.0
    %2103 = vmatpush1.msra.mxu0 0.0
    %2104 = vmatprep.subr.mxu0 0.0
    %2105 = vmatpush1.msra.mxu0 0.0
    %2106 = vmatprep.subr.mxu0 0.0
    %2107 = vmatpush1.msra.mxu0 0.0
    %2108 = vmatprep.subr.mxu0 0.0
    %2109 = vmatpush1.msra.mxu0 0.0
    %2110 = vmatprep.subr.mxu0 0.0
    %2111 = vmatpush1.msra.mxu0 0.0
    %2112 = vmatprep.mubr.f32.mxu0 0.0
    %2113 = vmatmul.mubr.f32.gmra.mrb[0].mxu0 %v1890
    %v2114 = vpop.f32.mrb[0].mxu0
    %v2115 = vadd.f32 0.0, %v2114
    %v2116 = vpop.f32.mrb[0].mxu0
    %2117 = vmatprep.mubr.f32.mxu0 0.0
    %2118 = vmatmul.mubr.f32.gmra.mrb[0].mxu0 %v1893
    %v2119 = vpop.f32.mrb[0].mxu0
    %v2120 = vadd.f32 0.0, %v2119
    %v2121 = vpop.f32.mrb[0].mxu0
    %2122 = vmatprep.mubr.f32.mxu0 0.0
    %2123 = vmatmul.mubr.f32.gmra.mrb[0].mxu0 %v1898
    %v2124 = vpop.f32.mrb[0].mxu0
    %v2125 = vadd.f32 0.0, %v2124
    %v2126 = vpop.f32.mrb[0].mxu0
    %2127 = vmatprep.mubr.f32.mxu0 0.0
    %2128 = vmatmul.mubr.f32.gmra.mrb[0].mxu0 %v1901
    %v2129 = vpop.f32.mrb[0].mxu0
    %v2130 = vadd.f32 0.0, %v2129
    %v2131 = vpop.f32.mrb[0].mxu0
    %2132 = vmatprep.mubr.f32.mxu0 0.0
    %2133 = vmatmul.mubr.f32.gmra.mrb[0].mxu0 %v1906
    %v2134 = vpop.f32.mrb[0].mxu0
    %v2135 = vadd.f32 0.0, %v2134
    %v2136 = vpop.f32.mrb[0].mxu0
    %2137 = vmatprep.mubr.f32.mxu0 0.0
    %2138 = vmatmul.mubr.f32.gmra.mrb[0].mxu0 %v1909
    %v2139 = vpop.f32.mrb[0].mxu0
    %v2140 = vadd.f32 0.0, %v2139
    %v2141 = vpop.f32.mrb[0].mxu0
    %2142 = vmatprep.mubr.f32.mxu0 0.0
    %2143 = vmatmul.mubr.f32.gmra.mrb[0].mxu0 %v1914
    %v2144 = vpop.f32.mrb[0].mxu0
    %v2145 = vadd.f32 0.0, %v2144
    %v2146 = vpop.f32.mrb[0].mxu0
    %2147 = vmatprep.mubr.f32.mxu0 0.0
    %2148 = vmatmul.mubr.f32.gmra.mrb[0].mxu0 %v1917
    %v2149 = vpop.f32.mrb[0].mxu0
    %v2150 = vadd.f32 0.0, %v2149
    %v2151 = vpop.f32.mrb[0].mxu0
    %2152 = vmatprep.mubr.f32.mxu0 0.0
    %2153 = vmatmul.mubr.f32.gmra.mrb[0].mxu0 %v1922
    %v2154 = vpop.f32.mrb[0].mxu0
    %v2155 = vadd.f32 0.0, %v2154
    %v2156 = vpop.f32.mrb[0].mxu0
    %2157 = vmatprep.mubr.f32.mxu0 0.0
    %2158 = vmatmul.mubr.f32.gmra.mrb[0].mxu0 %v1925
    %v2159 = vpop.f32.mrb[0].mxu0
    %v2160 = vadd.f32 0.0, %v2159
    %v2161 = vpop.f32.mrb[0].mxu0
    %2162 = vmatprep.mubr.f32.mxu0 0.0
    %2163 = vmatmul.mubr.f32.gmra.mrb[0].mxu0 %v1930
    %v2164 = vpop.f32.mrb[0].mxu0
    %v2165 = vadd.f32 0.0, %v2164
    %v2166 = vpop.f32.mrb[0].mxu0
    %2167 = vmatprep.mubr.f32.mxu0 0.0
    %2168 = vmatmul.mubr.f32.gmra.mrb[0].mxu0 %v1933
    %v2169 = vpop.f32.mrb[0].mxu0
    %v2170 = vadd.f32 0.0, %v2169
    %v2171 = vpop.f32.mrb[0].mxu0
    %2172 = vmatprep.mubr.f32.mxu0 0.0
    %2173 = vmatmul.mubr.f32.gmra.mrb[0].mxu0 %v1938
    %v2174 = vpop.f32.mrb[0].mxu0
    %v2175 = vadd.f32 0.0, %v2174
    %v2176 = vpop.f32.mrb[0].mxu0
    %2177 = vmatprep.mubr.f32.mxu0 0.0
    %2178 = vmatmul.mubr.f32.gmra.mrb[0].mxu0 %v1941
    %v2179 = vpop.f32.mrb[0].mxu0
    %v2180 = vadd.f32 0.0, %v2179
    %v2181 = vpop.f32.mrb[0].mxu0
    %2182 = vmatprep.mubr.f32.mxu0 0.0
    %2183 = vmatmul.mubr.f32.gmra.mrb[0].mxu0 %v1946
    %v2184 = vpop.f32.mrb[0].mxu0
    %v2185 = vadd.f32 0.0, %v2184
    %v2186 = vpop.f32.mrb[0].mxu0
    %2187 = vmatprep.mubr.f32.mxu0 0.0
    %2188 = vmatmul.mubr.f32.gmra.mrb[0].mxu0 %v1949
    %v2189 = vpop.f32.mrb[0].mxu0
    %v2190 = vadd.f32 0.0, %v2189
    %v2191 = vpop.f32.mrb[0].mxu0
    %2192 = vmatprep.mubr.f32.mxu0 0.0
    %2193 = vmatmul.mubr.f32.gmra.mrb[0].mxu0 %v1954
    %v2194 = vpop.f32.mrb[0].mxu0
    %v2195 = vadd.f32 0.0, %v2194
    %v2196 = vpop.f32.mrb[0].mxu0
    %2197 = vmatprep.mubr.f32.mxu0 0.0
    %2198 = vmatmul.mubr.f32.gmra.mrb[0].mxu0 %v1957
    %v2199 = vpop.f32.mrb[0].mxu0
    %v2200 = vadd.f32 0.0, %v2199
    %v2201 = vpop.f32.mrb[0].mxu0
    %2202 = vmatprep.mubr.f32.mxu0 0.0
    %2203 = vmatmul.mubr.f32.gmra.mrb[0].mxu0 %v1962
    %v2204 = vpop.f32.mrb[0].mxu0
    %v2205 = vadd.f32 0.0, %v2204
    %v2206 = vpop.f32.mrb[0].mxu0
    %2207 = vmatprep.mubr.f32.mxu0 0.0
    %2208 = vmatmul.mubr.f32.gmra.mrb[0].mxu0 %v1965
    %v2209 = vpop.f32.mrb[0].mxu0
    %v2210 = vadd.f32 0.0, %v2209
    %v2211 = vpop.f32.mrb[0].mxu0
    %2212 = vmatprep.mubr.f32.mxu0 0.0
    %2213 = vmatmul.mubr.f32.gmra.mrb[0].mxu0 %v1970
    %v2214 = vpop.f32.mrb[0].mxu0
    %v2215 = vadd.f32 0.0, %v2214
    %v2216 = vpop.f32.mrb[0].mxu0
    %2217 = vmatprep.mubr.f32.mxu0 0.0
    %2218 = vmatmul.mubr.f32.gmra.mrb[0].mxu0 %v1973
    %v2219 = vpop.f32.mrb[0].mxu0
    %v2220 = vadd.f32 0.0, %v2219
    %v2221 = vpop.f32.mrb[0].mxu0
    %2222 = vmatprep.mubr.f32.mxu0 0.0
    %2223 = vmatmul.mubr.f32.gmra.mrb[0].mxu0 %v1978
    %v2224 = vpop.f32.mrb[0].mxu0
    %v2225 = vadd.f32 0.0, %v2224
    %v2226 = vpop.f32.mrb[0].mxu0
    %2227 = vmatprep.mubr.f32.mxu0 0.0
    %2228 = vmatmul.mubr.f32.gmra.mrb[0].mxu0 %v1981
    %v2229 = vpop.f32.mrb[0].mxu0
    %v2230 = vadd.f32 0.0, %v2229
    %v2231 = vpop.f32.mrb[0].mxu0
    %2232 = vmatprep.mubr.f32.mxu0 0.0
    %2233 = vmatmul.mubr.f32.gmra.mrb[0].mxu0 %v1986
    %v2234 = vpop.f32.mrb[0].mxu0
    %v2235 = vadd.f32 0.0, %v2234
    %v2236 = vpop.f32.mrb[0].mxu0
    %2237 = vmatprep.mubr.f32.mxu0 0.0
    %2238 = vmatmul.mubr.f32.gmra.mrb[0].mxu0 %v1989
    %v2239 = vpop.f32.mrb[0].mxu0
    %v2240 = vadd.f32 0.0, %v2239
    %v2241 = vpop.f32.mrb[0].mxu0
    %2242 = vmatprep.mubr.f32.mxu0 0.0
    %2243 = vmatmul.mubr.f32.gmra.mrb[0].mxu0 %v1994
    %v2244 = vpop.f32.mrb[0].mxu0
    %v2245 = vadd.f32 0.0, %v2244
    %v2246 = vpop.f32.mrb[0].mxu0
    %2247 = vmatprep.mubr.f32.mxu0 0.0
    %2248 = vmatmul.mubr.f32.gmra.mrb[0].mxu0 %v1997
    %v2249 = vpop.f32.mrb[0].mxu0
    %v2250 = vadd.f32 0.0, %v2249
    %v2251 = vpop.f32.mrb[0].mxu0
    %2252 = vmatprep.mubr.f32.mxu0 0.0
    %2253 = vmatmul.mubr.f32.gmra.mrb[0].mxu0 %v2002
    %v2254 = vpop.f32.mrb[0].mxu0
    %v2255 = vadd.f32 0.0, %v2254
    %v2256 = vpop.f32.mrb[0].mxu0
    %2257 = vmatprep.mubr.f32.mxu0 0.0
    %2258 = vmatmul.mubr.f32.gmra.mrb[0].mxu0 %v2005
    %v2259 = vpop.f32.mrb[0].mxu0
    %v2260 = vadd.f32 0.0, %v2259
    %v2261 = vpop.f32.mrb[0].mxu0
    %2262 = vmatprep.mubr.f32.mxu0 0.0
    %2263 = vmatmul.mubr.f32.gmra.mrb[0].mxu0 %v2010
    %v2264 = vpop.f32.mrb[0].mxu0
    %v2265 = vadd.f32 0.0, %v2264
    %v2266 = vpop.f32.mrb[0].mxu0
    %2267 = vmatprep.mubr.f32.mxu0 0.0
    %2268 = vmatmul.mubr.f32.gmra.mrb[0].mxu0 %v2013
    %v2269 = vpop.f32.mrb[0].mxu0
    %v2270 = vadd.f32 0.0, %v2269
    %v2271 = vpop.f32.mrb[0].mxu0
    %2272 = vdwg.mxu0
    %2273 = vmatprep.subr.mxu0 0.0
    %2274 = vmatpush1.msra.mxu0 %v2016
    %2275 = vmatprep.subr.mxu0 0.0
    %2276 = vmatpush1.msra.mxu0 %v2017
    %2277 = vmatprep.subr.mxu0 0.0
    %2278 = vmatpush1.msra.mxu0 %v2018
    %2279 = vmatprep.subr.mxu0 0.0
    %2280 = vmatpush1.msra.mxu0 %v2019
    %2281 = vmatprep.subr.mxu0 0.0
    %2282 = vmatpush1.msra.mxu0 %v2020
    %2283 = vmatprep.subr.mxu0 0.0
    %2284 = vmatpush1.msra.mxu0 %v2021
    %2285 = vmatprep.subr.mxu0 0.0
    %2286 = vmatpush1.msra.mxu0 %v2022
    %2287 = vmatprep.subr.mxu0 0.0
    %2288 = vmatpush1.msra.mxu0 %v2023
    %2289 = vmatprep.subr.mxu0 0.0
    %2290 = vmatpush1.msra.mxu0 %v2024
    %2291 = vmatprep.subr.mxu0 0.0
    %2292 = vmatpush1.msra.mxu0 %v2025
    %2293 = vmatprep.subr.mxu0 0.0
    %2294 = vmatpush1.msra.mxu0 %v2026
    %2295 = vmatprep.subr.mxu0 0.0
    %2296 = vmatpush1.msra.mxu0 %v2027
    %2297 = vmatprep.subr.mxu0 0.0
    %2298 = vmatpush1.msra.mxu0 %v2028
    %2299 = vmatprep.subr.mxu0 0.0
    %2300 = vmatpush1.msra.mxu0 %v2029
    %2301 = vmatprep.subr.mxu0 0.0
    %2302 = vmatpush1.msra.mxu0 %v2030
    %2303 = vmatprep.subr.mxu0 0.0
    %2304 = vmatpush1.msra.mxu0 %v2031
    %2305 = vmatprep.subr.mxu0 0.0
    %2306 = vmatpush1.msra.mxu0 0.0
    %2307 = vmatprep.subr.mxu0 0.0
    %2308 = vmatpush1.msra.mxu0 0.0
    %2309 = vmatprep.subr.mxu0 0.0
    %2310 = vmatpush1.msra.mxu0 0.0
    %2311 = vmatprep.subr.mxu0 0.0
    %2312 = vmatpush1.msra.mxu0 0.0
    %2313 = vmatprep.subr.mxu0 0.0
    %2314 = vmatpush1.msra.mxu0 0.0
    %2315 = vmatprep.subr.mxu0 0.0
    %2316 = vmatpush1.msra.mxu0 0.0
    %2317 = vmatprep.subr.mxu0 0.0
    %2318 = vmatpush1.msra.mxu0 0.0
    %2319 = vmatprep.subr.mxu0 0.0
    %2320 = vmatpush1.msra.mxu0 0.0
    %2321 = vmatprep.subr.mxu0 0.0
    %2322 = vmatpush1.msra.mxu0 0.0
    %2323 = vmatprep.subr.mxu0 0.0
    %2324 = vmatpush1.msra.mxu0 0.0
    %2325 = vmatprep.subr.mxu0 0.0
    %2326 = vmatpush1.msra.mxu0 0.0
    %2327 = vmatprep.subr.mxu0 0.0
    %2328 = vmatpush1.msra.mxu0 0.0
    %2329 = vmatprep.subr.mxu0 0.0
    %2330 = vmatpush1.msra.mxu0 0.0
    %2331 = vmatprep.subr.mxu0 0.0
    %2332 = vmatpush1.msra.mxu0 0.0
    %2333 = vmatprep.subr.mxu0 0.0
    %2334 = vmatpush1.msra.mxu0 0.0
    %2335 = vmatprep.subr.mxu0 0.0
    %2336 = vmatpush1.msra.mxu0 0.0
    %2337 = vmatprep.mubr.f32.mxu0 0.0
    %2338 = vmatmul.mubr.f32.gmra.mrb[0].mxu0 %v55
    %v2339 = vpop.f32.mrb[0].mxu0
    %v2340 = vadd.f32 %v2115, %v2339
    %v2341 = vpop.f32.mrb[0].mxu0
    %2342 = vmatprep.mubr.f32.mxu0 0.0
    %2343 = vmatmul.mubr.f32.gmra.mrb[0].mxu0 %v56
    %v2344 = vpop.f32.mrb[0].mxu0
    %v2345 = vadd.f32 %v2120, %v2344
    %v2346 = vpop.f32.mrb[0].mxu0
    %2347 = vmatprep.mubr.f32.mxu0 0.0
    %2348 = vmatmul.mubr.f32.gmra.mrb[0].mxu0 %v57
    %v2349 = vpop.f32.mrb[0].mxu0
    %v2350 = vadd.f32 %v2125, %v2349
    %v2351 = vpop.f32.mrb[0].mxu0
    %2352 = vmatprep.mubr.f32.mxu0 0.0
    %2353 = vmatmul.mubr.f32.gmra.mrb[0].mxu0 %v58
    %v2354 = vpop.f32.mrb[0].mxu0
    %v2355 = vadd.f32 %v2130, %v2354
    %v2356 = vpop.f32.mrb[0].mxu0
    %2357 = vmatprep.mubr.f32.mxu0 0.0
    %2358 = vmatmul.mubr.f32.gmra.mrb[0].mxu0 %v59
    %v2359 = vpop.f32.mrb[0].mxu0
    %v2360 = vadd.f32 %v2135, %v2359
    %v2361 = vpop.f32.mrb[0].mxu0
    %2362 = vmatprep.mubr.f32.mxu0 0.0
    %2363 = vmatmul.mubr.f32.gmra.mrb[0].mxu0 %v60
    %v2364 = vpop.f32.mrb[0].mxu0
    %v2365 = vadd.f32 %v2140, %v2364
    %v2366 = vpop.f32.mrb[0].mxu0
    %2367 = vmatprep.mubr.f32.mxu0 0.0
    %2368 = vmatmul.mubr.f32.gmra.mrb[0].mxu0 %v61
    %v2369 = vpop.f32.mrb[0].mxu0
    %v2370 = vadd.f32 %v2145, %v2369
    %v2371 = vpop.f32.mrb[0].mxu0
    %2372 = vmatprep.mubr.f32.mxu0 0.0
    %2373 = vmatmul.mubr.f32.gmra.mrb[0].mxu0 %v62
    %v2374 = vpop.f32.mrb[0].mxu0
    %v2375 = vadd.f32 %v2150, %v2374
    %v2376 = vpop.f32.mrb[0].mxu0
    %2377 = vmatprep.mubr.f32.mxu0 0.0
    %2378 = vmatmul.mubr.f32.gmra.mrb[0].mxu0 %v63
    %v2379 = vpop.f32.mrb[0].mxu0
    %v2380 = vadd.f32 %v2155, %v2379
    %v2381 = vpop.f32.mrb[0].mxu0
    %2382 = vmatprep.mubr.f32.mxu0 0.0
    %2383 = vmatmul.mubr.f32.gmra.mrb[0].mxu0 %v64
    %v2384 = vpop.f32.mrb[0].mxu0
    %v2385 = vadd.f32 %v2160, %v2384
    %v2386 = vpop.f32.mrb[0].mxu0
    %2387 = vmatprep.mubr.f32.mxu0 0.0
    %2388 = vmatmul.mubr.f32.gmra.mrb[0].mxu0 %v65
    %v2389 = vpop.f32.mrb[0].mxu0
    %v2390 = vadd.f32 %v2165, %v2389
    %v2391 = vpop.f32.mrb[0].mxu0
    %2392 = vmatprep.mubr.f32.mxu0 0.0
    %2393 = vmatmul.mubr.f32.gmra.mrb[0].mxu0 %v66
    %v2394 = vpop.f32.mrb[0].mxu0
    %v2395 = vadd.f32 %v2170, %v2394
    %v2396 = vpop.f32.mrb[0].mxu0
    %2397 = vmatprep.mubr.f32.mxu0 0.0
    %2398 = vmatmul.mubr.f32.gmra.mrb[0].mxu0 %v67
    %v2399 = vpop.f32.mrb[0].mxu0
    %v2400 = vadd.f32 %v2175, %v2399
    %v2401 = vpop.f32.mrb[0].mxu0
    %2402 = vmatprep.mubr.f32.mxu0 0.0
    %2403 = vmatmul.mubr.f32.gmra.mrb[0].mxu0 %v68
    %v2404 = vpop.f32.mrb[0].mxu0
    %v2405 = vadd.f32 %v2180, %v2404
    %v2406 = vpop.f32.mrb[0].mxu0
    %2407 = vmatprep.mubr.f32.mxu0 0.0
    %2408 = vmatmul.mubr.f32.gmra.mrb[0].mxu0 %v69
    %v2409 = vpop.f32.mrb[0].mxu0
    %v2410 = vadd.f32 %v2185, %v2409
    %v2411 = vpop.f32.mrb[0].mxu0
    %2412 = vmatprep.mubr.f32.mxu0 0.0
    %2413 = vmatmul.mubr.f32.gmra.mrb[0].mxu0 %v70
    %v2414 = vpop.f32.mrb[0].mxu0
    %v2415 = vadd.f32 %v2190, %v2414
    %v2416 = vpop.f32.mrb[0].mxu0
    %2417 = vmatprep.mubr.f32.mxu0 0.0
    %2418 = vmatmul.mubr.f32.gmra.mrb[0].mxu0 %v71
    %v2419 = vpop.f32.mrb[0].mxu0
    %v2420 = vadd.f32 %v2195, %v2419
    %v2421 = vpop.f32.mrb[0].mxu0
    %2422 = vmatprep.mubr.f32.mxu0 0.0
    %2423 = vmatmul.mubr.f32.gmra.mrb[0].mxu0 %v72
    %v2424 = vpop.f32.mrb[0].mxu0
    %v2425 = vadd.f32 %v2200, %v2424
    %v2426 = vpop.f32.mrb[0].mxu0
    %2427 = vmatprep.mubr.f32.mxu0 0.0
    %2428 = vmatmul.mubr.f32.gmra.mrb[0].mxu0 %v73
    %v2429 = vpop.f32.mrb[0].mxu0
    %v2430 = vadd.f32 %v2205, %v2429
    %v2431 = vpop.f32.mrb[0].mxu0
    %2432 = vmatprep.mubr.f32.mxu0 0.0
    %2433 = vmatmul.mubr.f32.gmra.mrb[0].mxu0 %v74
    %v2434 = vpop.f32.mrb[0].mxu0
    %v2435 = vadd.f32 %v2210, %v2434
    %v2436 = vpop.f32.mrb[0].mxu0
    %2437 = vmatprep.mubr.f32.mxu0 0.0
    %2438 = vmatmul.mubr.f32.gmra.mrb[0].mxu0 %v75
    %v2439 = vpop.f32.mrb[0].mxu0
    %v2440 = vadd.f32 %v2215, %v2439
    %v2441 = vpop.f32.mrb[0].mxu0
    %2442 = vmatprep.mubr.f32.mxu0 0.0
    %2443 = vmatmul.mubr.f32.gmra.mrb[0].mxu0 %v76
    %v2444 = vpop.f32.mrb[0].mxu0
    %v2445 = vadd.f32 %v2220, %v2444
    %v2446 = vpop.f32.mrb[0].mxu0
    %2447 = vmatprep.mubr.f32.mxu0 0.0
    %2448 = vmatmul.mubr.f32.gmra.mrb[0].mxu0 %v77
    %v2449 = vpop.f32.mrb[0].mxu0
    %v2450 = vadd.f32 %v2225, %v2449
    %v2451 = vpop.f32.mrb[0].mxu0
    %2452 = vmatprep.mubr.f32.mxu0 0.0
    %2453 = vmatmul.mubr.f32.gmra.mrb[0].mxu0 %v78
    %v2454 = vpop.f32.mrb[0].mxu0
    %v2455 = vadd.f32 %v2230, %v2454
    %v2456 = vpop.f32.mrb[0].mxu0
    %2457 = vmatprep.mubr.f32.mxu0 0.0
    %2458 = vmatmul.mubr.f32.gmra.mrb[0].mxu0 %v79
    %v2459 = vpop.f32.mrb[0].mxu0
    %v2460 = vadd.f32 %v2235, %v2459
    %v2461 = vpop.f32.mrb[0].mxu0
    %2462 = vmatprep.mubr.f32.mxu0 0.0
    %2463 = vmatmul.mubr.f32.gmra.mrb[0].mxu0 %v80
    %v2464 = vpop.f32.mrb[0].mxu0
    %v2465 = vadd.f32 %v2240, %v2464
    %v2466 = vpop.f32.mrb[0].mxu0
    %2467 = vmatprep.mubr.f32.mxu0 0.0
    %2468 = vmatmul.mubr.f32.gmra.mrb[0].mxu0 %v81
    %v2469 = vpop.f32.mrb[0].mxu0
    %v2470 = vadd.f32 %v2245, %v2469
    %v2471 = vpop.f32.mrb[0].mxu0
    %2472 = vmatprep.mubr.f32.mxu0 0.0
    %2473 = vmatmul.mubr.f32.gmra.mrb[0].mxu0 %v82
    %v2474 = vpop.f32.mrb[0].mxu0
    %v2475 = vadd.f32 %v2250, %v2474
    %v2476 = vpop.f32.mrb[0].mxu0
    %2477 = vmatprep.mubr.f32.mxu0 0.0
    %2478 = vmatmul.mubr.f32.gmra.mrb[0].mxu0 %v83
    %v2479 = vpop.f32.mrb[0].mxu0
    %v2480 = vadd.f32 %v2255, %v2479
    %v2481 = vpop.f32.mrb[0].mxu0
    %2482 = vmatprep.mubr.f32.mxu0 0.0
    %2483 = vmatmul.mubr.f32.gmra.mrb[0].mxu0 %v84
    %v2484 = vpop.f32.mrb[0].mxu0
    %v2485 = vadd.f32 %v2260, %v2484
    %v2486 = vpop.f32.mrb[0].mxu0
    %2487 = vmatprep.mubr.f32.mxu0 0.0
    %2488 = vmatmul.mubr.f32.gmra.mrb[0].mxu0 %v85
    %v2489 = vpop.f32.mrb[0].mxu0
    %v2490 = vadd.f32 %v2265, %v2489
    %v2491 = vpop.f32.mrb[0].mxu0
    %2492 = vmatprep.mubr.f32.mxu0 0.0
    %2493 = vmatmul.mubr.f32.gmra.mrb[0].mxu0 %v86
    %v2494 = vpop.f32.mrb[0].mxu0
    %v2495 = vadd.f32 %v2270, %v2494
    %v2496 = vpop.f32.mrb[0].mxu0
    %2497 = vdwg.mxu0
    %v2498 = vmax.f32 %v2340, 0.0
    %v2499 = vmax.f32 %v2345, 0.0
    %v2500 = vmax.f32 %v2350, 0.0
    %v2501 = vmax.f32 %v2355, 0.0
    %v2502 = vmax.f32 %v2360, 0.0
    %v2503 = vmax.f32 %v2365, 0.0
    %v2504 = vmax.f32 %v2370, 0.0
    %v2505 = vmax.f32 %v2375, 0.0
    %v2506 = vmax.f32 %v2380, 0.0
    %v2507 = vmax.f32 %v2385, 0.0
    %v2508 = vmax.f32 %v2390, 0.0
    %v2509 = vmax.f32 %v2395, 0.0
    %v2510 = vmax.f32 %v2400, 0.0
    %v2511 = vmax.f32 %v2405, 0.0
    %v2512 = vmax.f32 %v2410, 0.0
    %v2513 = vmax.f32 %v2415, 0.0
    %v2514 = vmax.f32 %v2420, 0.0
    %v2515 = vmax.f32 %v2425, 0.0
    %v2516 = vmax.f32 %v2430, 0.0
    %v2517 = vmax.f32 %v2435, 0.0
    %v2518 = vmax.f32 %v2440, 0.0
    %v2519 = vmax.f32 %v2445, 0.0
    %v2520 = vmax.f32 %v2450, 0.0
    %v2521 = vmax.f32 %v2455, 0.0
    %v2522 = vmax.f32 %v2460, 0.0
    %v2523 = vmax.f32 %v2465, 0.0
    %v2524 = vmax.f32 %v2470, 0.0
    %v2525 = vmax.f32 %v2475, 0.0
    %v2526 = vmax.f32 %v2480, 0.0
    %v2527 = vmax.f32 %v2485, 0.0
    %v2528 = vmax.f32 %v2490, 0.0
    %v2529 = vmax.f32 %v2495, 0.0
    %v2530 = vand.u32 2147483647, %v2340
    %v2531 = vand.u32 2147483647, %v2345
    %v2532 = vand.u32 2147483647, %v2350
    %v2533 = vand.u32 2147483647, %v2355
    %v2534 = vand.u32 2147483647, %v2360
    %v2535 = vand.u32 2147483647, %v2365
    %v2536 = vand.u32 2147483647, %v2370
    %v2537 = vand.u32 2147483647, %v2375
    %v2538 = vand.u32 2147483647, %v2380
    %v2539 = vand.u32 2147483647, %v2385
    %v2540 = vand.u32 2147483647, %v2390
    %v2541 = vand.u32 2147483647, %v2395
    %v2542 = vand.u32 2147483647, %v2400
    %v2543 = vand.u32 2147483647, %v2405
    %v2544 = vand.u32 2147483647, %v2410
    %v2545 = vand.u32 2147483647, %v2415
    %v2546 = vand.u32 2147483647, %v2420
    %v2547 = vand.u32 2147483647, %v2425
    %v2548 = vand.u32 2147483647, %v2430
    %v2549 = vand.u32 2147483647, %v2435
    %v2550 = vand.u32 2147483647, %v2440
    %v2551 = vand.u32 2147483647, %v2445
    %v2552 = vand.u32 2147483647, %v2450
    %v2553 = vand.u32 2147483647, %v2455
    %v2554 = vand.u32 2147483647, %v2460
    %v2555 = vand.u32 2147483647, %v2465
    %v2556 = vand.u32 2147483647, %v2470
    %v2557 = vand.u32 2147483647, %v2475
    %v2558 = vand.u32 2147483647, %v2480
    %v2559 = vand.u32 2147483647, %v2485
    %v2560 = vand.u32 2147483647, %v2490
    %v2561 = vand.u32 2147483647, %v2495
    %v2562 = vsub.f32 0.0, %v2530
    %v2563 = vsub.f32 0.0, %v2531
    %v2564 = vsub.f32 0.0, %v2532
    %v2565 = vsub.f32 0.0, %v2533
    %v2566 = vsub.f32 0.0, %v2534
    %v2567 = vsub.f32 0.0, %v2535
    %v2568 = vsub.f32 0.0, %v2536
    %v2569 = vsub.f32 0.0, %v2537
    %v2570 = vsub.f32 0.0, %v2538
    %v2571 = vsub.f32 0.0, %v2539
    %v2572 = vsub.f32 0.0, %v2540
    %v2573 = vsub.f32 0.0, %v2541
    %v2574 = vsub.f32 0.0, %v2542
    %v2575 = vsub.f32 0.0, %v2543
    %v2576 = vsub.f32 0.0, %v2544
    %v2577 = vsub.f32 0.0, %v2545
    %v2578 = vsub.f32 0.0, %v2546
    %v2579 = vsub.f32 0.0, %v2547
    %v2580 = vsub.f32 0.0, %v2548
    %v2581 = vsub.f32 0.0, %v2549
    %v2582 = vsub.f32 0.0, %v2550
    %v2583 = vsub.f32 0.0, %v2551
    %v2584 = vsub.f32 0.0, %v2552
    %v2585 = vsub.f32 0.0, %v2553
    %v2586 = vsub.f32 0.0, %v2554
    %v2587 = vsub.f32 0.0, %v2555
    %v2588 = vsub.f32 0.0, %v2556
    %v2589 = vsub.f32 0.0, %v2557
    %v2590 = vsub.f32 0.0, %v2558
    %v2591 = vsub.f32 0.0, %v2559
    %v2592 = vsub.f32 0.0, %v2560
    %v2593 = vsub.f32 0.0, %v2561
    %v2594 = vmul.f32 %v2562, 1.442695
    %v2595 = vpow.pop %v2594
    %v2596 = vmul.f32 %v2563, 1.442695
    %v2597 = vpow.pop %v2596
    %v2598 = vmul.f32 %v2564, 1.442695
    %v2599 = vpow.pop %v2598
    %v2600 = vmul.f32 %v2565, 1.442695
    %v2601 = vpow.pop %v2600
    %v2602 = vmul.f32 %v2566, 1.442695
    %v2603 = vpow.pop %v2602
    %v2604 = vmul.f32 %v2567, 1.442695
    %v2605 = vpow.pop %v2604
    %v2606 = vmul.f32 %v2568, 1.442695
    %v2607 = vpow.pop %v2606
    %v2608 = vmul.f32 %v2569, 1.442695
    %v2609 = vpow.pop %v2608
    %v2610 = vmul.f32 %v2570, 1.442695
    %v2611 = vpow.pop %v2610
    %v2612 = vmul.f32 %v2571, 1.442695
    %v2613 = vpow.pop %v2612
    %v2614 = vmul.f32 %v2572, 1.442695
    %v2615 = vpow.pop %v2614
    %v2616 = vmul.f32 %v2573, 1.442695
    %v2617 = vpow.pop %v2616
    %v2618 = vmul.f32 %v2574, 1.442695
    %v2619 = vpow.pop %v2618
    %v2620 = vmul.f32 %v2575, 1.442695
    %v2621 = vpow.pop %v2620
    %v2622 = vmul.f32 %v2576, 1.442695
    %v2623 = vpow.pop %v2622
    %v2624 = vmul.f32 %v2577, 1.442695
    %v2625 = vpow.pop %v2624
    %v2626 = vmul.f32 %v2578, 1.442695
    %v2627 = vpow.pop %v2626
    %v2628 = vmul.f32 %v2579, 1.442695
    %v2629 = vpow.pop %v2628
    %v2630 = vmul.f32 %v2580, 1.442695
    %v2631 = vpow.pop %v2630
    %v2632 = vmul.f32 %v2581, 1.442695
    %v2633 = vpow.pop %v2632
    %v2634 = vmul.f32 %v2582, 1.442695
    %v2635 = vpow.pop %v2634
    %v2636 = vmul.f32 %v2583, 1.442695
    %v2637 = vpow.pop %v2636
    %v2638 = vmul.f32 %v2584, 1.442695
    %v2639 = vpow.pop %v2638
    %v2640 = vmul.f32 %v2585, 1.442695
    %v2641 = vpow.pop %v2640
    %v2642 = vmul.f32 %v2586, 1.442695
    %v2643 = vpow.pop %v2642
    %v2644 = vmul.f32 %v2587, 1.442695
    %v2645 = vpow.pop %v2644
    %v2646 = vmul.f32 %v2588, 1.442695
    %v2647 = vpow.pop %v2646
    %v2648 = vmul.f32 %v2589, 1.442695
    %v2649 = vpow.pop %v2648
    %v2650 = vmul.f32 %v2590, 1.442695
    %v2651 = vpow.pop %v2650
    %v2652 = vmul.f32 %v2591, 1.442695
    %v2653 = vpow.pop %v2652
    %v2654 = vmul.f32 %v2592, 1.442695
    %v2655 = vpow.pop %v2654
    %v2656 = vmul.f32 %v2593, 1.442695
    %v2657 = vpow.pop %v2656
    %v2658 = vadd.f32 %v2595, 1.0
    %v2659 = vadd.f32 %v2597, 1.0
    %v2660 = vadd.f32 %v2599, 1.0
    %v2661 = vadd.f32 %v2601, 1.0
    %v2662 = vadd.f32 %v2603, 1.0
    %v2663 = vadd.f32 %v2605, 1.0
    %v2664 = vadd.f32 %v2607, 1.0
    %v2665 = vadd.f32 %v2609, 1.0
    %v2666 = vadd.f32 %v2611, 1.0
    %v2667 = vadd.f32 %v2613, 1.0
    %v2668 = vadd.f32 %v2615, 1.0
    %v2669 = vadd.f32 %v2617, 1.0
    %v2670 = vadd.f32 %v2619, 1.0
    %v2671 = vadd.f32 %v2621, 1.0
    %v2672 = vadd.f32 %v2623, 1.0
    %v2673 = vadd.f32 %v2625, 1.0
    %v2674 = vadd.f32 %v2627, 1.0
    %v2675 = vadd.f32 %v2629, 1.0
    %v2676 = vadd.f32 %v2631, 1.0
    %v2677 = vadd.f32 %v2633, 1.0
    %v2678 = vadd.f32 %v2635, 1.0
    %v2679 = vadd.f32 %v2637, 1.0
    %v2680 = vadd.f32 %v2639, 1.0
    %v2681 = vadd.f32 %v2641, 1.0
    %v2682 = vadd.f32 %v2643, 1.0
    %v2683 = vadd.f32 %v2645, 1.0
    %v2684 = vadd.f32 %v2647, 1.0
    %v2685 = vadd.f32 %v2649, 1.0
    %v2686 = vadd.f32 %v2651, 1.0
    %v2687 = vadd.f32 %v2653, 1.0
    %v2688 = vadd.f32 %v2655, 1.0
    %v2689 = vadd.f32 %v2657, 1.0
    %v2690 = vlog2.pop %v2658
    %v2691 = vmul.f32 %v2690, 0.6931472
    %v2692 = vlog2.pop %v2659
    %v2693 = vmul.f32 %v2692, 0.6931472
    %v2694 = vlog2.pop %v2660
    %v2695 = vmul.f32 %v2694, 0.6931472
    %v2696 = vlog2.pop %v2661
    %v2697 = vmul.f32 %v2696, 0.6931472
    %v2698 = vlog2.pop %v2662
    %v2699 = vmul.f32 %v2698, 0.6931472
    %v2700 = vlog2.pop %v2663
    %v2701 = vmul.f32 %v2700, 0.6931472
    %v2702 = vlog2.pop %v2664
    %v2703 = vmul.f32 %v2702, 0.6931472
    %v2704 = vlog2.pop %v2665
    %v2705 = vmul.f32 %v2704, 0.6931472
    %v2706 = vlog2.pop %v2666
    %v2707 = vmul.f32 %v2706, 0.6931472
    %v2708 = vlog2.pop %v2667
    %v2709 = vmul.f32 %v2708, 0.6931472
    %v2710 = vlog2.pop %v2668
    %v2711 = vmul.f32 %v2710, 0.6931472
    %v2712 = vlog2.pop %v2669
    %v2713 = vmul.f32 %v2712, 0.6931472
    %v2714 = vlog2.pop %v2670
    %v2715 = vmul.f32 %v2714, 0.6931472
    %v2716 = vlog2.pop %v2671
    %v2717 = vmul.f32 %v2716, 0.6931472
    %v2718 = vlog2.pop %v2672
    %v2719 = vmul.f32 %v2718, 0.6931472
    %v2720 = vlog2.pop %v2673
    %v2721 = vmul.f32 %v2720, 0.6931472
    %v2722 = vlog2.pop %v2674
    %v2723 = vmul.f32 %v2722, 0.6931472
    %v2724 = vlog2.pop %v2675
    %v2725 = vmul.f32 %v2724, 0.6931472
    %v2726 = vlog2.pop %v2676
    %v2727 = vmul.f32 %v2726, 0.6931472
    %v2728 = vlog2.pop %v2677
    %v2729 = vmul.f32 %v2728, 0.6931472
    %v2730 = vlog2.pop %v2678
    %v2731 = vmul.f32 %v2730, 0.6931472
    %v2732 = vlog2.pop %v2679
    %v2733 = vmul.f32 %v2732, 0.6931472
    %v2734 = vlog2.pop %v2680
    %v2735 = vmul.f32 %v2734, 0.6931472
    %v2736 = vlog2.pop %v2681
    %v2737 = vmul.f32 %v2736, 0.6931472
    %v2738 = vlog2.pop %v2682
    %v2739 = vmul.f32 %v2738, 0.6931472
    %v2740 = vlog2.pop %v2683
    %v2741 = vmul.f32 %v2740, 0.6931472
    %v2742 = vlog2.pop %v2684
    %v2743 = vmul.f32 %v2742, 0.6931472
    %v2744 = vlog2.pop %v2685
    %v2745 = vmul.f32 %v2744, 0.6931472
    %v2746 = vlog2.pop %v2686
    %v2747 = vmul.f32 %v2746, 0.6931472
    %v2748 = vlog2.pop %v2687
    %v2749 = vmul.f32 %v2748, 0.6931472
    %v2750 = vlog2.pop %v2688
    %v2751 = vmul.f32 %v2750, 0.6931472
    %v2752 = vlog2.pop %v2689
    %v2753 = vmul.f32 %v2752, 0.6931472
    %v2754 = vadd.f32 %v2498, %v2691
    %v2755 = vadd.f32 %v2499, %v2693
    %v2756 = vadd.f32 %v2500, %v2695
    %v2757 = vadd.f32 %v2501, %v2697
    %v2758 = vadd.f32 %v2502, %v2699
    %v2759 = vadd.f32 %v2503, %v2701
    %v2760 = vadd.f32 %v2504, %v2703
    %v2761 = vadd.f32 %v2505, %v2705
    %v2762 = vadd.f32 %v2506, %v2707
    %v2763 = vadd.f32 %v2507, %v2709
    %v2764 = vadd.f32 %v2508, %v2711
    %v2765 = vadd.f32 %v2509, %v2713
    %v2766 = vadd.f32 %v2510, %v2715
    %v2767 = vadd.f32 %v2511, %v2717
    %v2768 = vadd.f32 %v2512, %v2719
    %v2769 = vadd.f32 %v2513, %v2721
    %v2770 = vadd.f32 %v2514, %v2723
    %v2771 = vadd.f32 %v2515, %v2725
    %v2772 = vadd.f32 %v2516, %v2727
    %v2773 = vadd.f32 %v2517, %v2729
    %v2774 = vadd.f32 %v2518, %v2731
    %v2775 = vadd.f32 %v2519, %v2733
    %v2776 = vadd.f32 %v2520, %v2735
    %v2777 = vadd.f32 %v2521, %v2737
    %v2778 = vadd.f32 %v2522, %v2739
    %v2779 = vadd.f32 %v2523, %v2741
    %v2780 = vadd.f32 %v2524, %v2743
    %v2781 = vadd.f32 %v2525, %v2745
    %v2782 = vadd.f32 %v2526, %v2747
    %v2783 = vadd.f32 %v2527, %v2749
    %v2784 = vadd.f32 %v2528, %v2751
    %v2785 = vadd.f32 %v2529, %v2753
    %v2786 = vld [vmem:[%s6] sm:$0xff]
    %v2787 = vld [vmem:[%s6 + $0x8] sm:$0xff]
    %v2788 = vld [vmem:[%s6 + $0x10] sm:$0xff]
    %v2789 = vld [vmem:[%s6 + $0x18] sm:$0xff]
    %v2790 = vld [vmem:[%s6 + $0x20] sm:$0xff]
    %v2791 = vld [vmem:[%s6 + $0x28] sm:$0xff]
    %v2792 = vld [vmem:[%s6 + $0x30] sm:$0xff]
    %v2793 = vld [vmem:[%s6 + $0x38] sm:$0xff]
    %v2794 = vlaneseq
    %v2795 = vshrl.u32 %v2794, 7
    %v2796 = vsub.s32 2, %v2795
    %v2797 = vrot.slane %v87, %v2796
    %vm2798 = vcmask 523264
    %v2800 = vsel %vm2798, %v2754, 0
    %v2803 = vsel %vm2798, %v2755, 0
    %v2806 = vsel %vm2798, %v2756, 0
    %v2809 = vsel %vm2798, %v2757, 0
    %v2812 = vsel %vm2798, %v2758, 0
    %v2815 = vsel %vm2798, %v2759, 0
    %v2818 = vsel %vm2798, %v2760, 0
    %v2821 = vsel %vm2798, %v2761, 0
    %v2824 = vsel %vm2798, %v2762, 0
    %v2827 = vsel %vm2798, %v2763, 0
    %v2830 = vsel %vm2798, %v2764, 0
    %v2833 = vsel %vm2798, %v2765, 0
    %v2836 = vsel %vm2798, %v2766, 0
    %v2839 = vsel %vm2798, %v2767, 0
    %v2842 = vsel %vm2798, %v2768, 0
    %v2845 = vsel %vm2798, %v2769, 0
    %v2848 = vsel %vm2798, %v2770, 0
    %v2851 = vsel %vm2798, %v2771, 0
    %v2854 = vsel %vm2798, %v2772, 0
    %v2857 = vsel %vm2798, %v2773, 0
    %v2860 = vsel %vm2798, %v2774, 0
    %v2863 = vsel %vm2798, %v2775, 0
    %v2866 = vsel %vm2798, %v2776, 0
    %v2869 = vsel %vm2798, %v2777, 0
    %v2872 = vsel %vm2798, %v2778, 0
    %v2875 = vsel %vm2798, %v2779, 0
    %v2878 = vsel %vm2798, %v2780, 0
    %v2881 = vsel %vm2798, %v2781, 0
    %v2884 = vsel %vm2798, %v2782, 0
    %v2887 = vsel %vm2798, %v2783, 0
    %v2890 = vsel %vm2798, %v2784, 0
    %v2893 = vsel %vm2798, %v2785, 0
    %2895 = vmatprep.subr.mxu0 0.0
    %2896 = vmatpush1.msra.mxu0 %v2786
    %2897 = vmatprep.subr.mxu0 0.0
    %2898 = vmatpush1.msra.mxu0 %v2787
    %2899 = vmatprep.subr.mxu0 0.0
    %2900 = vmatpush1.msra.mxu0 %v2788
    %2901 = vmatprep.subr.mxu0 0.0
    %2902 = vmatpush1.msra.mxu0 %v2789
    %2903 = vmatprep.subr.mxu0 0.0
    %2904 = vmatpush1.msra.mxu0 %v2790
    %2905 = vmatprep.subr.mxu0 0.0
    %2906 = vmatpush1.msra.mxu0 %v2791
    %2907 = vmatprep.subr.mxu0 0.0
    %2908 = vmatpush1.msra.mxu0 %v2792
    %2909 = vmatprep.subr.mxu0 0.0
    %2910 = vmatpush1.msra.mxu0 %v2793
    %2911 = vmatprep.subr.mxu0 0.0
    %2912 = vmatpush1.msra.mxu0 0.0
    %2913 = vmatprep.subr.mxu0 0.0
    %2914 = vmatpush1.msra.mxu0 0.0
    %2915 = vmatprep.subr.mxu0 0.0
    %2916 = vmatpush1.msra.mxu0 0.0
    %2917 = vmatprep.subr.mxu0 0.0
    %2918 = vmatpush1.msra.mxu0 0.0
    %2919 = vmatprep.subr.mxu0 0.0
    %2920 = vmatpush1.msra.mxu0 0.0
    %2921 = vmatprep.subr.mxu0 0.0
    %2922 = vmatpush1.msra.mxu0 0.0
    %2923 = vmatprep.subr.mxu0 0.0
    %2924 = vmatpush1.msra.mxu0 0.0
    %2925 = vmatprep.subr.mxu0 0.0
    %2926 = vmatpush1.msra.mxu0 0.0
    %2927 = vmatprep.subr.mxu0 0.0
    %2928 = vmatpush1.msra.mxu0 0.0
    %2929 = vmatprep.subr.mxu0 0.0
    %2930 = vmatpush1.msra.mxu0 0.0
    %2931 = vmatprep.subr.mxu0 0.0
    %2932 = vmatpush1.msra.mxu0 0.0
    %2933 = vmatprep.subr.mxu0 0.0
    %2934 = vmatpush1.msra.mxu0 0.0
    %2935 = vmatprep.subr.mxu0 0.0
    %2936 = vmatpush1.msra.mxu0 0.0
    %2937 = vmatprep.subr.mxu0 0.0
    %2938 = vmatpush1.msra.mxu0 0.0
    %2939 = vmatprep.subr.mxu0 0.0
    %2940 = vmatpush1.msra.mxu0 0.0
    %2941 = vmatprep.subr.mxu0 0.0
    %2942 = vmatpush1.msra.mxu0 0.0
    %2943 = vmatprep.subr.mxu0 0.0
    %2944 = vmatpush1.msra.mxu0 0.0
    %2945 = vmatprep.subr.mxu0 0.0
    %2946 = vmatpush1.msra.mxu0 0.0
    %2947 = vmatprep.subr.mxu0 0.0
    %2948 = vmatpush1.msra.mxu0 0.0
    %2949 = vmatprep.subr.mxu0 0.0
    %2950 = vmatpush1.msra.mxu0 0.0
    %2951 = vmatprep.subr.mxu0 0.0
    %2952 = vmatpush1.msra.mxu0 0.0
    %2953 = vmatprep.subr.mxu0 0.0
    %2954 = vmatpush1.msra.mxu0 0.0
    %2955 = vmatprep.subr.mxu0 0.0
    %2956 = vmatpush1.msra.mxu0 0.0
    %2957 = vmatprep.subr.mxu0 0.0
    %2958 = vmatpush1.msra.mxu0 0.0
    %2959 = vmatprep.mubr.f32.mxu0 0.0
    %2960 = vmatmul.mubr.f32.gmra.mrb[0].mxu0 %v2800
    %v2961 = vpop.f32.mrb[0].mxu0
    %v2962 = vadd.f32 %v2797, %v2961
    %v2963 = vpop.f32.mrb[0].mxu0
    %2964 = vmatprep.mubr.f32.mxu0 0.0
    %2965 = vmatmul.mubr.f32.gmra.mrb[0].mxu0 %v2803
    %v2966 = vpop.f32.mrb[0].mxu0
    %v2967 = vadd.f32 %v2797, %v2966
    %v2968 = vpop.f32.mrb[0].mxu0
    %2969 = vmatprep.mubr.f32.mxu0 0.0
    %2970 = vmatmul.mubr.f32.gmra.mrb[0].mxu0 %v2806
    %v2971 = vpop.f32.mrb[0].mxu0
    %v2972 = vadd.f32 %v2797, %v2971
    %v2973 = vpop.f32.mrb[0].mxu0
    %2974 = vmatprep.mubr.f32.mxu0 0.0
    %2975 = vmatmul.mubr.f32.gmra.mrb[0].mxu0 %v2809
    %v2976 = vpop.f32.mrb[0].mxu0
    %v2977 = vadd.f32 %v2797, %v2976
    %v2978 = vpop.f32.mrb[0].mxu0
    %2979 = vmatprep.mubr.f32.mxu0 0.0
    %2980 = vmatmul.mubr.f32.gmra.mrb[0].mxu0 %v2812
    %v2981 = vpop.f32.mrb[0].mxu0
    %v2982 = vadd.f32 %v2797, %v2981
    %v2983 = vpop.f32.mrb[0].mxu0
    %2984 = vmatprep.mubr.f32.mxu0 0.0
    %2985 = vmatmul.mubr.f32.gmra.mrb[0].mxu0 %v2815
    %v2986 = vpop.f32.mrb[0].mxu0
    %v2987 = vadd.f32 %v2797, %v2986
    %v2988 = vpop.f32.mrb[0].mxu0
    %2989 = vmatprep.mubr.f32.mxu0 0.0
    %2990 = vmatmul.mubr.f32.gmra.mrb[0].mxu0 %v2818
    %v2991 = vpop.f32.mrb[0].mxu0
    %v2992 = vadd.f32 %v2797, %v2991
    %v2993 = vpop.f32.mrb[0].mxu0
    %2994 = vmatprep.mubr.f32.mxu0 0.0
    %2995 = vmatmul.mubr.f32.gmra.mrb[0].mxu0 %v2821
    %v2996 = vpop.f32.mrb[0].mxu0
    %v2997 = vadd.f32 %v2797, %v2996
    %v2998 = vpop.f32.mrb[0].mxu0
    %2999 = vmatprep.mubr.f32.mxu0 0.0
    %3000 = vmatmul.mubr.f32.gmra.mrb[0].mxu0 %v2824
    %v3001 = vpop.f32.mrb[0].mxu0
    %v3002 = vadd.f32 %v2797, %v3001
    %v3003 = vpop.f32.mrb[0].mxu0
    %3004 = vmatprep.mubr.f32.mxu0 0.0
    %3005 = vmatmul.mubr.f32.gmra.mrb[0].mxu0 %v2827
    %v3006 = vpop.f32.mrb[0].mxu0
    %v3007 = vadd.f32 %v2797, %v3006
    %v3008 = vpop.f32.mrb[0].mxu0
    %3009 = vmatprep.mubr.f32.mxu0 0.0
    %3010 = vmatmul.mubr.f32.gmra.mrb[0].mxu0 %v2830
    %v3011 = vpop.f32.mrb[0].mxu0
    %v3012 = vadd.f32 %v2797, %v3011
    %v3013 = vpop.f32.mrb[0].mxu0
    %3014 = vmatprep.mubr.f32.mxu0 0.0
    %3015 = vmatmul.mubr.f32.gmra.mrb[0].mxu0 %v2833
    %v3016 = vpop.f32.mrb[0].mxu0
    %v3017 = vadd.f32 %v2797, %v3016
    %v3018 = vpop.f32.mrb[0].mxu0
    %3019 = vmatprep.mubr.f32.mxu0 0.0
    %3020 = vmatmul.mubr.f32.gmra.mrb[0].mxu0 %v2836
    %v3021 = vpop.f32.mrb[0].mxu0
    %v3022 = vadd.f32 %v2797, %v3021
    %v3023 = vpop.f32.mrb[0].mxu0
    %3024 = vmatprep.mubr.f32.mxu0 0.0
    %3025 = vmatmul.mubr.f32.gmra.mrb[0].mxu0 %v2839
    %v3026 = vpop.f32.mrb[0].mxu0
    %v3027 = vadd.f32 %v2797, %v3026
    %v3028 = vpop.f32.mrb[0].mxu0
    %3029 = vmatprep.mubr.f32.mxu0 0.0
    %3030 = vmatmul.mubr.f32.gmra.mrb[0].mxu0 %v2842
    %v3031 = vpop.f32.mrb[0].mxu0
    %v3032 = vadd.f32 %v2797, %v3031
    %v3033 = vpop.f32.mrb[0].mxu0
    %3034 = vmatprep.mubr.f32.mxu0 0.0
    %3035 = vmatmul.mubr.f32.gmra.mrb[0].mxu0 %v2845
    %v3036 = vpop.f32.mrb[0].mxu0
    %v3037 = vadd.f32 %v2797, %v3036
    %v3038 = vpop.f32.mrb[0].mxu0
    %3039 = vmatprep.mubr.f32.mxu0 0.0
    %3040 = vmatmul.mubr.f32.gmra.mrb[0].mxu0 %v2848
    %v3041 = vpop.f32.mrb[0].mxu0
    %v3042 = vadd.f32 %v2797, %v3041
    %v3043 = vpop.f32.mrb[0].mxu0
    %3044 = vmatprep.mubr.f32.mxu0 0.0
    %3045 = vmatmul.mubr.f32.gmra.mrb[0].mxu0 %v2851
    %v3046 = vpop.f32.mrb[0].mxu0
    %v3047 = vadd.f32 %v2797, %v3046
    %v3048 = vpop.f32.mrb[0].mxu0
    %3049 = vmatprep.mubr.f32.mxu0 0.0
    %3050 = vmatmul.mubr.f32.gmra.mrb[0].mxu0 %v2854
    %v3051 = vpop.f32.mrb[0].mxu0
    %v3052 = vadd.f32 %v2797, %v3051
    %v3053 = vpop.f32.mrb[0].mxu0
    %3054 = vmatprep.mubr.f32.mxu0 0.0
    %3055 = vmatmul.mubr.f32.gmra.mrb[0].mxu0 %v2857
    %v3056 = vpop.f32.mrb[0].mxu0
    %v3057 = vadd.f32 %v2797, %v3056
    %v3058 = vpop.f32.mrb[0].mxu0
    %3059 = vmatprep.mubr.f32.mxu0 0.0
    %3060 = vmatmul.mubr.f32.gmra.mrb[0].mxu0 %v2860
    %v3061 = vpop.f32.mrb[0].mxu0
    %v3062 = vadd.f32 %v2797, %v3061
    %v3063 = vpop.f32.mrb[0].mxu0
    %3064 = vmatprep.mubr.f32.mxu0 0.0
    %3065 = vmatmul.mubr.f32.gmra.mrb[0].mxu0 %v2863
    %v3066 = vpop.f32.mrb[0].mxu0
    %v3067 = vadd.f32 %v2797, %v3066
    %v3068 = vpop.f32.mrb[0].mxu0
    %3069 = vmatprep.mubr.f32.mxu0 0.0
    %3070 = vmatmul.mubr.f32.gmra.mrb[0].mxu0 %v2866
    %v3071 = vpop.f32.mrb[0].mxu0
    %v3072 = vadd.f32 %v2797, %v3071
    %v3073 = vpop.f32.mrb[0].mxu0
    %3074 = vmatprep.mubr.f32.mxu0 0.0
    %3075 = vmatmul.mubr.f32.gmra.mrb[0].mxu0 %v2869
    %v3076 = vpop.f32.mrb[0].mxu0
    %v3077 = vadd.f32 %v2797, %v3076
    %v3078 = vpop.f32.mrb[0].mxu0
    %3079 = vmatprep.mubr.f32.mxu0 0.0
    %3080 = vmatmul.mubr.f32.gmra.mrb[0].mxu0 %v2872
    %v3081 = vpop.f32.mrb[0].mxu0
    %v3082 = vadd.f32 %v2797, %v3081
    %v3083 = vpop.f32.mrb[0].mxu0
    %3084 = vmatprep.mubr.f32.mxu0 0.0
    %3085 = vmatmul.mubr.f32.gmra.mrb[0].mxu0 %v2875
    %v3086 = vpop.f32.mrb[0].mxu0
    %v3087 = vadd.f32 %v2797, %v3086
    %v3088 = vpop.f32.mrb[0].mxu0
    %3089 = vmatprep.mubr.f32.mxu0 0.0
    %3090 = vmatmul.mubr.f32.gmra.mrb[0].mxu0 %v2878
    %v3091 = vpop.f32.mrb[0].mxu0
    %v3092 = vadd.f32 %v2797, %v3091
    %v3093 = vpop.f32.mrb[0].mxu0
    %3094 = vmatprep.mubr.f32.mxu0 0.0
    %3095 = vmatmul.mubr.f32.gmra.mrb[0].mxu0 %v2881
    %v3096 = vpop.f32.mrb[0].mxu0
    %v3097 = vadd.f32 %v2797, %v3096
    %v3098 = vpop.f32.mrb[0].mxu0
    %3099 = vmatprep.mubr.f32.mxu0 0.0
    %3100 = vmatmul.mubr.f32.gmra.mrb[0].mxu0 %v2884
    %v3101 = vpop.f32.mrb[0].mxu0
    %v3102 = vadd.f32 %v2797, %v3101
    %v3103 = vpop.f32.mrb[0].mxu0
    %3104 = vmatprep.mubr.f32.mxu0 0.0
    %3105 = vmatmul.mubr.f32.gmra.mrb[0].mxu0 %v2887
    %v3106 = vpop.f32.mrb[0].mxu0
    %v3107 = vadd.f32 %v2797, %v3106
    %v3108 = vpop.f32.mrb[0].mxu0
    %3109 = vmatprep.mubr.f32.mxu0 0.0
    %3110 = vmatmul.mubr.f32.gmra.mrb[0].mxu0 %v2890
    %v3111 = vpop.f32.mrb[0].mxu0
    %v3112 = vadd.f32 %v2797, %v3111
    %v3113 = vpop.f32.mrb[0].mxu0
    %3114 = vmatprep.mubr.f32.mxu0 0.0
    %3115 = vmatmul.mubr.f32.gmra.mrb[0].mxu0 %v2893
    %v3116 = vpop.f32.mrb[0].mxu0
    %v3117 = vadd.f32 %v2797, %v3116
    %v3118 = vpop.f32.mrb[0].mxu0
    %3119 = vdwg.mxu0
    %v3120 = vld [vmem:[%s7] sm:$0xff]
    %v3121 = vld [vmem:[%s7 + $0x8] sm:$0xff]
    %v3122 = vld [vmem:[%s7 + $0x10] sm:$0xff]
    %v3123 = vld [vmem:[%s7 + $0x18] sm:$0xff]
    %v3124 = vld [vmem:[%s7 + $0x20] sm:$0xff]
    %v3125 = vld [vmem:[%s7 + $0x28] sm:$0xff]
    %v3126 = vld [vmem:[%s7 + $0x30] sm:$0xff]
    %v3127 = vld [vmem:[%s7 + $0x38] sm:$0xff]
    %v3128 = vlaneseq
    %v3129 = vshrl.u32 %v3128, 7
    %v3130 = vsub.s32 3, %v3129
    %v3131 = vrot.slane %v87, %v3130
    %3132 = vmatprep.subr.mxu0 0.0
    %3133 = vmatpush1.msra.mxu0 %v3120
    %3134 = vmatprep.subr.mxu0 0.0
    %3135 = vmatpush1.msra.mxu0 %v3121
    %3136 = vmatprep.subr.mxu0 0.0
    %3137 = vmatpush1.msra.mxu0 %v3122
    %3138 = vmatprep.subr.mxu0 0.0
    %3139 = vmatpush1.msra.mxu0 %v3123
    %3140 = vmatprep.subr.mxu0 0.0
    %3141 = vmatpush1.msra.mxu0 %v3124
    %3142 = vmatprep.subr.mxu0 0.0
    %3143 = vmatpush1.msra.mxu0 %v3125
    %3144 = vmatprep.subr.mxu0 0.0
    %3145 = vmatpush1.msra.mxu0 %v3126
    %3146 = vmatprep.subr.mxu0 0.0
    %3147 = vmatpush1.msra.mxu0 %v3127
    %3148 = vmatprep.subr.mxu0 0.0
    %3149 = vmatpush1.msra.mxu0 0.0
    %3150 = vmatprep.subr.mxu0 0.0
    %3151 = vmatpush1.msra.mxu0 0.0
    %3152 = vmatprep.subr.mxu0 0.0
    %3153 = vmatpush1.msra.mxu0 0.0
    %3154 = vmatprep.subr.mxu0 0.0
    %3155 = vmatpush1.msra.mxu0 0.0
    %3156 = vmatprep.subr.mxu0 0.0
    %3157 = vmatpush1.msra.mxu0 0.0
    %3158 = vmatprep.subr.mxu0 0.0
    %3159 = vmatpush1.msra.mxu0 0.0
    %3160 = vmatprep.subr.mxu0 0.0
    %3161 = vmatpush1.msra.mxu0 0.0
    %3162 = vmatprep.subr.mxu0 0.0
    %3163 = vmatpush1.msra.mxu0 0.0
    %3164 = vmatprep.subr.mxu0 0.0
    %3165 = vmatpush1.msra.mxu0 0.0
    %3166 = vmatprep.subr.mxu0 0.0
    %3167 = vmatpush1.msra.mxu0 0.0
    %3168 = vmatprep.subr.mxu0 0.0
    %3169 = vmatpush1.msra.mxu0 0.0
    %3170 = vmatprep.subr.mxu0 0.0
    %3171 = vmatpush1.msra.mxu0 0.0
    %3172 = vmatprep.subr.mxu0 0.0
    %3173 = vmatpush1.msra.mxu0 0.0
    %3174 = vmatprep.subr.mxu0 0.0
    %3175 = vmatpush1.msra.mxu0 0.0
    %3176 = vmatprep.subr.mxu0 0.0
    %3177 = vmatpush1.msra.mxu0 0.0
    %3178 = vmatprep.subr.mxu0 0.0
    %3179 = vmatpush1.msra.mxu0 0.0
    %3180 = vmatprep.subr.mxu0 0.0
    %3181 = vmatpush1.msra.mxu0 0.0
    %3182 = vmatprep.subr.mxu0 0.0
    %3183 = vmatpush1.msra.mxu0 0.0
    %3184 = vmatprep.subr.mxu0 0.0
    %3185 = vmatpush1.msra.mxu0 0.0
    %3186 = vmatprep.subr.mxu0 0.0
    %3187 = vmatpush1.msra.mxu0 0.0
    %3188 = vmatprep.subr.mxu0 0.0
    %3189 = vmatpush1.msra.mxu0 0.0
    %3190 = vmatprep.subr.mxu0 0.0
    %3191 = vmatpush1.msra.mxu0 0.0
    %3192 = vmatprep.subr.mxu0 0.0
    %3193 = vmatpush1.msra.mxu0 0.0
    %3194 = vmatprep.subr.mxu0 0.0
    %3195 = vmatpush1.msra.mxu0 0.0
    %3196 = vmatprep.mubr.f32.mxu0 0.0
    %3197 = vmatmul.mubr.f32.gmra.mrb[0].mxu0 %v2800
    %v3198 = vpop.f32.mrb[0].mxu0
    %v3199 = vadd.f32 %v3131, %v3198
    %v3200 = vpop.f32.mrb[0].mxu0
    %3201 = vmatprep.mubr.f32.mxu0 0.0
    %3202 = vmatmul.mubr.f32.gmra.mrb[0].mxu0 %v2803
    %v3203 = vpop.f32.mrb[0].mxu0
    %v3204 = vadd.f32 %v3131, %v3203
    %v3205 = vpop.f32.mrb[0].mxu0
    %3206 = vmatprep.mubr.f32.mxu0 0.0
    %3207 = vmatmul.mubr.f32.gmra.mrb[0].mxu0 %v2806
    %v3208 = vpop.f32.mrb[0].mxu0
    %v3209 = vadd.f32 %v3131, %v3208
    %v3210 = vpop.f32.mrb[0].mxu0
    %3211 = vmatprep.mubr.f32.mxu0 0.0
    %3212 = vmatmul.mubr.f32.gmra.mrb[0].mxu0 %v2809
    %v3213 = vpop.f32.mrb[0].mxu0
    %v3214 = vadd.f32 %v3131, %v3213
    %v3215 = vpop.f32.mrb[0].mxu0
    %3216 = vmatprep.mubr.f32.mxu0 0.0
    %3217 = vmatmul.mubr.f32.gmra.mrb[0].mxu0 %v2812
    %v3218 = vpop.f32.mrb[0].mxu0
    %v3219 = vadd.f32 %v3131, %v3218
    %v3220 = vpop.f32.mrb[0].mxu0
    %3221 = vmatprep.mubr.f32.mxu0 0.0
    %3222 = vmatmul.mubr.f32.gmra.mrb[0].mxu0 %v2815
    %v3223 = vpop.f32.mrb[0].mxu0
    %v3224 = vadd.f32 %v3131, %v3223
    %v3225 = vpop.f32.mrb[0].mxu0
    %3226 = vmatprep.mubr.f32.mxu0 0.0
    %3227 = vmatmul.mubr.f32.gmra.mrb[0].mxu0 %v2818
    %v3228 = vpop.f32.mrb[0].mxu0
    %v3229 = vadd.f32 %v3131, %v3228
    %v3230 = vpop.f32.mrb[0].mxu0
    %3231 = vmatprep.mubr.f32.mxu0 0.0
    %3232 = vmatmul.mubr.f32.gmra.mrb[0].mxu0 %v2821
    %v3233 = vpop.f32.mrb[0].mxu0
    %v3234 = vadd.f32 %v3131, %v3233
    %v3235 = vpop.f32.mrb[0].mxu0
    %3236 = vmatprep.mubr.f32.mxu0 0.0
    %3237 = vmatmul.mubr.f32.gmra.mrb[0].mxu0 %v2824
    %v3238 = vpop.f32.mrb[0].mxu0
    %v3239 = vadd.f32 %v3131, %v3238
    %v3240 = vpop.f32.mrb[0].mxu0
    %3241 = vmatprep.mubr.f32.mxu0 0.0
    %3242 = vmatmul.mubr.f32.gmra.mrb[0].mxu0 %v2827
    %v3243 = vpop.f32.mrb[0].mxu0
    %v3244 = vadd.f32 %v3131, %v3243
    %v3245 = vpop.f32.mrb[0].mxu0
    %3246 = vmatprep.mubr.f32.mxu0 0.0
    %3247 = vmatmul.mubr.f32.gmra.mrb[0].mxu0 %v2830
    %v3248 = vpop.f32.mrb[0].mxu0
    %v3249 = vadd.f32 %v3131, %v3248
    %v3250 = vpop.f32.mrb[0].mxu0
    %3251 = vmatprep.mubr.f32.mxu0 0.0
    %3252 = vmatmul.mubr.f32.gmra.mrb[0].mxu0 %v2833
    %v3253 = vpop.f32.mrb[0].mxu0
    %v3254 = vadd.f32 %v3131, %v3253
    %v3255 = vpop.f32.mrb[0].mxu0
    %3256 = vmatprep.mubr.f32.mxu0 0.0
    %3257 = vmatmul.mubr.f32.gmra.mrb[0].mxu0 %v2836
    %v3258 = vpop.f32.mrb[0].mxu0
    %v3259 = vadd.f32 %v3131, %v3258
    %v3260 = vpop.f32.mrb[0].mxu0
    %3261 = vmatprep.mubr.f32.mxu0 0.0
    %3262 = vmatmul.mubr.f32.gmra.mrb[0].mxu0 %v2839
    %v3263 = vpop.f32.mrb[0].mxu0
    %v3264 = vadd.f32 %v3131, %v3263
    %v3265 = vpop.f32.mrb[0].mxu0
    %3266 = vmatprep.mubr.f32.mxu0 0.0
    %3267 = vmatmul.mubr.f32.gmra.mrb[0].mxu0 %v2842
    %v3268 = vpop.f32.mrb[0].mxu0
    %v3269 = vadd.f32 %v3131, %v3268
    %v3270 = vpop.f32.mrb[0].mxu0
    %3271 = vmatprep.mubr.f32.mxu0 0.0
    %3272 = vmatmul.mubr.f32.gmra.mrb[0].mxu0 %v2845
    %v3273 = vpop.f32.mrb[0].mxu0
    %v3274 = vadd.f32 %v3131, %v3273
    %v3275 = vpop.f32.mrb[0].mxu0
    %3276 = vmatprep.mubr.f32.mxu0 0.0
    %3277 = vmatmul.mubr.f32.gmra.mrb[0].mxu0 %v2848
    %v3278 = vpop.f32.mrb[0].mxu0
    %v3279 = vadd.f32 %v3131, %v3278
    %v3280 = vpop.f32.mrb[0].mxu0
    %3281 = vmatprep.mubr.f32.mxu0 0.0
    %3282 = vmatmul.mubr.f32.gmra.mrb[0].mxu0 %v2851
    %v3283 = vpop.f32.mrb[0].mxu0
    %v3284 = vadd.f32 %v3131, %v3283
    %v3285 = vpop.f32.mrb[0].mxu0
    %3286 = vmatprep.mubr.f32.mxu0 0.0
    %3287 = vmatmul.mubr.f32.gmra.mrb[0].mxu0 %v2854
    %v3288 = vpop.f32.mrb[0].mxu0
    %v3289 = vadd.f32 %v3131, %v3288
    %v3290 = vpop.f32.mrb[0].mxu0
    %3291 = vmatprep.mubr.f32.mxu0 0.0
    %3292 = vmatmul.mubr.f32.gmra.mrb[0].mxu0 %v2857
    %v3293 = vpop.f32.mrb[0].mxu0
    %v3294 = vadd.f32 %v3131, %v3293
    %v3295 = vpop.f32.mrb[0].mxu0
    %3296 = vmatprep.mubr.f32.mxu0 0.0
    %3297 = vmatmul.mubr.f32.gmra.mrb[0].mxu0 %v2860
    %v3298 = vpop.f32.mrb[0].mxu0
    %v3299 = vadd.f32 %v3131, %v3298
    %v3300 = vpop.f32.mrb[0].mxu0
    %3301 = vmatprep.mubr.f32.mxu0 0.0
    %3302 = vmatmul.mubr.f32.gmra.mrb[0].mxu0 %v2863
    %v3303 = vpop.f32.mrb[0].mxu0
    %v3304 = vadd.f32 %v3131, %v3303
    %v3305 = vpop.f32.mrb[0].mxu0
    %3306 = vmatprep.mubr.f32.mxu0 0.0
    %3307 = vmatmul.mubr.f32.gmra.mrb[0].mxu0 %v2866
    %v3308 = vpop.f32.mrb[0].mxu0
    %v3309 = vadd.f32 %v3131, %v3308
    %v3310 = vpop.f32.mrb[0].mxu0
    %3311 = vmatprep.mubr.f32.mxu0 0.0
    %3312 = vmatmul.mubr.f32.gmra.mrb[0].mxu0 %v2869
    %v3313 = vpop.f32.mrb[0].mxu0
    %v3314 = vadd.f32 %v3131, %v3313
    %v3315 = vpop.f32.mrb[0].mxu0
    %3316 = vmatprep.mubr.f32.mxu0 0.0
    %3317 = vmatmul.mubr.f32.gmra.mrb[0].mxu0 %v2872
    %v3318 = vpop.f32.mrb[0].mxu0
    %v3319 = vadd.f32 %v3131, %v3318
    %v3320 = vpop.f32.mrb[0].mxu0
    %3321 = vmatprep.mubr.f32.mxu0 0.0
    %3322 = vmatmul.mubr.f32.gmra.mrb[0].mxu0 %v2875
    %v3323 = vpop.f32.mrb[0].mxu0
    %v3324 = vadd.f32 %v3131, %v3323
    %v3325 = vpop.f32.mrb[0].mxu0
    %3326 = vmatprep.mubr.f32.mxu0 0.0
    %3327 = vmatmul.mubr.f32.gmra.mrb[0].mxu0 %v2878
    %v3328 = vpop.f32.mrb[0].mxu0
    %v3329 = vadd.f32 %v3131, %v3328
    %v3330 = vpop.f32.mrb[0].mxu0
    %3331 = vmatprep.mubr.f32.mxu0 0.0
    %3332 = vmatmul.mubr.f32.gmra.mrb[0].mxu0 %v2881
    %v3333 = vpop.f32.mrb[0].mxu0
    %v3334 = vadd.f32 %v3131, %v3333
    %v3335 = vpop.f32.mrb[0].mxu0
    %3336 = vmatprep.mubr.f32.mxu0 0.0
    %3337 = vmatmul.mubr.f32.gmra.mrb[0].mxu0 %v2884
    %v3338 = vpop.f32.mrb[0].mxu0
    %v3339 = vadd.f32 %v3131, %v3338
    %v3340 = vpop.f32.mrb[0].mxu0
    %3341 = vmatprep.mubr.f32.mxu0 0.0
    %3342 = vmatmul.mubr.f32.gmra.mrb[0].mxu0 %v2887
    %v3343 = vpop.f32.mrb[0].mxu0
    %v3344 = vadd.f32 %v3131, %v3343
    %v3345 = vpop.f32.mrb[0].mxu0
    %3346 = vmatprep.mubr.f32.mxu0 0.0
    %3347 = vmatmul.mubr.f32.gmra.mrb[0].mxu0 %v2890
    %v3348 = vpop.f32.mrb[0].mxu0
    %v3349 = vadd.f32 %v3131, %v3348
    %v3350 = vpop.f32.mrb[0].mxu0
    %3351 = vmatprep.mubr.f32.mxu0 0.0
    %3352 = vmatmul.mubr.f32.gmra.mrb[0].mxu0 %v2893
    %v3353 = vpop.f32.mrb[0].mxu0
    %v3354 = vadd.f32 %v3131, %v3353
    %v3355 = vpop.f32.mrb[0].mxu0
    %3356 = vdwg.mxu0
    %vm3357 = vcmask 130048
    %v3358 = vsel %vm3357, %v2962, 0.0
    %v3359 = vsel %vm3357, %v2967, 0.0
    %v3360 = vadd.f32 %v3358, %v3359
    %v3361 = vsel %vm3357, %v2972, 0.0
    %v3362 = vadd.f32 %v3360, %v3361
    %v3363 = vsel %vm3357, %v2977, 0.0
    %v3364 = vadd.f32 %v3362, %v3363
    %v3365 = vsel %vm3357, %v2982, 0.0
    %v3366 = vadd.f32 %v3364, %v3365
    %v3367 = vsel %vm3357, %v2987, 0.0
    %v3368 = vadd.f32 %v3366, %v3367
    %v3369 = vsel %vm3357, %v2992, 0.0
    %v3370 = vadd.f32 %v3368, %v3369
    %v3371 = vsel %vm3357, %v2997, 0.0
    %v3372 = vadd.f32 %v3370, %v3371
    %v3373 = vsel %vm3357, %v3002, 0.0
    %v3374 = vadd.f32 %v3372, %v3373
    %v3375 = vsel %vm3357, %v3007, 0.0
    %v3376 = vadd.f32 %v3374, %v3375
    %v3377 = vsel %vm3357, %v3012, 0.0
    %v3378 = vadd.f32 %v3376, %v3377
    %v3379 = vsel %vm3357, %v3017, 0.0
    %v3380 = vadd.f32 %v3378, %v3379
    %v3381 = vsel %vm3357, %v3022, 0.0
    %v3382 = vadd.f32 %v3380, %v3381
    %v3383 = vsel %vm3357, %v3027, 0.0
    %v3384 = vadd.f32 %v3382, %v3383
    %v3385 = vsel %vm3357, %v3032, 0.0
    %v3386 = vadd.f32 %v3384, %v3385
    %v3387 = vsel %vm3357, %v3037, 0.0
    %v3388 = vadd.f32 %v3386, %v3387
    %v3389 = vsel %vm3357, %v3042, 0.0
    %v3390 = vadd.f32 %v3388, %v3389
    %v3391 = vsel %vm3357, %v3047, 0.0
    %v3392 = vadd.f32 %v3390, %v3391
    %v3393 = vsel %vm3357, %v3052, 0.0
    %v3394 = vadd.f32 %v3392, %v3393
    %v3395 = vsel %vm3357, %v3057, 0.0
    %v3396 = vadd.f32 %v3394, %v3395
    %v3397 = vsel %vm3357, %v3062, 0.0
    %v3398 = vadd.f32 %v3396, %v3397
    %v3399 = vsel %vm3357, %v3067, 0.0
    %v3400 = vadd.f32 %v3398, %v3399
    %v3401 = vsel %vm3357, %v3072, 0.0
    %v3402 = vadd.f32 %v3400, %v3401
    %v3403 = vsel %vm3357, %v3077, 0.0
    %v3404 = vadd.f32 %v3402, %v3403
    %v3405 = vsel %vm3357, %v3082, 0.0
    %v3406 = vadd.f32 %v3404, %v3405
    %v3407 = vsel %vm3357, %v3087, 0.0
    %v3408 = vadd.f32 %v3406, %v3407
    %v3409 = vsel %vm3357, %v3092, 0.0
    %v3410 = vadd.f32 %v3408, %v3409
    %v3411 = vsel %vm3357, %v3097, 0.0
    %v3412 = vadd.f32 %v3410, %v3411
    %v3413 = vsel %vm3357, %v3102, 0.0
    %v3414 = vadd.f32 %v3412, %v3413
    %v3415 = vsel %vm3357, %v3107, 0.0
    %v3416 = vadd.f32 %v3414, %v3415
    %v3417 = vsel %vm3357, %v3112, 0.0
    %v3418 = vadd.f32 %v3416, %v3417
    %v3419 = vsel %vm3357, %v3117, 0.0
    %v3420 = vadd.f32 %v3418, %v3419
    %v3421 = vrot.slane %v3420, 4
    %v3422 = vadd.f32 %v3420, %v3421
    %v3423 = vrot.slane %v3422, 2
    %v3424 = vadd.f32 %v3422, %v3423
    %v3425 = vrot.slane %v3424, 1
    %v3426 = vadd.f32 %v3424, %v3425
    %v3427 = vrcp.pop 256.0
    %v3428 = vmul.f32 %v3426, %v3427
    %v3429 = vsub.f32 %v2962, %v3428
    %v3430 = vsub.f32 %v2967, %v3428
    %v3431 = vsub.f32 %v2972, %v3428
    %v3432 = vsub.f32 %v2977, %v3428
    %v3433 = vsub.f32 %v2982, %v3428
    %v3434 = vsub.f32 %v2987, %v3428
    %v3435 = vsub.f32 %v2992, %v3428
    %v3436 = vsub.f32 %v2997, %v3428
    %v3437 = vsub.f32 %v3002, %v3428
    %v3438 = vsub.f32 %v3007, %v3428
    %v3439 = vsub.f32 %v3012, %v3428
    %v3440 = vsub.f32 %v3017, %v3428
    %v3441 = vsub.f32 %v3022, %v3428
    %v3442 = vsub.f32 %v3027, %v3428
    %v3443 = vsub.f32 %v3032, %v3428
    %v3444 = vsub.f32 %v3037, %v3428
    %v3445 = vsub.f32 %v3042, %v3428
    %v3446 = vsub.f32 %v3047, %v3428
    %v3447 = vsub.f32 %v3052, %v3428
    %v3448 = vsub.f32 %v3057, %v3428
    %v3449 = vsub.f32 %v3062, %v3428
    %v3450 = vsub.f32 %v3067, %v3428
    %v3451 = vsub.f32 %v3072, %v3428
    %v3452 = vsub.f32 %v3077, %v3428
    %v3453 = vsub.f32 %v3082, %v3428
    %v3454 = vsub.f32 %v3087, %v3428
    %v3455 = vsub.f32 %v3092, %v3428
    %v3456 = vsub.f32 %v3097, %v3428
    %v3457 = vsub.f32 %v3102, %v3428
    %v3458 = vsub.f32 %v3107, %v3428
    %v3459 = vsub.f32 %v3112, %v3428
    %v3460 = vsub.f32 %v3117, %v3428
    %v3461 = vmul.f32 %v3429, %v3429
    %v3462 = vmul.f32 %v3430, %v3430
    %v3463 = vmul.f32 %v3431, %v3431
    %v3464 = vmul.f32 %v3432, %v3432
    %v3465 = vmul.f32 %v3433, %v3433
    %v3466 = vmul.f32 %v3434, %v3434
    %v3467 = vmul.f32 %v3435, %v3435
    %v3468 = vmul.f32 %v3436, %v3436
    %v3469 = vmul.f32 %v3437, %v3437
    %v3470 = vmul.f32 %v3438, %v3438
    %v3471 = vmul.f32 %v3439, %v3439
    %v3472 = vmul.f32 %v3440, %v3440
    %v3473 = vmul.f32 %v3441, %v3441
    %v3474 = vmul.f32 %v3442, %v3442
    %v3475 = vmul.f32 %v3443, %v3443
    %v3476 = vmul.f32 %v3444, %v3444
    %v3477 = vmul.f32 %v3445, %v3445
    %v3478 = vmul.f32 %v3446, %v3446
    %v3479 = vmul.f32 %v3447, %v3447
    %v3480 = vmul.f32 %v3448, %v3448
    %v3481 = vmul.f32 %v3449, %v3449
    %v3482 = vmul.f32 %v3450, %v3450
    %v3483 = vmul.f32 %v3451, %v3451
    %v3484 = vmul.f32 %v3452, %v3452
    %v3485 = vmul.f32 %v3453, %v3453
    %v3486 = vmul.f32 %v3454, %v3454
    %v3487 = vmul.f32 %v3455, %v3455
    %v3488 = vmul.f32 %v3456, %v3456
    %v3489 = vmul.f32 %v3457, %v3457
    %v3490 = vmul.f32 %v3458, %v3458
    %v3491 = vmul.f32 %v3459, %v3459
    %v3492 = vmul.f32 %v3460, %v3460
    %v3493 = vsel %vm3357, %v3461, 0.0
    %v3494 = vsel %vm3357, %v3462, 0.0
    %v3495 = vadd.f32 %v3493, %v3494
    %v3496 = vsel %vm3357, %v3463, 0.0
    %v3497 = vadd.f32 %v3495, %v3496
    %v3498 = vsel %vm3357, %v3464, 0.0
    %v3499 = vadd.f32 %v3497, %v3498
    %v3500 = vsel %vm3357, %v3465, 0.0
    %v3501 = vadd.f32 %v3499, %v3500
    %v3502 = vsel %vm3357, %v3466, 0.0
    %v3503 = vadd.f32 %v3501, %v3502
    %v3504 = vsel %vm3357, %v3467, 0.0
    %v3505 = vadd.f32 %v3503, %v3504
    %v3506 = vsel %vm3357, %v3468, 0.0
    %v3507 = vadd.f32 %v3505, %v3506
    %v3508 = vsel %vm3357, %v3469, 0.0
    %v3509 = vadd.f32 %v3507, %v3508
    %v3510 = vsel %vm3357, %v3470, 0.0
    %v3511 = vadd.f32 %v3509, %v3510
    %v3512 = vsel %vm3357, %v3471, 0.0
    %v3513 = vadd.f32 %v3511, %v3512
    %v3514 = vsel %vm3357, %v3472, 0.0
    %v3515 = vadd.f32 %v3513, %v3514
    %v3516 = vsel %vm3357, %v3473, 0.0
    %v3517 = vadd.f32 %v3515, %v3516
    %v3518 = vsel %vm3357, %v3474, 0.0
    %v3519 = vadd.f32 %v3517, %v3518
    %v3520 = vsel %vm3357, %v3475, 0.0
    %v3521 = vadd.f32 %v3519, %v3520
    %v3522 = vsel %vm3357, %v3476, 0.0
    %v3523 = vadd.f32 %v3521, %v3522
    %v3524 = vsel %vm3357, %v3477, 0.0
    %v3525 = vadd.f32 %v3523, %v3524
    %v3526 = vsel %vm3357, %v3478, 0.0
    %v3527 = vadd.f32 %v3525, %v3526
    %v3528 = vsel %vm3357, %v3479, 0.0
    %v3529 = vadd.f32 %v3527, %v3528
    %v3530 = vsel %vm3357, %v3480, 0.0
    %v3531 = vadd.f32 %v3529, %v3530
    %v3532 = vsel %vm3357, %v3481, 0.0
    %v3533 = vadd.f32 %v3531, %v3532
    %v3534 = vsel %vm3357, %v3482, 0.0
    %v3535 = vadd.f32 %v3533, %v3534
    %v3536 = vsel %vm3357, %v3483, 0.0
    %v3537 = vadd.f32 %v3535, %v3536
    %v3538 = vsel %vm3357, %v3484, 0.0
    %v3539 = vadd.f32 %v3537, %v3538
    %v3540 = vsel %vm3357, %v3485, 0.0
    %v3541 = vadd.f32 %v3539, %v3540
    %v3542 = vsel %vm3357, %v3486, 0.0
    %v3543 = vadd.f32 %v3541, %v3542
    %v3544 = vsel %vm3357, %v3487, 0.0
    %v3545 = vadd.f32 %v3543, %v3544
    %v3546 = vsel %vm3357, %v3488, 0.0
    %v3547 = vadd.f32 %v3545, %v3546
    %v3548 = vsel %vm3357, %v3489, 0.0
    %v3549 = vadd.f32 %v3547, %v3548
    %v3550 = vsel %vm3357, %v3490, 0.0
    %v3551 = vadd.f32 %v3549, %v3550
    %v3552 = vsel %vm3357, %v3491, 0.0
    %v3553 = vadd.f32 %v3551, %v3552
    %v3554 = vsel %vm3357, %v3492, 0.0
    %v3555 = vadd.f32 %v3553, %v3554
    %v3556 = vrot.slane %v3555, 4
    %v3557 = vadd.f32 %v3555, %v3556
    %v3558 = vrot.slane %v3557, 2
    %v3559 = vadd.f32 %v3557, %v3558
    %v3560 = vrot.slane %v3559, 1
    %v3561 = vadd.f32 %v3559, %v3560
    %v3562 = vmul.f32 %v3561, %v3427
    %v3563 = vadd.f32 %v3562, 0.001
    %v3564 = vrsqrt.pop %v3563
    %v3565 = vmul.f32 %v3429, %v3564
    %v3566 = vmul.f32 %v3430, %v3564
    %v3567 = vmul.f32 %v3431, %v3564
    %v3568 = vmul.f32 %v3432, %v3564
    %v3569 = vmul.f32 %v3433, %v3564
    %v3570 = vmul.f32 %v3434, %v3564
    %v3571 = vmul.f32 %v3435, %v3564
    %v3572 = vmul.f32 %v3436, %v3564
    %v3573 = vmul.f32 %v3437, %v3564
    %v3574 = vmul.f32 %v3438, %v3564
    %v3575 = vmul.f32 %v3439, %v3564
    %v3576 = vmul.f32 %v3440, %v3564
    %v3577 = vmul.f32 %v3441, %v3564
    %v3578 = vmul.f32 %v3442, %v3564
    %v3579 = vmul.f32 %v3443, %v3564
    %v3580 = vmul.f32 %v3444, %v3564
    %v3581 = vmul.f32 %v3445, %v3564
    %v3582 = vmul.f32 %v3446, %v3564
    %v3583 = vmul.f32 %v3447, %v3564
    %v3584 = vmul.f32 %v3448, %v3564
    %v3585 = vmul.f32 %v3449, %v3564
    %v3586 = vmul.f32 %v3450, %v3564
    %v3587 = vmul.f32 %v3451, %v3564
    %v3588 = vmul.f32 %v3452, %v3564
    %v3589 = vmul.f32 %v3453, %v3564
    %v3590 = vmul.f32 %v3454, %v3564
    %v3591 = vmul.f32 %v3455, %v3564
    %v3592 = vmul.f32 %v3456, %v3564
    %v3593 = vmul.f32 %v3457, %v3564
    %v3594 = vmul.f32 %v3458, %v3564
    %v3595 = vmul.f32 %v3459, %v3564
    %v3596 = vmul.f32 %v3460, %v3564
    %v3597 = vsel %vm3357, %v3199, 0.0
    %v3598 = vsel %vm3357, %v3204, 0.0
    %v3599 = vadd.f32 %v3597, %v3598
    %v3600 = vsel %vm3357, %v3209, 0.0
    %v3601 = vadd.f32 %v3599, %v3600
    %v3602 = vsel %vm3357, %v3214, 0.0
    %v3603 = vadd.f32 %v3601, %v3602
    %v3604 = vsel %vm3357, %v3219, 0.0
    %v3605 = vadd.f32 %v3603, %v3604
    %v3606 = vsel %vm3357, %v3224, 0.0
    %v3607 = vadd.f32 %v3605, %v3606
    %v3608 = vsel %vm3357, %v3229, 0.0
    %v3609 = vadd.f32 %v3607, %v3608
    %v3610 = vsel %vm3357, %v3234, 0.0
    %v3611 = vadd.f32 %v3609, %v3610
    %v3612 = vsel %vm3357, %v3239, 0.0
    %v3613 = vadd.f32 %v3611, %v3612
    %v3614 = vsel %vm3357, %v3244, 0.0
    %v3615 = vadd.f32 %v3613, %v3614
    %v3616 = vsel %vm3357, %v3249, 0.0
    %v3617 = vadd.f32 %v3615, %v3616
    %v3618 = vsel %vm3357, %v3254, 0.0
    %v3619 = vadd.f32 %v3617, %v3618
    %v3620 = vsel %vm3357, %v3259, 0.0
    %v3621 = vadd.f32 %v3619, %v3620
    %v3622 = vsel %vm3357, %v3264, 0.0
    %v3623 = vadd.f32 %v3621, %v3622
    %v3624 = vsel %vm3357, %v3269, 0.0
    %v3625 = vadd.f32 %v3623, %v3624
    %v3626 = vsel %vm3357, %v3274, 0.0
    %v3627 = vadd.f32 %v3625, %v3626
    %v3628 = vsel %vm3357, %v3279, 0.0
    %v3629 = vadd.f32 %v3627, %v3628
    %v3630 = vsel %vm3357, %v3284, 0.0
    %v3631 = vadd.f32 %v3629, %v3630
    %v3632 = vsel %vm3357, %v3289, 0.0
    %v3633 = vadd.f32 %v3631, %v3632
    %v3634 = vsel %vm3357, %v3294, 0.0
    %v3635 = vadd.f32 %v3633, %v3634
    %v3636 = vsel %vm3357, %v3299, 0.0
    %v3637 = vadd.f32 %v3635, %v3636
    %v3638 = vsel %vm3357, %v3304, 0.0
    %v3639 = vadd.f32 %v3637, %v3638
    %v3640 = vsel %vm3357, %v3309, 0.0
    %v3641 = vadd.f32 %v3639, %v3640
    %v3642 = vsel %vm3357, %v3314, 0.0
    %v3643 = vadd.f32 %v3641, %v3642
    %v3644 = vsel %vm3357, %v3319, 0.0
    %v3645 = vadd.f32 %v3643, %v3644
    %v3646 = vsel %vm3357, %v3324, 0.0
    %v3647 = vadd.f32 %v3645, %v3646
    %v3648 = vsel %vm3357, %v3329, 0.0
    %v3649 = vadd.f32 %v3647, %v3648
    %v3650 = vsel %vm3357, %v3334, 0.0
    %v3651 = vadd.f32 %v3649, %v3650
    %v3652 = vsel %vm3357, %v3339, 0.0
    %v3653 = vadd.f32 %v3651, %v3652
    %v3654 = vsel %vm3357, %v3344, 0.0
    %v3655 = vadd.f32 %v3653, %v3654
    %v3656 = vsel %vm3357, %v3349, 0.0
    %v3657 = vadd.f32 %v3655, %v3656
    %v3658 = vsel %vm3357, %v3354, 0.0
    %v3659 = vadd.f32 %v3657, %v3658
    %v3660 = vrot.slane %v3659, 4
    %v3661 = vadd.f32 %v3659, %v3660
    %v3662 = vrot.slane %v3661, 2
    %v3663 = vadd.f32 %v3661, %v3662
    %v3664 = vrot.slane %v3663, 1
    %v3665 = vadd.f32 %v3663, %v3664
    %v3666 = vmul.f32 %v3665, %v3427
    %v3667 = vsub.f32 %v3199, %v3666
    %v3668 = vsub.f32 %v3204, %v3666
    %v3669 = vsub.f32 %v3209, %v3666
    %v3670 = vsub.f32 %v3214, %v3666
    %v3671 = vsub.f32 %v3219, %v3666
    %v3672 = vsub.f32 %v3224, %v3666
    %v3673 = vsub.f32 %v3229, %v3666
    %v3674 = vsub.f32 %v3234, %v3666
    %v3675 = vsub.f32 %v3239, %v3666
    %v3676 = vsub.f32 %v3244, %v3666
    %v3677 = vsub.f32 %v3249, %v3666
    %v3678 = vsub.f32 %v3254, %v3666
    %v3679 = vsub.f32 %v3259, %v3666
    %v3680 = vsub.f32 %v3264, %v3666
    %v3681 = vsub.f32 %v3269, %v3666
    %v3682 = vsub.f32 %v3274, %v3666
    %v3683 = vsub.f32 %v3279, %v3666
    %v3684 = vsub.f32 %v3284, %v3666
    %v3685 = vsub.f32 %v3289, %v3666
    %v3686 = vsub.f32 %v3294, %v3666
    %v3687 = vsub.f32 %v3299, %v3666
    %v3688 = vsub.f32 %v3304, %v3666
    %v3689 = vsub.f32 %v3309, %v3666
    %v3690 = vsub.f32 %v3314, %v3666
    %v3691 = vsub.f32 %v3319, %v3666
    %v3692 = vsub.f32 %v3324, %v3666
    %v3693 = vsub.f32 %v3329, %v3666
    %v3694 = vsub.f32 %v3334, %v3666
    %v3695 = vsub.f32 %v3339, %v3666
    %v3696 = vsub.f32 %v3344, %v3666
    %v3697 = vsub.f32 %v3349, %v3666
    %v3698 = vsub.f32 %v3354, %v3666
    %v3699 = vmul.f32 %v3667, %v3667
    %v3700 = vmul.f32 %v3668, %v3668
    %v3701 = vmul.f32 %v3669, %v3669
    %v3702 = vmul.f32 %v3670, %v3670
    %v3703 = vmul.f32 %v3671, %v3671
    %v3704 = vmul.f32 %v3672, %v3672
    %v3705 = vmul.f32 %v3673, %v3673
    %v3706 = vmul.f32 %v3674, %v3674
    %v3707 = vmul.f32 %v3675, %v3675
    %v3708 = vmul.f32 %v3676, %v3676
    %v3709 = vmul.f32 %v3677, %v3677
    %v3710 = vmul.f32 %v3678, %v3678
    %v3711 = vmul.f32 %v3679, %v3679
    %v3712 = vmul.f32 %v3680, %v3680
    %v3713 = vmul.f32 %v3681, %v3681
    %v3714 = vmul.f32 %v3682, %v3682
    %v3715 = vmul.f32 %v3683, %v3683
    %v3716 = vmul.f32 %v3684, %v3684
    %v3717 = vmul.f32 %v3685, %v3685
    %v3718 = vmul.f32 %v3686, %v3686
    %v3719 = vmul.f32 %v3687, %v3687
    %v3720 = vmul.f32 %v3688, %v3688
    %v3721 = vmul.f32 %v3689, %v3689
    %v3722 = vmul.f32 %v3690, %v3690
    %v3723 = vmul.f32 %v3691, %v3691
    %v3724 = vmul.f32 %v3692, %v3692
    %v3725 = vmul.f32 %v3693, %v3693
    %v3726 = vmul.f32 %v3694, %v3694
    %v3727 = vmul.f32 %v3695, %v3695
    %v3728 = vmul.f32 %v3696, %v3696
    %v3729 = vmul.f32 %v3697, %v3697
    %v3730 = vmul.f32 %v3698, %v3698
    %v3731 = vsel %vm3357, %v3699, 0.0
    %v3732 = vsel %vm3357, %v3700, 0.0
    %v3733 = vadd.f32 %v3731, %v3732
    %v3734 = vsel %vm3357, %v3701, 0.0
    %v3735 = vadd.f32 %v3733, %v3734
    %v3736 = vsel %vm3357, %v3702, 0.0
    %v3737 = vadd.f32 %v3735, %v3736
    %v3738 = vsel %vm3357, %v3703, 0.0
    %v3739 = vadd.f32 %v3737, %v3738
    %v3740 = vsel %vm3357, %v3704, 0.0
    %v3741 = vadd.f32 %v3739, %v3740
    %v3742 = vsel %vm3357, %v3705, 0.0
    %v3743 = vadd.f32 %v3741, %v3742
    %v3744 = vsel %vm3357, %v3706, 0.0
    %v3745 = vadd.f32 %v3743, %v3744
    %v3746 = vsel %vm3357, %v3707, 0.0
    %v3747 = vadd.f32 %v3745, %v3746
    %v3748 = vsel %vm3357, %v3708, 0.0
    %v3749 = vadd.f32 %v3747, %v3748
    %v3750 = vsel %vm3357, %v3709, 0.0
    %v3751 = vadd.f32 %v3749, %v3750
    %v3752 = vsel %vm3357, %v3710, 0.0
    %v3753 = vadd.f32 %v3751, %v3752
    %v3754 = vsel %vm3357, %v3711, 0.0
    %v3755 = vadd.f32 %v3753, %v3754
    %v3756 = vsel %vm3357, %v3712, 0.0
    %v3757 = vadd.f32 %v3755, %v3756
    %v3758 = vsel %vm3357, %v3713, 0.0
    %v3759 = vadd.f32 %v3757, %v3758
    %v3760 = vsel %vm3357, %v3714, 0.0
    %v3761 = vadd.f32 %v3759, %v3760
    %v3762 = vsel %vm3357, %v3715, 0.0
    %v3763 = vadd.f32 %v3761, %v3762
    %v3764 = vsel %vm3357, %v3716, 0.0
    %v3765 = vadd.f32 %v3763, %v3764
    %v3766 = vsel %vm3357, %v3717, 0.0
    %v3767 = vadd.f32 %v3765, %v3766
    %v3768 = vsel %vm3357, %v3718, 0.0
    %v3769 = vadd.f32 %v3767, %v3768
    %v3770 = vsel %vm3357, %v3719, 0.0
    %v3771 = vadd.f32 %v3769, %v3770
    %v3772 = vsel %vm3357, %v3720, 0.0
    %v3773 = vadd.f32 %v3771, %v3772
    %v3774 = vsel %vm3357, %v3721, 0.0
    %v3775 = vadd.f32 %v3773, %v3774
    %v3776 = vsel %vm3357, %v3722, 0.0
    %v3777 = vadd.f32 %v3775, %v3776
    %v3778 = vsel %vm3357, %v3723, 0.0
    %v3779 = vadd.f32 %v3777, %v3778
    %v3780 = vsel %vm3357, %v3724, 0.0
    %v3781 = vadd.f32 %v3779, %v3780
    %v3782 = vsel %vm3357, %v3725, 0.0
    %v3783 = vadd.f32 %v3781, %v3782
    %v3784 = vsel %vm3357, %v3726, 0.0
    %v3785 = vadd.f32 %v3783, %v3784
    %v3786 = vsel %vm3357, %v3727, 0.0
    %v3787 = vadd.f32 %v3785, %v3786
    %v3788 = vsel %vm3357, %v3728, 0.0
    %v3789 = vadd.f32 %v3787, %v3788
    %v3790 = vsel %vm3357, %v3729, 0.0
    %v3791 = vadd.f32 %v3789, %v3790
    %v3792 = vsel %vm3357, %v3730, 0.0
    %v3793 = vadd.f32 %v3791, %v3792
    %v3794 = vrot.slane %v3793, 4
    %v3795 = vadd.f32 %v3793, %v3794
    %v3796 = vrot.slane %v3795, 2
    %v3797 = vadd.f32 %v3795, %v3796
    %v3798 = vrot.slane %v3797, 1
    %v3799 = vadd.f32 %v3797, %v3798
    %v3800 = vmul.f32 %v3799, %v3427
    %v3801 = vadd.f32 %v3800, 0.001
    %v3802 = vrsqrt.pop %v3801
    %v3803 = vmul.f32 %v3667, %v3802
    %v3804 = vmul.f32 %v3668, %v3802
    %v3805 = vmul.f32 %v3669, %v3802
    %v3806 = vmul.f32 %v3670, %v3802
    %v3807 = vmul.f32 %v3671, %v3802
    %v3808 = vmul.f32 %v3672, %v3802
    %v3809 = vmul.f32 %v3673, %v3802
    %v3810 = vmul.f32 %v3674, %v3802
    %v3811 = vmul.f32 %v3675, %v3802
    %v3812 = vmul.f32 %v3676, %v3802
    %v3813 = vmul.f32 %v3677, %v3802
    %v3814 = vmul.f32 %v3678, %v3802
    %v3815 = vmul.f32 %v3679, %v3802
    %v3816 = vmul.f32 %v3680, %v3802
    %v3817 = vmul.f32 %v3681, %v3802
    %v3818 = vmul.f32 %v3682, %v3802
    %v3819 = vmul.f32 %v3683, %v3802
    %v3820 = vmul.f32 %v3684, %v3802
    %v3821 = vmul.f32 %v3685, %v3802
    %v3822 = vmul.f32 %v3686, %v3802
    %v3823 = vmul.f32 %v3687, %v3802
    %v3824 = vmul.f32 %v3688, %v3802
    %v3825 = vmul.f32 %v3689, %v3802
    %v3826 = vmul.f32 %v3690, %v3802
    %v3827 = vmul.f32 %v3691, %v3802
    %v3828 = vmul.f32 %v3692, %v3802
    %v3829 = vmul.f32 %v3693, %v3802
    %v3830 = vmul.f32 %v3694, %v3802
    %v3831 = vmul.f32 %v3695, %v3802
    %v3832 = vmul.f32 %v3696, %v3802
    %v3833 = vmul.f32 %v3697, %v3802
    %v3834 = vmul.f32 %v3698, %v3802
    %v3835 = vmul.f32 %v3803, 0.5
    %v3836 = vmul.f32 %v3804, 0.5
    %v3837 = vmul.f32 %v3805, 0.5
    %v3838 = vmul.f32 %v3806, 0.5
    %v3839 = vmul.f32 %v3807, 0.5
    %v3840 = vmul.f32 %v3808, 0.5
    %v3841 = vmul.f32 %v3809, 0.5
    %v3842 = vmul.f32 %v3810, 0.5
    %v3843 = vmul.f32 %v3811, 0.5
    %v3844 = vmul.f32 %v3812, 0.5
    %v3845 = vmul.f32 %v3813, 0.5
    %v3846 = vmul.f32 %v3814, 0.5
    %v3847 = vmul.f32 %v3815, 0.5
    %v3848 = vmul.f32 %v3816, 0.5
    %v3849 = vmul.f32 %v3817, 0.5
    %v3850 = vmul.f32 %v3818, 0.5
    %v3851 = vmul.f32 %v3819, 0.5
    %v3852 = vmul.f32 %v3820, 0.5
    %v3853 = vmul.f32 %v3821, 0.5
    %v3854 = vmul.f32 %v3822, 0.5
    %v3855 = vmul.f32 %v3823, 0.5
    %v3856 = vmul.f32 %v3824, 0.5
    %v3857 = vmul.f32 %v3825, 0.5
    %v3858 = vmul.f32 %v3826, 0.5
    %v3859 = vmul.f32 %v3827, 0.5
    %v3860 = vmul.f32 %v3828, 0.5
    %v3861 = vmul.f32 %v3829, 0.5
    %v3862 = vmul.f32 %v3830, 0.5
    %v3863 = vmul.f32 %v3831, 0.5
    %v3864 = vmul.f32 %v3832, 0.5
    %v3865 = vmul.f32 %v3833, 0.5
    %v3866 = vmul.f32 %v3834, 0.5
    %v3867 = vmul.f32 %v3835, 1.442695
    %v3868 = vpow.pop %v3867
    %v3869 = vmul.f32 %v3836, 1.442695
    %v3870 = vpow.pop %v3869
    %v3871 = vmul.f32 %v3837, 1.442695
    %v3872 = vpow.pop %v3871
    %v3873 = vmul.f32 %v3838, 1.442695
    %v3874 = vpow.pop %v3873
    %v3875 = vmul.f32 %v3839, 1.442695
    %v3876 = vpow.pop %v3875
    %v3877 = vmul.f32 %v3840, 1.442695
    %v3878 = vpow.pop %v3877
    %v3879 = vmul.f32 %v3841, 1.442695
    %v3880 = vpow.pop %v3879
    %v3881 = vmul.f32 %v3842, 1.442695
    %v3882 = vpow.pop %v3881
    %v3883 = vmul.f32 %v3843, 1.442695
    %v3884 = vpow.pop %v3883
    %v3885 = vmul.f32 %v3844, 1.442695
    %v3886 = vpow.pop %v3885
    %v3887 = vmul.f32 %v3845, 1.442695
    %v3888 = vpow.pop %v3887
    %v3889 = vmul.f32 %v3846, 1.442695
    %v3890 = vpow.pop %v3889
    %v3891 = vmul.f32 %v3847, 1.442695
    %v3892 = vpow.pop %v3891
    %v3893 = vmul.f32 %v3848, 1.442695
    %v3894 = vpow.pop %v3893
    %v3895 = vmul.f32 %v3849, 1.442695
    %v3896 = vpow.pop %v3895
    %v3897 = vmul.f32 %v3850, 1.442695
    %v3898 = vpow.pop %v3897
    %v3899 = vmul.f32 %v3851, 1.442695
    %v3900 = vpow.pop %v3899
    %v3901 = vmul.f32 %v3852, 1.442695
    %v3902 = vpow.pop %v3901
    %v3903 = vmul.f32 %v3853, 1.442695
    %v3904 = vpow.pop %v3903
    %v3905 = vmul.f32 %v3854, 1.442695
    %v3906 = vpow.pop %v3905
    %v3907 = vmul.f32 %v3855, 1.442695
    %v3908 = vpow.pop %v3907
    %v3909 = vmul.f32 %v3856, 1.442695
    %v3910 = vpow.pop %v3909
    %v3911 = vmul.f32 %v3857, 1.442695
    %v3912 = vpow.pop %v3911
    %v3913 = vmul.f32 %v3858, 1.442695
    %v3914 = vpow.pop %v3913
    %v3915 = vmul.f32 %v3859, 1.442695
    %v3916 = vpow.pop %v3915
    %v3917 = vmul.f32 %v3860, 1.442695
    %v3918 = vpow.pop %v3917
    %v3919 = vmul.f32 %v3861, 1.442695
    %v3920 = vpow.pop %v3919
    %v3921 = vmul.f32 %v3862, 1.442695
    %v3922 = vpow.pop %v3921
    %v3923 = vmul.f32 %v3863, 1.442695
    %v3924 = vpow.pop %v3923
    %v3925 = vmul.f32 %v3864, 1.442695
    %v3926 = vpow.pop %v3925
    %v3927 = vmul.f32 %v3865, 1.442695
    %v3928 = vpow.pop %v3927
    %v3929 = vmul.f32 %v3866, 1.442695
    %v3930 = vpow.pop %v3929
    %v3931 = vmul.f32 %v3868, %v3868
    %v3932 = vmul.f32 %v3870, %v3870
    %v3933 = vmul.f32 %v3872, %v3872
    %v3934 = vmul.f32 %v3874, %v3874
    %v3935 = vmul.f32 %v3876, %v3876
    %v3936 = vmul.f32 %v3878, %v3878
    %v3937 = vmul.f32 %v3880, %v3880
    %v3938 = vmul.f32 %v3882, %v3882
    %v3939 = vmul.f32 %v3884, %v3884
    %v3940 = vmul.f32 %v3886, %v3886
    %v3941 = vmul.f32 %v3888, %v3888
    %v3942 = vmul.f32 %v3890, %v3890
    %v3943 = vmul.f32 %v3892, %v3892
    %v3944 = vmul.f32 %v3894, %v3894
    %v3945 = vmul.f32 %v3896, %v3896
    %v3946 = vmul.f32 %v3898, %v3898
    %v3947 = vmul.f32 %v3900, %v3900
    %v3948 = vmul.f32 %v3902, %v3902
    %v3949 = vmul.f32 %v3904, %v3904
    %v3950 = vmul.f32 %v3906, %v3906
    %v3951 = vmul.f32 %v3908, %v3908
    %v3952 = vmul.f32 %v3910, %v3910
    %v3953 = vmul.f32 %v3912, %v3912
    %v3954 = vmul.f32 %v3914, %v3914
    %v3955 = vmul.f32 %v3916, %v3916
    %v3956 = vmul.f32 %v3918, %v3918
    %v3957 = vmul.f32 %v3920, %v3920
    %v3958 = vmul.f32 %v3922, %v3922
    %v3959 = vmul.f32 %v3924, %v3924
    %v3960 = vmul.f32 %v3926, %v3926
    %v3961 = vmul.f32 %v3928, %v3928
    %v3962 = vmul.f32 %v3930, %v3930
    %v3963 = vld [vmem:[%s2] sm:$0xff]
    %v3964 = vld [vmem:[%s2 + $0x8] sm:$0xff]
    %v3965 = vld [vmem:[%s2 + $0x10] sm:$0xff]
    %v3966 = vld [vmem:[%s2 + $0x18] sm:$0xff]
    %v3967 = vld [vmem:[%s2 + $0x20] sm:$0xff]
    %v3968 = vld [vmem:[%s2 + $0x28] sm:$0xff]
    %v3969 = vld [vmem:[%s2 + $0x30] sm:$0xff]
    %v3970 = vld [vmem:[%s2 + $0x38] sm:$0xff]
    %v3971 = vld [vmem:[%s2 + $0x40] sm:$0xff]
    %v3972 = vld [vmem:[%s2 + $0x48] sm:$0xff]
    %v3973 = vld [vmem:[%s2 + $0x50] sm:$0xff]
    %v3974 = vld [vmem:[%s2 + $0x58] sm:$0xff]
    %v3975 = vld [vmem:[%s2 + $0x60] sm:$0xff]
    %v3976 = vld [vmem:[%s2 + $0x68] sm:$0xff]
    %v3977 = vld [vmem:[%s2 + $0x70] sm:$0xff]
    %v3978 = vld [vmem:[%s2 + $0x78] sm:$0xff]
    %v3979 = vld [vmem:[%s2 + $0x80] sm:$0xff]
    %v3980 = vld [vmem:[%s2 + $0x88] sm:$0xff]
    %v3981 = vld [vmem:[%s2 + $0x90] sm:$0xff]
    %v3982 = vld [vmem:[%s2 + $0x98] sm:$0xff]
    %v3983 = vld [vmem:[%s2 + $0xa0] sm:$0xff]
    %v3984 = vld [vmem:[%s2 + $0xa8] sm:$0xff]
    %v3985 = vld [vmem:[%s2 + $0xb0] sm:$0xff]
    %v3986 = vld [vmem:[%s2 + $0xb8] sm:$0xff]
    %v3987 = vld [vmem:[%s2 + $0xc0] sm:$0xff]
    %v3988 = vld [vmem:[%s2 + $0xc8] sm:$0xff]
    %v3989 = vld [vmem:[%s2 + $0xd0] sm:$0xff]
    %v3990 = vld [vmem:[%s2 + $0xd8] sm:$0xff]
    %v3991 = vld [vmem:[%s2 + $0xe0] sm:$0xff]
    %v3992 = vld [vmem:[%s2 + $0xe8] sm:$0xff]
    %v3993 = vld [vmem:[%s2 + $0xf0] sm:$0xff]
    %v3994 = vld [vmem:[%s2 + $0xf8] sm:$0xff]
    %v3995 = vmul.f32 %v3868, %v3963
    %v3996 = vmul.f32 %v3870, %v3964
    %v3997 = vmul.f32 %v3872, %v3965
    %v3998 = vmul.f32 %v3874, %v3966
    %v3999 = vmul.f32 %v3876, %v3967
    %v4000 = vmul.f32 %v3878, %v3968
    %v4001 = vmul.f32 %v3880, %v3969
    %v4002 = vmul.f32 %v3882, %v3970
    %v4003 = vmul.f32 %v3884, %v3971
    %v4004 = vmul.f32 %v3886, %v3972
    %v4005 = vmul.f32 %v3888, %v3973
    %v4006 = vmul.f32 %v3890, %v3974
    %v4007 = vmul.f32 %v3892, %v3975
    %v4008 = vmul.f32 %v3894, %v3976
    %v4009 = vmul.f32 %v3896, %v3977
    %v4010 = vmul.f32 %v3898, %v3978
    %v4011 = vmul.f32 %v3900, %v3979
    %v4012 = vmul.f32 %v3902, %v3980
    %v4013 = vmul.f32 %v3904, %v3981
    %v4014 = vmul.f32 %v3906, %v3982
    %v4015 = vmul.f32 %v3908, %v3983
    %v4016 = vmul.f32 %v3910, %v3984
    %v4017 = vmul.f32 %v3912, %v3985
    %v4018 = vmul.f32 %v3914, %v3986
    %v4019 = vmul.f32 %v3916, %v3987
    %v4020 = vmul.f32 %v3918, %v3988
    %v4021 = vmul.f32 %v3920, %v3989
    %v4022 = vmul.f32 %v3922, %v3990
    %v4023 = vmul.f32 %v3924, %v3991
    %v4024 = vmul.f32 %v3926, %v3992
    %v4025 = vmul.f32 %v3928, %v3993
    %v4026 = vmul.f32 %v3930, %v3994
    %v4027 = vadd.f32 %v3565, %v3995
    %v4028 = vadd.f32 %v3566, %v3996
    %v4029 = vadd.f32 %v3567, %v3997
    %v4030 = vadd.f32 %v3568, %v3998
    %v4031 = vadd.f32 %v3569, %v3999
    %v4032 = vadd.f32 %v3570, %v4000
    %v4033 = vadd.f32 %v3571, %v4001
    %v4034 = vadd.f32 %v3572, %v4002
    %v4035 = vadd.f32 %v3573, %v4003
    %v4036 = vadd.f32 %v3574, %v4004
    %v4037 = vadd.f32 %v3575, %v4005
    %v4038 = vadd.f32 %v3576, %v4006
    %v4039 = vadd.f32 %v3577, %v4007
    %v4040 = vadd.f32 %v3578, %v4008
    %v4041 = vadd.f32 %v3579, %v4009
    %v4042 = vadd.f32 %v3580, %v4010
    %v4043 = vadd.f32 %v3581, %v4011
    %v4044 = vadd.f32 %v3582, %v4012
    %v4045 = vadd.f32 %v3583, %v4013
    %v4046 = vadd.f32 %v3584, %v4014
    %v4047 = vadd.f32 %v3585, %v4015
    %v4048 = vadd.f32 %v3586, %v4016
    %v4049 = vadd.f32 %v3587, %v4017
    %v4050 = vadd.f32 %v3588, %v4018
    %v4051 = vadd.f32 %v3589, %v4019
    %v4052 = vadd.f32 %v3590, %v4020
    %v4053 = vadd.f32 %v3591, %v4021
    %v4054 = vadd.f32 %v3592, %v4022
    %v4055 = vadd.f32 %v3593, %v4023
    %v4056 = vadd.f32 %v3594, %v4024
    %v4057 = vadd.f32 %v3595, %v4025
    %v4058 = vadd.f32 %v3596, %v4026
    %v4059 = vsel %vm3357, %v4027, -inf
    %4060 = vmax.xlane.f32.xlu0 %v4059
    %v4061 = vpop.xlane.xlu0 %4060
    %v4062 = vsel %vm3357, %v4028, -inf
    %4063 = vmax.xlane.f32.xlu0 %v4062
    %v4064 = vpop.xlane.xlu0 %4063
    %v4065 = vsel %vm3357, %v4029, -inf
    %4066 = vmax.xlane.f32.xlu0 %v4065
    %v4067 = vpop.xlane.xlu0 %4066
    %v4068 = vsel %vm3357, %v4030, -inf
    %4069 = vmax.xlane.f32.xlu0 %v4068
    %v4070 = vpop.xlane.xlu0 %4069
    %v4071 = vsel %vm3357, %v4031, -inf
    %4072 = vmax.xlane.f32.xlu0 %v4071
    %v4073 = vpop.xlane.xlu0 %4072
    %v4074 = vsel %vm3357, %v4032, -inf
    %4075 = vmax.xlane.f32.xlu0 %v4074
    %v4076 = vpop.xlane.xlu0 %4075
    %v4077 = vsel %vm3357, %v4033, -inf
    %4078 = vmax.xlane.f32.xlu0 %v4077
    %v4079 = vpop.xlane.xlu0 %4078
    %v4080 = vsel %vm3357, %v4034, -inf
    %4081 = vmax.xlane.f32.xlu0 %v4080
    %v4082 = vpop.xlane.xlu0 %4081
    %v4083 = vsel %vm3357, %v4035, -inf
    %4084 = vmax.xlane.f32.xlu0 %v4083
    %v4085 = vpop.xlane.xlu0 %4084
    %v4086 = vsel %vm3357, %v4036, -inf
    %4087 = vmax.xlane.f32.xlu0 %v4086
    %v4088 = vpop.xlane.xlu0 %4087
    %v4089 = vsel %vm3357, %v4037, -inf
    %4090 = vmax.xlane.f32.xlu0 %v4089
    %v4091 = vpop.xlane.xlu0 %4090
    %v4092 = vsel %vm3357, %v4038, -inf
    %4093 = vmax.xlane.f32.xlu0 %v4092
    %v4094 = vpop.xlane.xlu0 %4093
    %v4095 = vsel %vm3357, %v4039, -inf
    %4096 = vmax.xlane.f32.xlu0 %v4095
    %v4097 = vpop.xlane.xlu0 %4096
    %v4098 = vsel %vm3357, %v4040, -inf
    %4099 = vmax.xlane.f32.xlu0 %v4098
    %v4100 = vpop.xlane.xlu0 %4099
    %v4101 = vsel %vm3357, %v4041, -inf
    %4102 = vmax.xlane.f32.xlu0 %v4101
    %v4103 = vpop.xlane.xlu0 %4102
    %v4104 = vsel %vm3357, %v4042, -inf
    %4105 = vmax.xlane.f32.xlu0 %v4104
    %v4106 = vpop.xlane.xlu0 %4105
    %v4107 = vsel %vm3357, %v4043, -inf
    %4108 = vmax.xlane.f32.xlu0 %v4107
    %v4109 = vpop.xlane.xlu0 %4108
    %v4110 = vsel %vm3357, %v4044, -inf
    %4111 = vmax.xlane.f32.xlu0 %v4110
    %v4112 = vpop.xlane.xlu0 %4111
    %v4113 = vsel %vm3357, %v4045, -inf
    %4114 = vmax.xlane.f32.xlu0 %v4113
    %v4115 = vpop.xlane.xlu0 %4114
    %v4116 = vsel %vm3357, %v4046, -inf
    %4117 = vmax.xlane.f32.xlu0 %v4116
    %v4118 = vpop.xlane.xlu0 %4117
    %v4119 = vsel %vm3357, %v4047, -inf
    %4120 = vmax.xlane.f32.xlu0 %v4119
    %v4121 = vpop.xlane.xlu0 %4120
    %v4122 = vsel %vm3357, %v4048, -inf
    %4123 = vmax.xlane.f32.xlu0 %v4122
    %v4124 = vpop.xlane.xlu0 %4123
    %v4125 = vsel %vm3357, %v4049, -inf
    %4126 = vmax.xlane.f32.xlu0 %v4125
    %v4127 = vpop.xlane.xlu0 %4126
    %v4128 = vsel %vm3357, %v4050, -inf
    %4129 = vmax.xlane.f32.xlu0 %v4128
    %v4130 = vpop.xlane.xlu0 %4129
    %v4131 = vsel %vm3357, %v4051, -inf
    %4132 = vmax.xlane.f32.xlu0 %v4131
    %v4133 = vpop.xlane.xlu0 %4132
    %v4134 = vsel %vm3357, %v4052, -inf
    %4135 = vmax.xlane.f32.xlu0 %v4134
    %v4136 = vpop.xlane.xlu0 %4135
    %v4137 = vsel %vm3357, %v4053, -inf
    %4138 = vmax.xlane.f32.xlu0 %v4137
    %v4139 = vpop.xlane.xlu0 %4138
    %v4140 = vsel %vm3357, %v4054, -inf
    %4141 = vmax.xlane.f32.xlu0 %v4140
    %v4142 = vpop.xlane.xlu0 %4141
    %v4143 = vsel %vm3357, %v4055, -inf
    %4144 = vmax.xlane.f32.xlu0 %v4143
    %v4145 = vpop.xlane.xlu0 %4144
    %v4146 = vsel %vm3357, %v4056, -inf
    %4147 = vmax.xlane.f32.xlu0 %v4146
    %v4148 = vpop.xlane.xlu0 %4147
    %v4149 = vsel %vm3357, %v4057, -inf
    %4150 = vmax.xlane.f32.xlu0 %v4149
    %v4151 = vpop.xlane.xlu0 %4150
    %v4152 = vsel %vm3357, %v4058, -inf
    %4153 = vmax.xlane.f32.xlu0 %v4152
    %v4154 = vpop.xlane.xlu0 %4153
    %v4155 = vsub.f32 %v4027, %v4061
    %v4156 = vsub.f32 %v4028, %v4064
    %v4157 = vsub.f32 %v4029, %v4067
    %v4158 = vsub.f32 %v4030, %v4070
    %v4159 = vsub.f32 %v4031, %v4073
    %v4160 = vsub.f32 %v4032, %v4076
    %v4161 = vsub.f32 %v4033, %v4079
    %v4162 = vsub.f32 %v4034, %v4082
    %v4163 = vsub.f32 %v4035, %v4085
    %v4164 = vsub.f32 %v4036, %v4088
    %v4165 = vsub.f32 %v4037, %v4091
    %v4166 = vsub.f32 %v4038, %v4094
    %v4167 = vsub.f32 %v4039, %v4097
    %v4168 = vsub.f32 %v4040, %v4100
    %v4169 = vsub.f32 %v4041, %v4103
    %v4170 = vsub.f32 %v4042, %v4106
    %v4171 = vsub.f32 %v4043, %v4109
    %v4172 = vsub.f32 %v4044, %v4112
    %v4173 = vsub.f32 %v4045, %v4115
    %v4174 = vsub.f32 %v4046, %v4118
    %v4175 = vsub.f32 %v4047, %v4121
    %v4176 = vsub.f32 %v4048, %v4124
    %v4177 = vsub.f32 %v4049, %v4127
    %v4178 = vsub.f32 %v4050, %v4130
    %v4179 = vsub.f32 %v4051, %v4133
    %v4180 = vsub.f32 %v4052, %v4136
    %v4181 = vsub.f32 %v4053, %v4139
    %v4182 = vsub.f32 %v4054, %v4142
    %v4183 = vsub.f32 %v4055, %v4145
    %v4184 = vsub.f32 %v4056, %v4148
    %v4185 = vsub.f32 %v4057, %v4151
    %v4186 = vsub.f32 %v4058, %v4154
    %v4187 = vmul.f32 %v4155, 1.442695
    %v4188 = vpow.pop %v4187
    %v4189 = vmul.f32 %v4156, 1.442695
    %v4190 = vpow.pop %v4189
    %v4191 = vmul.f32 %v4157, 1.442695
    %v4192 = vpow.pop %v4191
    %v4193 = vmul.f32 %v4158, 1.442695
    %v4194 = vpow.pop %v4193
    %v4195 = vmul.f32 %v4159, 1.442695
    %v4196 = vpow.pop %v4195
    %v4197 = vmul.f32 %v4160, 1.442695
    %v4198 = vpow.pop %v4197
    %v4199 = vmul.f32 %v4161, 1.442695
    %v4200 = vpow.pop %v4199
    %v4201 = vmul.f32 %v4162, 1.442695
    %v4202 = vpow.pop %v4201
    %v4203 = vmul.f32 %v4163, 1.442695
    %v4204 = vpow.pop %v4203
    %v4205 = vmul.f32 %v4164, 1.442695
    %v4206 = vpow.pop %v4205
    %v4207 = vmul.f32 %v4165, 1.442695
    %v4208 = vpow.pop %v4207
    %v4209 = vmul.f32 %v4166, 1.442695
    %v4210 = vpow.pop %v4209
    %v4211 = vmul.f32 %v4167, 1.442695
    %v4212 = vpow.pop %v4211
    %v4213 = vmul.f32 %v4168, 1.442695
    %v4214 = vpow.pop %v4213
    %v4215 = vmul.f32 %v4169, 1.442695
    %v4216 = vpow.pop %v4215
    %v4217 = vmul.f32 %v4170, 1.442695
    %v4218 = vpow.pop %v4217
    %v4219 = vmul.f32 %v4171, 1.442695
    %v4220 = vpow.pop %v4219
    %v4221 = vmul.f32 %v4172, 1.442695
    %v4222 = vpow.pop %v4221
    %v4223 = vmul.f32 %v4173, 1.442695
    %v4224 = vpow.pop %v4223
    %v4225 = vmul.f32 %v4174, 1.442695
    %v4226 = vpow.pop %v4225
    %v4227 = vmul.f32 %v4175, 1.442695
    %v4228 = vpow.pop %v4227
    %v4229 = vmul.f32 %v4176, 1.442695
    %v4230 = vpow.pop %v4229
    %v4231 = vmul.f32 %v4177, 1.442695
    %v4232 = vpow.pop %v4231
    %v4233 = vmul.f32 %v4178, 1.442695
    %v4234 = vpow.pop %v4233
    %v4235 = vmul.f32 %v4179, 1.442695
    %v4236 = vpow.pop %v4235
    %v4237 = vmul.f32 %v4180, 1.442695
    %v4238 = vpow.pop %v4237
    %v4239 = vmul.f32 %v4181, 1.442695
    %v4240 = vpow.pop %v4239
    %v4241 = vmul.f32 %v4182, 1.442695
    %v4242 = vpow.pop %v4241
    %v4243 = vmul.f32 %v4183, 1.442695
    %v4244 = vpow.pop %v4243
    %v4245 = vmul.f32 %v4184, 1.442695
    %v4246 = vpow.pop %v4245
    %v4247 = vmul.f32 %v4185, 1.442695
    %v4248 = vpow.pop %v4247
    %v4249 = vmul.f32 %v4186, 1.442695
    %v4250 = vpow.pop %v4249
    %v4251 = vsel %vm3357, %v4188, 0.0
    %4252 = vadd.xlane.f32.xlu0 %v4251
    %v4253 = vpop.xlane.xlu0 %4252
    %v4254 = vsel %vm3357, %v4190, 0.0
    %4255 = vadd.xlane.f32.xlu0 %v4254
    %v4256 = vpop.xlane.xlu0 %4255
    %v4257 = vsel %vm3357, %v4192, 0.0
    %4258 = vadd.xlane.f32.xlu0 %v4257
    %v4259 = vpop.xlane.xlu0 %4258
    %v4260 = vsel %vm3357, %v4194, 0.0
    %4261 = vadd.xlane.f32.xlu0 %v4260
    %v4262 = vpop.xlane.xlu0 %4261
    %v4263 = vsel %vm3357, %v4196, 0.0
    %4264 = vadd.xlane.f32.xlu0 %v4263
    %v4265 = vpop.xlane.xlu0 %4264
    %v4266 = vsel %vm3357, %v4198, 0.0
    %4267 = vadd.xlane.f32.xlu0 %v4266
    %v4268 = vpop.xlane.xlu0 %4267
    %v4269 = vsel %vm3357, %v4200, 0.0
    %4270 = vadd.xlane.f32.xlu0 %v4269
    %v4271 = vpop.xlane.xlu0 %4270
    %v4272 = vsel %vm3357, %v4202, 0.0
    %4273 = vadd.xlane.f32.xlu0 %v4272
    %v4274 = vpop.xlane.xlu0 %4273
    %v4275 = vsel %vm3357, %v4204, 0.0
    %4276 = vadd.xlane.f32.xlu0 %v4275
    %v4277 = vpop.xlane.xlu0 %4276
    %v4278 = vsel %vm3357, %v4206, 0.0
    %4279 = vadd.xlane.f32.xlu0 %v4278
    %v4280 = vpop.xlane.xlu0 %4279
    %v4281 = vsel %vm3357, %v4208, 0.0
    %4282 = vadd.xlane.f32.xlu0 %v4281
    %v4283 = vpop.xlane.xlu0 %4282
    %v4284 = vsel %vm3357, %v4210, 0.0
    %4285 = vadd.xlane.f32.xlu0 %v4284
    %v4286 = vpop.xlane.xlu0 %4285
    %v4287 = vsel %vm3357, %v4212, 0.0
    %4288 = vadd.xlane.f32.xlu0 %v4287
    %v4289 = vpop.xlane.xlu0 %4288
    %v4290 = vsel %vm3357, %v4214, 0.0
    %4291 = vadd.xlane.f32.xlu0 %v4290
    %v4292 = vpop.xlane.xlu0 %4291
    %v4293 = vsel %vm3357, %v4216, 0.0
    %4294 = vadd.xlane.f32.xlu0 %v4293
    %v4295 = vpop.xlane.xlu0 %4294
    %v4296 = vsel %vm3357, %v4218, 0.0
    %4297 = vadd.xlane.f32.xlu0 %v4296
    %v4298 = vpop.xlane.xlu0 %4297
    %v4299 = vsel %vm3357, %v4220, 0.0
    %4300 = vadd.xlane.f32.xlu0 %v4299
    %v4301 = vpop.xlane.xlu0 %4300
    %v4302 = vsel %vm3357, %v4222, 0.0
    %4303 = vadd.xlane.f32.xlu0 %v4302
    %v4304 = vpop.xlane.xlu0 %4303
    %v4305 = vsel %vm3357, %v4224, 0.0
    %4306 = vadd.xlane.f32.xlu0 %v4305
    %v4307 = vpop.xlane.xlu0 %4306
    %v4308 = vsel %vm3357, %v4226, 0.0
    %4309 = vadd.xlane.f32.xlu0 %v4308
    %v4310 = vpop.xlane.xlu0 %4309
    %v4311 = vsel %vm3357, %v4228, 0.0
    %4312 = vadd.xlane.f32.xlu0 %v4311
    %v4313 = vpop.xlane.xlu0 %4312
    %v4314 = vsel %vm3357, %v4230, 0.0
    %4315 = vadd.xlane.f32.xlu0 %v4314
    %v4316 = vpop.xlane.xlu0 %4315
    %v4317 = vsel %vm3357, %v4232, 0.0
    %4318 = vadd.xlane.f32.xlu0 %v4317
    %v4319 = vpop.xlane.xlu0 %4318
    %v4320 = vsel %vm3357, %v4234, 0.0
    %4321 = vadd.xlane.f32.xlu0 %v4320
    %v4322 = vpop.xlane.xlu0 %4321
    %v4323 = vsel %vm3357, %v4236, 0.0
    %4324 = vadd.xlane.f32.xlu0 %v4323
    %v4325 = vpop.xlane.xlu0 %4324
    %v4326 = vsel %vm3357, %v4238, 0.0
    %4327 = vadd.xlane.f32.xlu0 %v4326
    %v4328 = vpop.xlane.xlu0 %4327
    %v4329 = vsel %vm3357, %v4240, 0.0
    %4330 = vadd.xlane.f32.xlu0 %v4329
    %v4331 = vpop.xlane.xlu0 %4330
    %v4332 = vsel %vm3357, %v4242, 0.0
    %4333 = vadd.xlane.f32.xlu0 %v4332
    %v4334 = vpop.xlane.xlu0 %4333
    %v4335 = vsel %vm3357, %v4244, 0.0
    %4336 = vadd.xlane.f32.xlu0 %v4335
    %v4337 = vpop.xlane.xlu0 %4336
    %v4338 = vsel %vm3357, %v4246, 0.0
    %4339 = vadd.xlane.f32.xlu0 %v4338
    %v4340 = vpop.xlane.xlu0 %4339
    %v4341 = vsel %vm3357, %v4248, 0.0
    %4342 = vadd.xlane.f32.xlu0 %v4341
    %v4343 = vpop.xlane.xlu0 %4342
    %v4344 = vsel %vm3357, %v4250, 0.0
    %4345 = vadd.xlane.f32.xlu0 %v4344
    %v4346 = vpop.xlane.xlu0 %4345
    %v4347 = vrcp.pop %v4253
    %v4348 = vrcp.pop %v4256
    %v4349 = vrcp.pop %v4259
    %v4350 = vrcp.pop %v4262
    %v4351 = vrcp.pop %v4265
    %v4352 = vrcp.pop %v4268
    %v4353 = vrcp.pop %v4271
    %v4354 = vrcp.pop %v4274
    %v4355 = vrcp.pop %v4277
    %v4356 = vrcp.pop %v4280
    %v4357 = vrcp.pop %v4283
    %v4358 = vrcp.pop %v4286
    %v4359 = vrcp.pop %v4289
    %v4360 = vrcp.pop %v4292
    %v4361 = vrcp.pop %v4295
    %v4362 = vrcp.pop %v4298
    %v4363 = vrcp.pop %v4301
    %v4364 = vrcp.pop %v4304
    %v4365 = vrcp.pop %v4307
    %v4366 = vrcp.pop %v4310
    %v4367 = vrcp.pop %v4313
    %v4368 = vrcp.pop %v4316
    %v4369 = vrcp.pop %v4319
    %v4370 = vrcp.pop %v4322
    %v4371 = vrcp.pop %v4325
    %v4372 = vrcp.pop %v4328
    %v4373 = vrcp.pop %v4331
    %v4374 = vrcp.pop %v4334
    %v4375 = vrcp.pop %v4337
    %v4376 = vrcp.pop %v4340
    %v4377 = vrcp.pop %v4343
    %v4378 = vrcp.pop %v4346
    %v4379 = vmul.f32 %v4188, %v4347
    %v4380 = vmul.f32 %v4190, %v4348
    %v4381 = vmul.f32 %v4192, %v4349
    %v4382 = vmul.f32 %v4194, %v4350
    %v4383 = vmul.f32 %v4196, %v4351
    %v4384 = vmul.f32 %v4198, %v4352
    %v4385 = vmul.f32 %v4200, %v4353
    %v4386 = vmul.f32 %v4202, %v4354
    %v4387 = vmul.f32 %v4204, %v4355
    %v4388 = vmul.f32 %v4206, %v4356
    %v4389 = vmul.f32 %v4208, %v4357
    %v4390 = vmul.f32 %v4210, %v4358
    %v4391 = vmul.f32 %v4212, %v4359
    %v4392 = vmul.f32 %v4214, %v4360
    %v4393 = vmul.f32 %v4216, %v4361
    %v4394 = vmul.f32 %v4218, %v4362
    %v4395 = vmul.f32 %v4220, %v4363
    %v4396 = vmul.f32 %v4222, %v4364
    %v4397 = vmul.f32 %v4224, %v4365
    %v4398 = vmul.f32 %v4226, %v4366
    %v4399 = vmul.f32 %v4228, %v4367
    %v4400 = vmul.f32 %v4230, %v4368
    %v4401 = vmul.f32 %v4232, %v4369
    %v4402 = vmul.f32 %v4234, %v4370
    %v4403 = vmul.f32 %v4236, %v4371
    %v4404 = vmul.f32 %v4238, %v4372
    %v4405 = vmul.f32 %v4240, %v4373
    %v4406 = vmul.f32 %v4242, %v4374
    %v4407 = vmul.f32 %v4244, %v4375
    %v4408 = vmul.f32 %v4246, %v4376
    %v4409 = vmul.f32 %v4248, %v4377
    %v4410 = vmul.f32 %v4250, %v4378
    %4411 = vst.msk [vmem:[%s10] sm:$0xff] %vm3357, %v4379
    %4412 = vst.msk [vmem:[%s10 + $0x8] sm:$0xff] %vm3357, %v4380
    %4413 = vst.msk [vmem:[%s10 + $0x10] sm:$0xff] %vm3357, %v4381
    %4414 = vst.msk [vmem:[%s10 + $0x18] sm:$0xff] %vm3357, %v4382
    %4415 = vst.msk [vmem:[%s10 + $0x20] sm:$0xff] %vm3357, %v4383
    %4416 = vst.msk [vmem:[%s10 + $0x28] sm:$0xff] %vm3357, %v4384
    %4417 = vst.msk [vmem:[%s10 + $0x30] sm:$0xff] %vm3357, %v4385
    %4418 = vst.msk [vmem:[%s10 + $0x38] sm:$0xff] %vm3357, %v4386
    %4419 = vst.msk [vmem:[%s10 + $0x40] sm:$0xff] %vm3357, %v4387
    %4420 = vst.msk [vmem:[%s10 + $0x48] sm:$0xff] %vm3357, %v4388
    %4421 = vst.msk [vmem:[%s10 + $0x50] sm:$0xff] %vm3357, %v4389
    %4422 = vst.msk [vmem:[%s10 + $0x58] sm:$0xff] %vm3357, %v4390
    %4423 = vst.msk [vmem:[%s10 + $0x60] sm:$0xff] %vm3357, %v4391
    %4424 = vst.msk [vmem:[%s10 + $0x68] sm:$0xff] %vm3357, %v4392
    %4425 = vst.msk [vmem:[%s10 + $0x70] sm:$0xff] %vm3357, %v4393
    %4426 = vst.msk [vmem:[%s10 + $0x78] sm:$0xff] %vm3357, %v4394
    %4427 = vst.msk [vmem:[%s10 + $0x80] sm:$0xff] %vm3357, %v4395
    %4428 = vst.msk [vmem:[%s10 + $0x88] sm:$0xff] %vm3357, %v4396
    %4429 = vst.msk [vmem:[%s10 + $0x90] sm:$0xff] %vm3357, %v4397
    %4430 = vst.msk [vmem:[%s10 + $0x98] sm:$0xff] %vm3357, %v4398
    %4431 = vst.msk [vmem:[%s10 + $0xa0] sm:$0xff] %vm3357, %v4399
    %4432 = vst.msk [vmem:[%s10 + $0xa8] sm:$0xff] %vm3357, %v4400
    %4433 = vst.msk [vmem:[%s10 + $0xb0] sm:$0xff] %vm3357, %v4401
    %4434 = vst.msk [vmem:[%s10 + $0xb8] sm:$0xff] %vm3357, %v4402
    %4435 = vst.msk [vmem:[%s10 + $0xc0] sm:$0xff] %vm3357, %v4403
    %4436 = vst.msk [vmem:[%s10 + $0xc8] sm:$0xff] %vm3357, %v4404
    %4437 = vst.msk [vmem:[%s10 + $0xd0] sm:$0xff] %vm3357, %v4405
    %4438 = vst.msk [vmem:[%s10 + $0xd8] sm:$0xff] %vm3357, %v4406
    %4439 = vst.msk [vmem:[%s10 + $0xe0] sm:$0xff] %vm3357, %v4407
    %4440 = vst.msk [vmem:[%s10 + $0xe8] sm:$0xff] %vm3357, %v4408
    %4441 = vst.msk [vmem:[%s10 + $0xf0] sm:$0xff] %vm3357, %v4409
    %4442 = vst.msk [vmem:[%s10 + $0xf8] sm:$0xff] %vm3357, %v4410
    %v4443 = vld [vmem:[%s8] sm:$0xff]
    %v4444 = vld [vmem:[%s8 + $0x8] sm:$0xff]
    %v4445 = vlaneseq
    %v4446 = vshrl.u32 %v4445, 7
    %v4447 = vsub.s32 1, %v4446
    %v4448 = vrot.slane %v87, %v4447
    %v4450 = vsel %vm3357, %v4379, 0
    %v4453 = vsel %vm3357, %v4380, 0
    %v4456 = vsel %vm3357, %v4381, 0
    %v4459 = vsel %vm3357, %v4382, 0
    %v4462 = vsel %vm3357, %v4383, 0
    %v4465 = vsel %vm3357, %v4384, 0
    %v4468 = vsel %vm3357, %v4385, 0
    %v4471 = vsel %vm3357, %v4386, 0
    %v4474 = vsel %vm3357, %v4387, 0
    %v4477 = vsel %vm3357, %v4388, 0
    %v4480 = vsel %vm3357, %v4389, 0
    %v4483 = vsel %vm3357, %v4390, 0
    %v4486 = vsel %vm3357, %v4391, 0
    %v4489 = vsel %vm3357, %v4392, 0
    %v4492 = vsel %vm3357, %v4393, 0
    %v4495 = vsel %vm3357, %v4394, 0
    %v4498 = vsel %vm3357, %v4395, 0
    %v4501 = vsel %vm3357, %v4396, 0
    %v4504 = vsel %vm3357, %v4397, 0
    %v4507 = vsel %vm3357, %v4398, 0
    %v4510 = vsel %vm3357, %v4399, 0
    %v4513 = vsel %vm3357, %v4400, 0
    %v4516 = vsel %vm3357, %v4401, 0
    %v4519 = vsel %vm3357, %v4402, 0
    %v4522 = vsel %vm3357, %v4403, 0
    %v4525 = vsel %vm3357, %v4404, 0
    %v4528 = vsel %vm3357, %v4405, 0
    %v4531 = vsel %vm3357, %v4406, 0
    %v4534 = vsel %vm3357, %v4407, 0
    %v4537 = vsel %vm3357, %v4408, 0
    %v4540 = vsel %vm3357, %v4409, 0
    %v4543 = vsel %vm3357, %v4410, 0
    %4545 = vmatprep.subr.mxu0 0.0
    %4546 = vmatpush1.msra.mxu0 %v4443
    %4547 = vmatprep.subr.mxu0 0.0
    %4548 = vmatpush1.msra.mxu0 %v4444
    %4549 = vmatprep.subr.mxu0 0.0
    %4550 = vmatpush1.msra.mxu0 0.0
    %4551 = vmatprep.subr.mxu0 0.0
    %4552 = vmatpush1.msra.mxu0 0.0
    %4553 = vmatprep.subr.mxu0 0.0
    %4554 = vmatpush1.msra.mxu0 0.0
    %4555 = vmatprep.subr.mxu0 0.0
    %4556 = vmatpush1.msra.mxu0 0.0
    %4557 = vmatprep.subr.mxu0 0.0
    %4558 = vmatpush1.msra.mxu0 0.0
    %4559 = vmatprep.subr.mxu0 0.0
    %4560 = vmatpush1.msra.mxu0 0.0
    %4561 = vmatprep.subr.mxu0 0.0
    %4562 = vmatpush1.msra.mxu0 0.0
    %4563 = vmatprep.subr.mxu0 0.0
    %4564 = vmatpush1.msra.mxu0 0.0
    %4565 = vmatprep.subr.mxu0 0.0
    %4566 = vmatpush1.msra.mxu0 0.0
    %4567 = vmatprep.subr.mxu0 0.0
    %4568 = vmatpush1.msra.mxu0 0.0
    %4569 = vmatprep.subr.mxu0 0.0
    %4570 = vmatpush1.msra.mxu0 0.0
    %4571 = vmatprep.subr.mxu0 0.0
    %4572 = vmatpush1.msra.mxu0 0.0
    %4573 = vmatprep.subr.mxu0 0.0
    %4574 = vmatpush1.msra.mxu0 0.0
    %4575 = vmatprep.subr.mxu0 0.0
    %4576 = vmatpush1.msra.mxu0 0.0
    %4577 = vmatprep.subr.mxu0 0.0
    %4578 = vmatpush1.msra.mxu0 0.0
    %4579 = vmatprep.subr.mxu0 0.0
    %4580 = vmatpush1.msra.mxu0 0.0
    %4581 = vmatprep.subr.mxu0 0.0
    %4582 = vmatpush1.msra.mxu0 0.0
    %4583 = vmatprep.subr.mxu0 0.0
    %4584 = vmatpush1.msra.mxu0 0.0
    %4585 = vmatprep.subr.mxu0 0.0
    %4586 = vmatpush1.msra.mxu0 0.0
    %4587 = vmatprep.subr.mxu0 0.0
    %4588 = vmatpush1.msra.mxu0 0.0
    %4589 = vmatprep.subr.mxu0 0.0
    %4590 = vmatpush1.msra.mxu0 0.0
    %4591 = vmatprep.subr.mxu0 0.0
    %4592 = vmatpush1.msra.mxu0 0.0
    %4593 = vmatprep.subr.mxu0 0.0
    %4594 = vmatpush1.msra.mxu0 0.0
    %4595 = vmatprep.subr.mxu0 0.0
    %4596 = vmatpush1.msra.mxu0 0.0
    %4597 = vmatprep.subr.mxu0 0.0
    %4598 = vmatpush1.msra.mxu0 0.0
    %4599 = vmatprep.subr.mxu0 0.0
    %4600 = vmatpush1.msra.mxu0 0.0
    %4601 = vmatprep.subr.mxu0 0.0
    %4602 = vmatpush1.msra.mxu0 0.0
    %4603 = vmatprep.subr.mxu0 0.0
    %4604 = vmatpush1.msra.mxu0 0.0
    %4605 = vmatprep.subr.mxu0 0.0
    %4606 = vmatpush1.msra.mxu0 0.0
    %4607 = vmatprep.subr.mxu0 0.0
    %4608 = vmatpush1.msra.mxu0 0.0
    %4609 = vmatprep.mubr.f32.mxu0 0.0
    %4610 = vmatmul.mubr.f32.gmra.mrb[0].mxu0 %v4450
    %v4611 = vpop.f32.mrb[0].mxu0
    %v4612 = vadd.f32 %v4448, %v4611
    %v4613 = vpop.f32.mrb[0].mxu0
    %4614 = vmatprep.mubr.f32.mxu0 0.0
    %4615 = vmatmul.mubr.f32.gmra.mrb[0].mxu0 %v4453
    %v4616 = vpop.f32.mrb[0].mxu0
    %v4617 = vadd.f32 %v4448, %v4616
    %v4618 = vpop.f32.mrb[0].mxu0
    %4619 = vmatprep.mubr.f32.mxu0 0.0
    %4620 = vmatmul.mubr.f32.gmra.mrb[0].mxu0 %v4456
    %v4621 = vpop.f32.mrb[0].mxu0
    %v4622 = vadd.f32 %v4448, %v4621
    %v4623 = vpop.f32.mrb[0].mxu0
    %4624 = vmatprep.mubr.f32.mxu0 0.0
    %4625 = vmatmul.mubr.f32.gmra.mrb[0].mxu0 %v4459
    %v4626 = vpop.f32.mrb[0].mxu0
    %v4627 = vadd.f32 %v4448, %v4626
    %v4628 = vpop.f32.mrb[0].mxu0
    %4629 = vmatprep.mubr.f32.mxu0 0.0
    %4630 = vmatmul.mubr.f32.gmra.mrb[0].mxu0 %v4462
    %v4631 = vpop.f32.mrb[0].mxu0
    %v4632 = vadd.f32 %v4448, %v4631
    %v4633 = vpop.f32.mrb[0].mxu0
    %4634 = vmatprep.mubr.f32.mxu0 0.0
    %4635 = vmatmul.mubr.f32.gmra.mrb[0].mxu0 %v4465
    %v4636 = vpop.f32.mrb[0].mxu0
    %v4637 = vadd.f32 %v4448, %v4636
    %v4638 = vpop.f32.mrb[0].mxu0
    %4639 = vmatprep.mubr.f32.mxu0 0.0
    %4640 = vmatmul.mubr.f32.gmra.mrb[0].mxu0 %v4468
    %v4641 = vpop.f32.mrb[0].mxu0
    %v4642 = vadd.f32 %v4448, %v4641
    %v4643 = vpop.f32.mrb[0].mxu0
    %4644 = vmatprep.mubr.f32.mxu0 0.0
    %4645 = vmatmul.mubr.f32.gmra.mrb[0].mxu0 %v4471
    %v4646 = vpop.f32.mrb[0].mxu0
    %v4647 = vadd.f32 %v4448, %v4646
    %v4648 = vpop.f32.mrb[0].mxu0
    %4649 = vmatprep.mubr.f32.mxu0 0.0
    %4650 = vmatmul.mubr.f32.gmra.mrb[0].mxu0 %v4474
    %v4651 = vpop.f32.mrb[0].mxu0
    %v4652 = vadd.f32 %v4448, %v4651
    %v4653 = vpop.f32.mrb[0].mxu0
    %4654 = vmatprep.mubr.f32.mxu0 0.0
    %4655 = vmatmul.mubr.f32.gmra.mrb[0].mxu0 %v4477
    %v4656 = vpop.f32.mrb[0].mxu0
    %v4657 = vadd.f32 %v4448, %v4656
    %v4658 = vpop.f32.mrb[0].mxu0
    %4659 = vmatprep.mubr.f32.mxu0 0.0
    %4660 = vmatmul.mubr.f32.gmra.mrb[0].mxu0 %v4480
    %v4661 = vpop.f32.mrb[0].mxu0
    %v4662 = vadd.f32 %v4448, %v4661
    %v4663 = vpop.f32.mrb[0].mxu0
    %4664 = vmatprep.mubr.f32.mxu0 0.0
    %4665 = vmatmul.mubr.f32.gmra.mrb[0].mxu0 %v4483
    %v4666 = vpop.f32.mrb[0].mxu0
    %v4667 = vadd.f32 %v4448, %v4666
    %v4668 = vpop.f32.mrb[0].mxu0
    %4669 = vmatprep.mubr.f32.mxu0 0.0
    %4670 = vmatmul.mubr.f32.gmra.mrb[0].mxu0 %v4486
    %v4671 = vpop.f32.mrb[0].mxu0
    %v4672 = vadd.f32 %v4448, %v4671
    %v4673 = vpop.f32.mrb[0].mxu0
    %4674 = vmatprep.mubr.f32.mxu0 0.0
    %4675 = vmatmul.mubr.f32.gmra.mrb[0].mxu0 %v4489
    %v4676 = vpop.f32.mrb[0].mxu0
    %v4677 = vadd.f32 %v4448, %v4676
    %v4678 = vpop.f32.mrb[0].mxu0
    %4679 = vmatprep.mubr.f32.mxu0 0.0
    %4680 = vmatmul.mubr.f32.gmra.mrb[0].mxu0 %v4492
    %v4681 = vpop.f32.mrb[0].mxu0
    %v4682 = vadd.f32 %v4448, %v4681
    %v4683 = vpop.f32.mrb[0].mxu0
    %4684 = vmatprep.mubr.f32.mxu0 0.0
    %4685 = vmatmul.mubr.f32.gmra.mrb[0].mxu0 %v4495
    %v4686 = vpop.f32.mrb[0].mxu0
    %v4687 = vadd.f32 %v4448, %v4686
    %v4688 = vpop.f32.mrb[0].mxu0
    %4689 = vmatprep.mubr.f32.mxu0 0.0
    %4690 = vmatmul.mubr.f32.gmra.mrb[0].mxu0 %v4498
    %v4691 = vpop.f32.mrb[0].mxu0
    %v4692 = vadd.f32 %v4448, %v4691
    %v4693 = vpop.f32.mrb[0].mxu0
    %4694 = vmatprep.mubr.f32.mxu0 0.0
    %4695 = vmatmul.mubr.f32.gmra.mrb[0].mxu0 %v4501
    %v4696 = vpop.f32.mrb[0].mxu0
    %v4697 = vadd.f32 %v4448, %v4696
    %v4698 = vpop.f32.mrb[0].mxu0
    %4699 = vmatprep.mubr.f32.mxu0 0.0
    %4700 = vmatmul.mubr.f32.gmra.mrb[0].mxu0 %v4504
    %v4701 = vpop.f32.mrb[0].mxu0
    %v4702 = vadd.f32 %v4448, %v4701
    %v4703 = vpop.f32.mrb[0].mxu0
    %4704 = vmatprep.mubr.f32.mxu0 0.0
    %4705 = vmatmul.mubr.f32.gmra.mrb[0].mxu0 %v4507
    %v4706 = vpop.f32.mrb[0].mxu0
    %v4707 = vadd.f32 %v4448, %v4706
    %v4708 = vpop.f32.mrb[0].mxu0
    %4709 = vmatprep.mubr.f32.mxu0 0.0
    %4710 = vmatmul.mubr.f32.gmra.mrb[0].mxu0 %v4510
    %v4711 = vpop.f32.mrb[0].mxu0
    %v4712 = vadd.f32 %v4448, %v4711
    %v4713 = vpop.f32.mrb[0].mxu0
    %4714 = vmatprep.mubr.f32.mxu0 0.0
    %4715 = vmatmul.mubr.f32.gmra.mrb[0].mxu0 %v4513
    %v4716 = vpop.f32.mrb[0].mxu0
    %v4717 = vadd.f32 %v4448, %v4716
    %v4718 = vpop.f32.mrb[0].mxu0
    %4719 = vmatprep.mubr.f32.mxu0 0.0
    %4720 = vmatmul.mubr.f32.gmra.mrb[0].mxu0 %v4516
    %v4721 = vpop.f32.mrb[0].mxu0
    %v4722 = vadd.f32 %v4448, %v4721
    %v4723 = vpop.f32.mrb[0].mxu0
    %4724 = vmatprep.mubr.f32.mxu0 0.0
    %4725 = vmatmul.mubr.f32.gmra.mrb[0].mxu0 %v4519
    %v4726 = vpop.f32.mrb[0].mxu0
    %v4727 = vadd.f32 %v4448, %v4726
    %v4728 = vpop.f32.mrb[0].mxu0
    %4729 = vmatprep.mubr.f32.mxu0 0.0
    %4730 = vmatmul.mubr.f32.gmra.mrb[0].mxu0 %v4522
    %v4731 = vpop.f32.mrb[0].mxu0
    %v4732 = vadd.f32 %v4448, %v4731
    %v4733 = vpop.f32.mrb[0].mxu0
    %4734 = vmatprep.mubr.f32.mxu0 0.0
    %4735 = vmatmul.mubr.f32.gmra.mrb[0].mxu0 %v4525
    %v4736 = vpop.f32.mrb[0].mxu0
    %v4737 = vadd.f32 %v4448, %v4736
    %v4738 = vpop.f32.mrb[0].mxu0
    %4739 = vmatprep.mubr.f32.mxu0 0.0
    %4740 = vmatmul.mubr.f32.gmra.mrb[0].mxu0 %v4528
    %v4741 = vpop.f32.mrb[0].mxu0
    %v4742 = vadd.f32 %v4448, %v4741
    %v4743 = vpop.f32.mrb[0].mxu0
    %4744 = vmatprep.mubr.f32.mxu0 0.0
    %4745 = vmatmul.mubr.f32.gmra.mrb[0].mxu0 %v4531
    %v4746 = vpop.f32.mrb[0].mxu0
    %v4747 = vadd.f32 %v4448, %v4746
    %v4748 = vpop.f32.mrb[0].mxu0
    %4749 = vmatprep.mubr.f32.mxu0 0.0
    %4750 = vmatmul.mubr.f32.gmra.mrb[0].mxu0 %v4534
    %v4751 = vpop.f32.mrb[0].mxu0
    %v4752 = vadd.f32 %v4448, %v4751
    %v4753 = vpop.f32.mrb[0].mxu0
    %4754 = vmatprep.mubr.f32.mxu0 0.0
    %4755 = vmatmul.mubr.f32.gmra.mrb[0].mxu0 %v4537
    %v4756 = vpop.f32.mrb[0].mxu0
    %v4757 = vadd.f32 %v4448, %v4756
    %v4758 = vpop.f32.mrb[0].mxu0
    %4759 = vmatprep.mubr.f32.mxu0 0.0
    %4760 = vmatmul.mubr.f32.gmra.mrb[0].mxu0 %v4540
    %v4761 = vpop.f32.mrb[0].mxu0
    %v4762 = vadd.f32 %v4448, %v4761
    %v4763 = vpop.f32.mrb[0].mxu0
    %4764 = vmatprep.mubr.f32.mxu0 0.0
    %4765 = vmatmul.mubr.f32.gmra.mrb[0].mxu0 %v4543
    %v4766 = vpop.f32.mrb[0].mxu0
    %v4767 = vadd.f32 %v4448, %v4766
    %v4768 = vpop.f32.mrb[0].mxu0
    %4769 = vdwg.mxu0
    %v4770 = vadd.f32 %v4612, %v4617
    %v4771 = vadd.f32 %v4770, %v4622
    %v4772 = vadd.f32 %v4771, %v4627
    %v4773 = vadd.f32 %v4772, %v4632
    %v4774 = vadd.f32 %v4773, %v4637
    %v4775 = vadd.f32 %v4774, %v4642
    %v4776 = vadd.f32 %v4775, %v4647
    %v4777 = vadd.f32 %v4776, %v4652
    %v4778 = vadd.f32 %v4777, %v4657
    %v4779 = vadd.f32 %v4778, %v4662
    %v4780 = vadd.f32 %v4779, %v4667
    %v4781 = vadd.f32 %v4780, %v4672
    %v4782 = vadd.f32 %v4781, %v4677
    %v4783 = vadd.f32 %v4782, %v4682
    %v4784 = vadd.f32 %v4783, %v4687
    %v4785 = vadd.f32 %v4784, %v4692
    %v4786 = vadd.f32 %v4785, %v4697
    %v4787 = vadd.f32 %v4786, %v4702
    %v4788 = vadd.f32 %v4787, %v4707
    %v4789 = vadd.f32 %v4788, %v4712
    %v4790 = vadd.f32 %v4789, %v4717
    %v4791 = vadd.f32 %v4790, %v4722
    %v4792 = vadd.f32 %v4791, %v4727
    %v4793 = vadd.f32 %v4792, %v4732
    %v4794 = vadd.f32 %v4793, %v4737
    %v4795 = vadd.f32 %v4794, %v4742
    %v4796 = vadd.f32 %v4795, %v4747
    %v4797 = vadd.f32 %v4796, %v4752
    %v4798 = vadd.f32 %v4797, %v4757
    %v4799 = vadd.f32 %v4798, %v4762
    %v4800 = vadd.f32 %v4799, %v4767
    %v4801 = vrot.slane %v4800, 4
    %v4802 = vadd.f32 %v4800, %v4801
    %v4803 = vrot.slane %v4802, 2
    %v4804 = vadd.f32 %v4802, %v4803
    %v4805 = vrot.slane %v4804, 1
    %v4806 = vadd.f32 %v4804, %v4805
    %v4807 = vmul.f32 %v4806, %v3427
    %v4808 = vsub.f32 %v4612, %v4807
    %v4809 = vsub.f32 %v4617, %v4807
    %v4810 = vsub.f32 %v4622, %v4807
    %v4811 = vsub.f32 %v4627, %v4807
    %v4812 = vsub.f32 %v4632, %v4807
    %v4813 = vsub.f32 %v4637, %v4807
    %v4814 = vsub.f32 %v4642, %v4807
    %v4815 = vsub.f32 %v4647, %v4807
    %v4816 = vsub.f32 %v4652, %v4807
    %v4817 = vsub.f32 %v4657, %v4807
    %v4818 = vsub.f32 %v4662, %v4807
    %v4819 = vsub.f32 %v4667, %v4807
    %v4820 = vsub.f32 %v4672, %v4807
    %v4821 = vsub.f32 %v4677, %v4807
    %v4822 = vsub.f32 %v4682, %v4807
    %v4823 = vsub.f32 %v4687, %v4807
    %v4824 = vsub.f32 %v4692, %v4807
    %v4825 = vsub.f32 %v4697, %v4807
    %v4826 = vsub.f32 %v4702, %v4807
    %v4827 = vsub.f32 %v4707, %v4807
    %v4828 = vsub.f32 %v4712, %v4807
    %v4829 = vsub.f32 %v4717, %v4807
    %v4830 = vsub.f32 %v4722, %v4807
    %v4831 = vsub.f32 %v4727, %v4807
    %v4832 = vsub.f32 %v4732, %v4807
    %v4833 = vsub.f32 %v4737, %v4807
    %v4834 = vsub.f32 %v4742, %v4807
    %v4835 = vsub.f32 %v4747, %v4807
    %v4836 = vsub.f32 %v4752, %v4807
    %v4837 = vsub.f32 %v4757, %v4807
    %v4838 = vsub.f32 %v4762, %v4807
    %v4839 = vsub.f32 %v4767, %v4807
    %v4840 = vmul.f32 %v4808, %v4808
    %v4841 = vmul.f32 %v4809, %v4809
    %v4842 = vmul.f32 %v4810, %v4810
    %v4843 = vmul.f32 %v4811, %v4811
    %v4844 = vmul.f32 %v4812, %v4812
    %v4845 = vmul.f32 %v4813, %v4813
    %v4846 = vmul.f32 %v4814, %v4814
    %v4847 = vmul.f32 %v4815, %v4815
    %v4848 = vmul.f32 %v4816, %v4816
    %v4849 = vmul.f32 %v4817, %v4817
    %v4850 = vmul.f32 %v4818, %v4818
    %v4851 = vmul.f32 %v4819, %v4819
    %v4852 = vmul.f32 %v4820, %v4820
    %v4853 = vmul.f32 %v4821, %v4821
    %v4854 = vmul.f32 %v4822, %v4822
    %v4855 = vmul.f32 %v4823, %v4823
    %v4856 = vmul.f32 %v4824, %v4824
    %v4857 = vmul.f32 %v4825, %v4825
    %v4858 = vmul.f32 %v4826, %v4826
    %v4859 = vmul.f32 %v4827, %v4827
    %v4860 = vmul.f32 %v4828, %v4828
    %v4861 = vmul.f32 %v4829, %v4829
    %v4862 = vmul.f32 %v4830, %v4830
    %v4863 = vmul.f32 %v4831, %v4831
    %v4864 = vmul.f32 %v4832, %v4832
    %v4865 = vmul.f32 %v4833, %v4833
    %v4866 = vmul.f32 %v4834, %v4834
    %v4867 = vmul.f32 %v4835, %v4835
    %v4868 = vmul.f32 %v4836, %v4836
    %v4869 = vmul.f32 %v4837, %v4837
    %v4870 = vmul.f32 %v4838, %v4838
    %v4871 = vmul.f32 %v4839, %v4839
    %v4872 = vadd.f32 %v4840, %v4841
    %v4873 = vadd.f32 %v4872, %v4842
    %v4874 = vadd.f32 %v4873, %v4843
    %v4875 = vadd.f32 %v4874, %v4844
    %v4876 = vadd.f32 %v4875, %v4845
    %v4877 = vadd.f32 %v4876, %v4846
    %v4878 = vadd.f32 %v4877, %v4847
    %v4879 = vadd.f32 %v4878, %v4848
    %v4880 = vadd.f32 %v4879, %v4849
    %v4881 = vadd.f32 %v4880, %v4850
    %v4882 = vadd.f32 %v4881, %v4851
    %v4883 = vadd.f32 %v4882, %v4852
    %v4884 = vadd.f32 %v4883, %v4853
    %v4885 = vadd.f32 %v4884, %v4854
    %v4886 = vadd.f32 %v4885, %v4855
    %v4887 = vadd.f32 %v4886, %v4856
    %v4888 = vadd.f32 %v4887, %v4857
    %v4889 = vadd.f32 %v4888, %v4858
    %v4890 = vadd.f32 %v4889, %v4859
    %v4891 = vadd.f32 %v4890, %v4860
    %v4892 = vadd.f32 %v4891, %v4861
    %v4893 = vadd.f32 %v4892, %v4862
    %v4894 = vadd.f32 %v4893, %v4863
    %v4895 = vadd.f32 %v4894, %v4864
    %v4896 = vadd.f32 %v4895, %v4865
    %v4897 = vadd.f32 %v4896, %v4866
    %v4898 = vadd.f32 %v4897, %v4867
    %v4899 = vadd.f32 %v4898, %v4868
    %v4900 = vadd.f32 %v4899, %v4869
    %v4901 = vadd.f32 %v4900, %v4870
    %v4902 = vadd.f32 %v4901, %v4871
    %v4903 = vrot.slane %v4902, 4
    %v4904 = vadd.f32 %v4902, %v4903
    %v4905 = vrot.slane %v4904, 2
    %v4906 = vadd.f32 %v4904, %v4905
    %v4907 = vrot.slane %v4906, 1
    %v4908 = vadd.f32 %v4906, %v4907
    %v4909 = vmul.f32 %v4908, %v3427
    %v4910 = vadd.f32 %v4909, 0.001
    %v4911 = vrsqrt.pop %v4910
    %v4912 = vmul.f32 %v4808, %v4911
    %v4913 = vmul.f32 %v4809, %v4911
    %v4914 = vmul.f32 %v4810, %v4911
    %v4915 = vmul.f32 %v4811, %v4911
    %v4916 = vmul.f32 %v4812, %v4911
    %v4917 = vmul.f32 %v4813, %v4911
    %v4918 = vmul.f32 %v4814, %v4911
    %v4919 = vmul.f32 %v4815, %v4911
    %v4920 = vmul.f32 %v4816, %v4911
    %v4921 = vmul.f32 %v4817, %v4911
    %v4922 = vmul.f32 %v4818, %v4911
    %v4923 = vmul.f32 %v4819, %v4911
    %v4924 = vmul.f32 %v4820, %v4911
    %v4925 = vmul.f32 %v4821, %v4911
    %v4926 = vmul.f32 %v4822, %v4911
    %v4927 = vmul.f32 %v4823, %v4911
    %v4928 = vmul.f32 %v4824, %v4911
    %v4929 = vmul.f32 %v4825, %v4911
    %v4930 = vmul.f32 %v4826, %v4911
    %v4931 = vmul.f32 %v4827, %v4911
    %v4932 = vmul.f32 %v4828, %v4911
    %v4933 = vmul.f32 %v4829, %v4911
    %v4934 = vmul.f32 %v4830, %v4911
    %v4935 = vmul.f32 %v4831, %v4911
    %v4936 = vmul.f32 %v4832, %v4911
    %v4937 = vmul.f32 %v4833, %v4911
    %v4938 = vmul.f32 %v4834, %v4911
    %v4939 = vmul.f32 %v4835, %v4911
    %v4940 = vmul.f32 %v4836, %v4911
    %v4941 = vmul.f32 %v4837, %v4911
    %v4942 = vmul.f32 %v4838, %v4911
    %v4943 = vmul.f32 %v4839, %v4911
    %4944 = vmax.xlane.f32.xlu0 %v4912
    %v4945 = vpop.xlane.xlu0 %4944
    %4946 = vmax.xlane.f32.xlu0 %v4913
    %v4947 = vpop.xlane.xlu0 %4946
    %4948 = vmax.xlane.f32.xlu0 %v4914
    %v4949 = vpop.xlane.xlu0 %4948
    %4950 = vmax.xlane.f32.xlu0 %v4915
    %v4951 = vpop.xlane.xlu0 %4950
    %4952 = vmax.xlane.f32.xlu0 %v4916
    %v4953 = vpop.xlane.xlu0 %4952
    %4954 = vmax.xlane.f32.xlu0 %v4917
    %v4955 = vpop.xlane.xlu0 %4954
    %4956 = vmax.xlane.f32.xlu0 %v4918
    %v4957 = vpop.xlane.xlu0 %4956
    %4958 = vmax.xlane.f32.xlu0 %v4919
    %v4959 = vpop.xlane.xlu0 %4958
    %4960 = vmax.xlane.f32.xlu0 %v4920
    %v4961 = vpop.xlane.xlu0 %4960
    %4962 = vmax.xlane.f32.xlu0 %v4921
    %v4963 = vpop.xlane.xlu0 %4962
    %4964 = vmax.xlane.f32.xlu0 %v4922
    %v4965 = vpop.xlane.xlu0 %4964
    %4966 = vmax.xlane.f32.xlu0 %v4923
    %v4967 = vpop.xlane.xlu0 %4966
    %4968 = vmax.xlane.f32.xlu0 %v4924
    %v4969 = vpop.xlane.xlu0 %4968
    %4970 = vmax.xlane.f32.xlu0 %v4925
    %v4971 = vpop.xlane.xlu0 %4970
    %4972 = vmax.xlane.f32.xlu0 %v4926
    %v4973 = vpop.xlane.xlu0 %4972
    %4974 = vmax.xlane.f32.xlu0 %v4927
    %v4975 = vpop.xlane.xlu0 %4974
    %4976 = vmax.xlane.f32.xlu0 %v4928
    %v4977 = vpop.xlane.xlu0 %4976
    %4978 = vmax.xlane.f32.xlu0 %v4929
    %v4979 = vpop.xlane.xlu0 %4978
    %4980 = vmax.xlane.f32.xlu0 %v4930
    %v4981 = vpop.xlane.xlu0 %4980
    %4982 = vmax.xlane.f32.xlu0 %v4931
    %v4983 = vpop.xlane.xlu0 %4982
    %4984 = vmax.xlane.f32.xlu0 %v4932
    %v4985 = vpop.xlane.xlu0 %4984
    %4986 = vmax.xlane.f32.xlu0 %v4933
    %v4987 = vpop.xlane.xlu0 %4986
    %4988 = vmax.xlane.f32.xlu0 %v4934
    %v4989 = vpop.xlane.xlu0 %4988
    %4990 = vmax.xlane.f32.xlu0 %v4935
    %v4991 = vpop.xlane.xlu0 %4990
    %4992 = vmax.xlane.f32.xlu0 %v4936
    %v4993 = vpop.xlane.xlu0 %4992
    %4994 = vmax.xlane.f32.xlu0 %v4937
    %v4995 = vpop.xlane.xlu0 %4994
    %4996 = vmax.xlane.f32.xlu0 %v4938
    %v4997 = vpop.xlane.xlu0 %4996
    %4998 = vmax.xlane.f32.xlu0 %v4939
    %v4999 = vpop.xlane.xlu0 %4998
    %5000 = vmax.xlane.f32.xlu0 %v4940
    %v5001 = vpop.xlane.xlu0 %5000
    %5002 = vmax.xlane.f32.xlu0 %v4941
    %v5003 = vpop.xlane.xlu0 %5002
    %5004 = vmax.xlane.f32.xlu0 %v4942
    %v5005 = vpop.xlane.xlu0 %5004
    %5006 = vmax.xlane.f32.xlu0 %v4943
    %v5007 = vpop.xlane.xlu0 %5006
    %v5008 = vsub.f32 %v4912, %v4945
    %v5009 = vsub.f32 %v4913, %v4947
    %v5010 = vsub.f32 %v4914, %v4949
    %v5011 = vsub.f32 %v4915, %v4951
    %v5012 = vsub.f32 %v4916, %v4953
    %v5013 = vsub.f32 %v4917, %v4955
    %v5014 = vsub.f32 %v4918, %v4957
    %v5015 = vsub.f32 %v4919, %v4959
    %v5016 = vsub.f32 %v4920, %v4961
    %v5017 = vsub.f32 %v4921, %v4963
    %v5018 = vsub.f32 %v4922, %v4965
    %v5019 = vsub.f32 %v4923, %v4967
    %v5020 = vsub.f32 %v4924, %v4969
    %v5021 = vsub.f32 %v4925, %v4971
    %v5022 = vsub.f32 %v4926, %v4973
    %v5023 = vsub.f32 %v4927, %v4975
    %v5024 = vsub.f32 %v4928, %v4977
    %v5025 = vsub.f32 %v4929, %v4979
    %v5026 = vsub.f32 %v4930, %v4981
    %v5027 = vsub.f32 %v4931, %v4983
    %v5028 = vsub.f32 %v4932, %v4985
    %v5029 = vsub.f32 %v4933, %v4987
    %v5030 = vsub.f32 %v4934, %v4989
    %v5031 = vsub.f32 %v4935, %v4991
    %v5032 = vsub.f32 %v4936, %v4993
    %v5033 = vsub.f32 %v4937, %v4995
    %v5034 = vsub.f32 %v4938, %v4997
    %v5035 = vsub.f32 %v4939, %v4999
    %v5036 = vsub.f32 %v4940, %v5001
    %v5037 = vsub.f32 %v4941, %v5003
    %v5038 = vsub.f32 %v4942, %v5005
    %v5039 = vsub.f32 %v4943, %v5007
    %v5040 = vmul.f32 %v5008, 1.442695
    %v5041 = vpow.pop %v5040
    %v5042 = vmul.f32 %v5009, 1.442695
    %v5043 = vpow.pop %v5042
    %v5044 = vmul.f32 %v5010, 1.442695
    %v5045 = vpow.pop %v5044
    %v5046 = vmul.f32 %v5011, 1.442695
    %v5047 = vpow.pop %v5046
    %v5048 = vmul.f32 %v5012, 1.442695
    %v5049 = vpow.pop %v5048
    %v5050 = vmul.f32 %v5013, 1.442695
    %v5051 = vpow.pop %v5050
    %v5052 = vmul.f32 %v5014, 1.442695
    %v5053 = vpow.pop %v5052
    %v5054 = vmul.f32 %v5015, 1.442695
    %v5055 = vpow.pop %v5054
    %v5056 = vmul.f32 %v5016, 1.442695
    %v5057 = vpow.pop %v5056
    %v5058 = vmul.f32 %v5017, 1.442695
    %v5059 = vpow.pop %v5058
    %v5060 = vmul.f32 %v5018, 1.442695
    %v5061 = vpow.pop %v5060
    %v5062 = vmul.f32 %v5019, 1.442695
    %v5063 = vpow.pop %v5062
    %v5064 = vmul.f32 %v5020, 1.442695
    %v5065 = vpow.pop %v5064
    %v5066 = vmul.f32 %v5021, 1.442695
    %v5067 = vpow.pop %v5066
    %v5068 = vmul.f32 %v5022, 1.442695
    %v5069 = vpow.pop %v5068
    %v5070 = vmul.f32 %v5023, 1.442695
    %v5071 = vpow.pop %v5070
    %v5072 = vmul.f32 %v5024, 1.442695
    %v5073 = vpow.pop %v5072
    %v5074 = vmul.f32 %v5025, 1.442695
    %v5075 = vpow.pop %v5074
    %v5076 = vmul.f32 %v5026, 1.442695
    %v5077 = vpow.pop %v5076
    %v5078 = vmul.f32 %v5027, 1.442695
    %v5079 = vpow.pop %v5078
    %v5080 = vmul.f32 %v5028, 1.442695
    %v5081 = vpow.pop %v5080
    %v5082 = vmul.f32 %v5029, 1.442695
    %v5083 = vpow.pop %v5082
    %v5084 = vmul.f32 %v5030, 1.442695
    %v5085 = vpow.pop %v5084
    %v5086 = vmul.f32 %v5031, 1.442695
    %v5087 = vpow.pop %v5086
    %v5088 = vmul.f32 %v5032, 1.442695
    %v5089 = vpow.pop %v5088
    %v5090 = vmul.f32 %v5033, 1.442695
    %v5091 = vpow.pop %v5090
    %v5092 = vmul.f32 %v5034, 1.442695
    %v5093 = vpow.pop %v5092
    %v5094 = vmul.f32 %v5035, 1.442695
    %v5095 = vpow.pop %v5094
    %v5096 = vmul.f32 %v5036, 1.442695
    %v5097 = vpow.pop %v5096
    %v5098 = vmul.f32 %v5037, 1.442695
    %v5099 = vpow.pop %v5098
    %v5100 = vmul.f32 %v5038, 1.442695
    %v5101 = vpow.pop %v5100
    %v5102 = vmul.f32 %v5039, 1.442695
    %v5103 = vpow.pop %v5102
    %5104 = vadd.xlane.f32.xlu0 %v5041
    %v5105 = vpop.xlane.xlu0 %5104
    %5106 = vadd.xlane.f32.xlu0 %v5043
    %v5107 = vpop.xlane.xlu0 %5106
    %5108 = vadd.xlane.f32.xlu0 %v5045
    %v5109 = vpop.xlane.xlu0 %5108
    %5110 = vadd.xlane.f32.xlu0 %v5047
    %v5111 = vpop.xlane.xlu0 %5110
    %5112 = vadd.xlane.f32.xlu0 %v5049
    %v5113 = vpop.xlane.xlu0 %5112
    %5114 = vadd.xlane.f32.xlu0 %v5051
    %v5115 = vpop.xlane.xlu0 %5114
    %5116 = vadd.xlane.f32.xlu0 %v5053
    %v5117 = vpop.xlane.xlu0 %5116
    %5118 = vadd.xlane.f32.xlu0 %v5055
    %v5119 = vpop.xlane.xlu0 %5118
    %5120 = vadd.xlane.f32.xlu0 %v5057
    %v5121 = vpop.xlane.xlu0 %5120
    %5122 = vadd.xlane.f32.xlu0 %v5059
    %v5123 = vpop.xlane.xlu0 %5122
    %5124 = vadd.xlane.f32.xlu0 %v5061
    %v5125 = vpop.xlane.xlu0 %5124
    %5126 = vadd.xlane.f32.xlu0 %v5063
    %v5127 = vpop.xlane.xlu0 %5126
    %5128 = vadd.xlane.f32.xlu0 %v5065
    %v5129 = vpop.xlane.xlu0 %5128
    %5130 = vadd.xlane.f32.xlu0 %v5067
    %v5131 = vpop.xlane.xlu0 %5130
    %5132 = vadd.xlane.f32.xlu0 %v5069
    %v5133 = vpop.xlane.xlu0 %5132
    %5134 = vadd.xlane.f32.xlu0 %v5071
    %v5135 = vpop.xlane.xlu0 %5134
    %5136 = vadd.xlane.f32.xlu0 %v5073
    %v5137 = vpop.xlane.xlu0 %5136
    %5138 = vadd.xlane.f32.xlu0 %v5075
    %v5139 = vpop.xlane.xlu0 %5138
    %5140 = vadd.xlane.f32.xlu0 %v5077
    %v5141 = vpop.xlane.xlu0 %5140
    %5142 = vadd.xlane.f32.xlu0 %v5079
    %v5143 = vpop.xlane.xlu0 %5142
    %5144 = vadd.xlane.f32.xlu0 %v5081
    %v5145 = vpop.xlane.xlu0 %5144
    %5146 = vadd.xlane.f32.xlu0 %v5083
    %v5147 = vpop.xlane.xlu0 %5146
    %5148 = vadd.xlane.f32.xlu0 %v5085
    %v5149 = vpop.xlane.xlu0 %5148
    %5150 = vadd.xlane.f32.xlu0 %v5087
    %v5151 = vpop.xlane.xlu0 %5150
    %5152 = vadd.xlane.f32.xlu0 %v5089
    %v5153 = vpop.xlane.xlu0 %5152
    %5154 = vadd.xlane.f32.xlu0 %v5091
    %v5155 = vpop.xlane.xlu0 %5154
    %5156 = vadd.xlane.f32.xlu0 %v5093
    %v5157 = vpop.xlane.xlu0 %5156
    %5158 = vadd.xlane.f32.xlu0 %v5095
    %v5159 = vpop.xlane.xlu0 %5158
    %5160 = vadd.xlane.f32.xlu0 %v5097
    %v5161 = vpop.xlane.xlu0 %5160
    %5162 = vadd.xlane.f32.xlu0 %v5099
    %v5163 = vpop.xlane.xlu0 %5162
    %5164 = vadd.xlane.f32.xlu0 %v5101
    %v5165 = vpop.xlane.xlu0 %5164
    %5166 = vadd.xlane.f32.xlu0 %v5103
    %v5167 = vpop.xlane.xlu0 %5166
    %v5168 = vrcp.pop %v5105
    %v5169 = vrcp.pop %v5107
    %v5170 = vrcp.pop %v5109
    %v5171 = vrcp.pop %v5111
    %v5172 = vrcp.pop %v5113
    %v5173 = vrcp.pop %v5115
    %v5174 = vrcp.pop %v5117
    %v5175 = vrcp.pop %v5119
    %v5176 = vrcp.pop %v5121
    %v5177 = vrcp.pop %v5123
    %v5178 = vrcp.pop %v5125
    %v5179 = vrcp.pop %v5127
    %v5180 = vrcp.pop %v5129
    %v5181 = vrcp.pop %v5131
    %v5182 = vrcp.pop %v5133
    %v5183 = vrcp.pop %v5135
    %v5184 = vrcp.pop %v5137
    %v5185 = vrcp.pop %v5139
    %v5186 = vrcp.pop %v5141
    %v5187 = vrcp.pop %v5143
    %v5188 = vrcp.pop %v5145
    %v5189 = vrcp.pop %v5147
    %v5190 = vrcp.pop %v5149
    %v5191 = vrcp.pop %v5151
    %v5192 = vrcp.pop %v5153
    %v5193 = vrcp.pop %v5155
    %v5194 = vrcp.pop %v5157
    %v5195 = vrcp.pop %v5159
    %v5196 = vrcp.pop %v5161
    %v5197 = vrcp.pop %v5163
    %v5198 = vrcp.pop %v5165
    %v5199 = vrcp.pop %v5167
    %v5200 = vmul.f32 %v5041, %v5168
    %v5201 = vmul.f32 %v5043, %v5169
    %v5202 = vmul.f32 %v5045, %v5170
    %v5203 = vmul.f32 %v5047, %v5171
    %v5204 = vmul.f32 %v5049, %v5172
    %v5205 = vmul.f32 %v5051, %v5173
    %v5206 = vmul.f32 %v5053, %v5174
    %v5207 = vmul.f32 %v5055, %v5175
    %v5208 = vmul.f32 %v5057, %v5176
    %v5209 = vmul.f32 %v5059, %v5177
    %v5210 = vmul.f32 %v5061, %v5178
    %v5211 = vmul.f32 %v5063, %v5179
    %v5212 = vmul.f32 %v5065, %v5180
    %v5213 = vmul.f32 %v5067, %v5181
    %v5214 = vmul.f32 %v5069, %v5182
    %v5215 = vmul.f32 %v5071, %v5183
    %v5216 = vmul.f32 %v5073, %v5184
    %v5217 = vmul.f32 %v5075, %v5185
    %v5218 = vmul.f32 %v5077, %v5186
    %v5219 = vmul.f32 %v5079, %v5187
    %v5220 = vmul.f32 %v5081, %v5188
    %v5221 = vmul.f32 %v5083, %v5189
    %v5222 = vmul.f32 %v5085, %v5190
    %v5223 = vmul.f32 %v5087, %v5191
    %v5224 = vmul.f32 %v5089, %v5192
    %v5225 = vmul.f32 %v5091, %v5193
    %v5226 = vmul.f32 %v5093, %v5194
    %v5227 = vmul.f32 %v5095, %v5195
    %v5228 = vmul.f32 %v5097, %v5196
    %v5229 = vmul.f32 %v5099, %v5197
    %v5230 = vmul.f32 %v5101, %v5198
    %v5231 = vmul.f32 %v5103, %v5199
    %v5232 = vlog2.pop %v5105
    %v5233 = vmul.f32 %v5232, 0.6931472
    %v5234 = vlog2.pop %v5107
    %v5235 = vmul.f32 %v5234, 0.6931472
    %v5236 = vlog2.pop %v5109
    %v5237 = vmul.f32 %v5236, 0.6931472
    %v5238 = vlog2.pop %v5111
    %v5239 = vmul.f32 %v5238, 0.6931472
    %v5240 = vlog2.pop %v5113
    %v5241 = vmul.f32 %v5240, 0.6931472
    %v5242 = vlog2.pop %v5115
    %v5243 = vmul.f32 %v5242, 0.6931472
    %v5244 = vlog2.pop %v5117
    %v5245 = vmul.f32 %v5244, 0.6931472
    %v5246 = vlog2.pop %v5119
    %v5247 = vmul.f32 %v5246, 0.6931472
    %v5248 = vlog2.pop %v5121
    %v5249 = vmul.f32 %v5248, 0.6931472
    %v5250 = vlog2.pop %v5123
    %v5251 = vmul.f32 %v5250, 0.6931472
    %v5252 = vlog2.pop %v5125
    %v5253 = vmul.f32 %v5252, 0.6931472
    %v5254 = vlog2.pop %v5127
    %v5255 = vmul.f32 %v5254, 0.6931472
    %v5256 = vlog2.pop %v5129
    %v5257 = vmul.f32 %v5256, 0.6931472
    %v5258 = vlog2.pop %v5131
    %v5259 = vmul.f32 %v5258, 0.6931472
    %v5260 = vlog2.pop %v5133
    %v5261 = vmul.f32 %v5260, 0.6931472
    %v5262 = vlog2.pop %v5135
    %v5263 = vmul.f32 %v5262, 0.6931472
    %v5264 = vlog2.pop %v5137
    %v5265 = vmul.f32 %v5264, 0.6931472
    %v5266 = vlog2.pop %v5139
    %v5267 = vmul.f32 %v5266, 0.6931472
    %v5268 = vlog2.pop %v5141
    %v5269 = vmul.f32 %v5268, 0.6931472
    %v5270 = vlog2.pop %v5143
    %v5271 = vmul.f32 %v5270, 0.6931472
    %v5272 = vlog2.pop %v5145
    %v5273 = vmul.f32 %v5272, 0.6931472
    %v5274 = vlog2.pop %v5147
    %v5275 = vmul.f32 %v5274, 0.6931472
    %v5276 = vlog2.pop %v5149
    %v5277 = vmul.f32 %v5276, 0.6931472
    %v5278 = vlog2.pop %v5151
    %v5279 = vmul.f32 %v5278, 0.6931472
    %v5280 = vlog2.pop %v5153
    %v5281 = vmul.f32 %v5280, 0.6931472
    %v5282 = vlog2.pop %v5155
    %v5283 = vmul.f32 %v5282, 0.6931472
    %v5284 = vlog2.pop %v5157
    %v5285 = vmul.f32 %v5284, 0.6931472
    %v5286 = vlog2.pop %v5159
    %v5287 = vmul.f32 %v5286, 0.6931472
    %v5288 = vlog2.pop %v5161
    %v5289 = vmul.f32 %v5288, 0.6931472
    %v5290 = vlog2.pop %v5163
    %v5291 = vmul.f32 %v5290, 0.6931472
    %v5292 = vlog2.pop %v5165
    %v5293 = vmul.f32 %v5292, 0.6931472
    %v5294 = vlog2.pop %v5167
    %v5295 = vmul.f32 %v5294, 0.6931472
    %v5296 = vsub.f32 %v5008, %v5233
    %v5297 = vsub.f32 %v5009, %v5235
    %v5298 = vsub.f32 %v5010, %v5237
    %v5299 = vsub.f32 %v5011, %v5239
    %v5300 = vsub.f32 %v5012, %v5241
    %v5301 = vsub.f32 %v5013, %v5243
    %v5302 = vsub.f32 %v5014, %v5245
    %v5303 = vsub.f32 %v5015, %v5247
    %v5304 = vsub.f32 %v5016, %v5249
    %v5305 = vsub.f32 %v5017, %v5251
    %v5306 = vsub.f32 %v5018, %v5253
    %v5307 = vsub.f32 %v5019, %v5255
    %v5308 = vsub.f32 %v5020, %v5257
    %v5309 = vsub.f32 %v5021, %v5259
    %v5310 = vsub.f32 %v5022, %v5261
    %v5311 = vsub.f32 %v5023, %v5263
    %v5312 = vsub.f32 %v5024, %v5265
    %v5313 = vsub.f32 %v5025, %v5267
    %v5314 = vsub.f32 %v5026, %v5269
    %v5315 = vsub.f32 %v5027, %v5271
    %v5316 = vsub.f32 %v5028, %v5273
    %v5317 = vsub.f32 %v5029, %v5275
    %v5318 = vsub.f32 %v5030, %v5277
    %v5319 = vsub.f32 %v5031, %v5279
    %v5320 = vsub.f32 %v5032, %v5281
    %v5321 = vsub.f32 %v5033, %v5283
    %v5322 = vsub.f32 %v5034, %v5285
    %v5323 = vsub.f32 %v5035, %v5287
    %v5324 = vsub.f32 %v5036, %v5289
    %v5325 = vsub.f32 %v5037, %v5291
    %v5326 = vsub.f32 %v5038, %v5293
    %v5327 = vsub.f32 %v5039, %v5295
    %5328 = vst [vmem:[#allocation5] sm:$0xff] %v5200
    %5329 = vst [vmem:[#allocation5 + $0x8] sm:$0xff] %v5201
    %5330 = vst [vmem:[#allocation5 + $0x10] sm:$0xff] %v5202
    %5331 = vst [vmem:[#allocation5 + $0x18] sm:$0xff] %v5203
    %5332 = vst [vmem:[#allocation5 + $0x20] sm:$0xff] %v5204
    %5333 = vst [vmem:[#allocation5 + $0x28] sm:$0xff] %v5205
    %5334 = vst [vmem:[#allocation5 + $0x30] sm:$0xff] %v5206
    %5335 = vst [vmem:[#allocation5 + $0x38] sm:$0xff] %v5207
    %5336 = vst [vmem:[#allocation5 + $0x40] sm:$0xff] %v5208
    %5337 = vst [vmem:[#allocation5 + $0x48] sm:$0xff] %v5209
    %5338 = vst [vmem:[#allocation5 + $0x50] sm:$0xff] %v5210
    %5339 = vst [vmem:[#allocation5 + $0x58] sm:$0xff] %v5211
    %5340 = vst [vmem:[#allocation5 + $0x60] sm:$0xff] %v5212
    %5341 = vst [vmem:[#allocation5 + $0x68] sm:$0xff] %v5213
    %5342 = vst [vmem:[#allocation5 + $0x70] sm:$0xff] %v5214
    %5343 = vst [vmem:[#allocation5 + $0x78] sm:$0xff] %v5215
    %5344 = vst [vmem:[#allocation5 + $0x80] sm:$0xff] %v5216
    %5345 = vst [vmem:[#allocation5 + $0x88] sm:$0xff] %v5217
    %5346 = vst [vmem:[#allocation5 + $0x90] sm:$0xff] %v5218
    %5347 = vst [vmem:[#allocation5 + $0x98] sm:$0xff] %v5219
    %5348 = vst [vmem:[#allocation5 + $0xa0] sm:$0xff] %v5220
    %5349 = vst [vmem:[#allocation5 + $0xa8] sm:$0xff] %v5221
    %5350 = vst [vmem:[#allocation5 + $0xb0] sm:$0xff] %v5222
    %5351 = vst [vmem:[#allocation5 + $0xb8] sm:$0xff] %v5223
    %5352 = vst [vmem:[#allocation5 + $0xc0] sm:$0xff] %v5224
    %5353 = vst [vmem:[#allocation5 + $0xc8] sm:$0xff] %v5225
    %5354 = vst [vmem:[#allocation5 + $0xd0] sm:$0xff] %v5226
    %5355 = vst [vmem:[#allocation5 + $0xd8] sm:$0xff] %v5227
    %5356 = vst [vmem:[#allocation5 + $0xe0] sm:$0xff] %v5228
    %5357 = vst [vmem:[#allocation5 + $0xe8] sm:$0xff] %v5229
    %5358 = vst [vmem:[#allocation5 + $0xf0] sm:$0xff] %v5230
    %5359 = vst [vmem:[#allocation5 + $0xf8] sm:$0xff] %v5231
    %v5360 = vmul.f32 %v55, %v5296
    %v5361 = vmul.f32 %v56, %v5297
    %v5362 = vmul.f32 %v57, %v5298
    %v5363 = vmul.f32 %v58, %v5299
    %v5364 = vmul.f32 %v59, %v5300
    %v5365 = vmul.f32 %v60, %v5301
    %v5366 = vmul.f32 %v61, %v5302
    %v5367 = vmul.f32 %v62, %v5303
    %v5368 = vmul.f32 %v63, %v5304
    %v5369 = vmul.f32 %v64, %v5305
    %v5370 = vmul.f32 %v65, %v5306
    %v5371 = vmul.f32 %v66, %v5307
    %v5372 = vmul.f32 %v67, %v5308
    %v5373 = vmul.f32 %v68, %v5309
    %v5374 = vmul.f32 %v69, %v5310
    %v5375 = vmul.f32 %v70, %v5311
    %v5376 = vmul.f32 %v71, %v5312
    %v5377 = vmul.f32 %v72, %v5313
    %v5378 = vmul.f32 %v73, %v5314
    %v5379 = vmul.f32 %v74, %v5315
    %v5380 = vmul.f32 %v75, %v5316
    %v5381 = vmul.f32 %v76, %v5317
    %v5382 = vmul.f32 %v77, %v5318
    %v5383 = vmul.f32 %v78, %v5319
    %v5384 = vmul.f32 %v79, %v5320
    %v5385 = vmul.f32 %v80, %v5321
    %v5386 = vmul.f32 %v81, %v5322
    %v5387 = vmul.f32 %v82, %v5323
    %v5388 = vmul.f32 %v83, %v5324
    %v5389 = vmul.f32 %v84, %v5325
    %v5390 = vmul.f32 %v85, %v5326
    %v5391 = vmul.f32 %v86, %v5327
    %5392 = vadd.xlane.f32.xlu0 %v5360
    %v5393 = vpop.xlane.xlu0 %5392
    %5394 = vadd.xlane.f32.xlu0 %v5361
    %v5395 = vpop.xlane.xlu0 %5394
    %5396 = vadd.xlane.f32.xlu0 %v5362
    %v5397 = vpop.xlane.xlu0 %5396
    %5398 = vadd.xlane.f32.xlu0 %v5363
    %v5399 = vpop.xlane.xlu0 %5398
    %5400 = vadd.xlane.f32.xlu0 %v5364
    %v5401 = vpop.xlane.xlu0 %5400
    %5402 = vadd.xlane.f32.xlu0 %v5365
    %v5403 = vpop.xlane.xlu0 %5402
    %5404 = vadd.xlane.f32.xlu0 %v5366
    %v5405 = vpop.xlane.xlu0 %5404
    %5406 = vadd.xlane.f32.xlu0 %v5367
    %v5407 = vpop.xlane.xlu0 %5406
    %5408 = vadd.xlane.f32.xlu0 %v5368
    %v5409 = vpop.xlane.xlu0 %5408
    %5410 = vadd.xlane.f32.xlu0 %v5369
    %v5411 = vpop.xlane.xlu0 %5410
    %5412 = vadd.xlane.f32.xlu0 %v5370
    %v5413 = vpop.xlane.xlu0 %5412
    %5414 = vadd.xlane.f32.xlu0 %v5371
    %v5415 = vpop.xlane.xlu0 %5414
    %5416 = vadd.xlane.f32.xlu0 %v5372
    %v5417 = vpop.xlane.xlu0 %5416
    %5418 = vadd.xlane.f32.xlu0 %v5373
    %v5419 = vpop.xlane.xlu0 %5418
    %5420 = vadd.xlane.f32.xlu0 %v5374
    %v5421 = vpop.xlane.xlu0 %5420
    %5422 = vadd.xlane.f32.xlu0 %v5375
    %v5423 = vpop.xlane.xlu0 %5422
    %5424 = vadd.xlane.f32.xlu0 %v5376
    %v5425 = vpop.xlane.xlu0 %5424
    %5426 = vadd.xlane.f32.xlu0 %v5377
    %v5427 = vpop.xlane.xlu0 %5426
    %5428 = vadd.xlane.f32.xlu0 %v5378
    %v5429 = vpop.xlane.xlu0 %5428
    %5430 = vadd.xlane.f32.xlu0 %v5379
    %v5431 = vpop.xlane.xlu0 %5430
    %5432 = vadd.xlane.f32.xlu0 %v5380
    %v5433 = vpop.xlane.xlu0 %5432
    %5434 = vadd.xlane.f32.xlu0 %v5381
    %v5435 = vpop.xlane.xlu0 %5434
    %5436 = vadd.xlane.f32.xlu0 %v5382
    %v5437 = vpop.xlane.xlu0 %5436
    %5438 = vadd.xlane.f32.xlu0 %v5383
    %v5439 = vpop.xlane.xlu0 %5438
    %5440 = vadd.xlane.f32.xlu0 %v5384
    %v5441 = vpop.xlane.xlu0 %5440
    %5442 = vadd.xlane.f32.xlu0 %v5385
    %v5443 = vpop.xlane.xlu0 %5442
    %5444 = vadd.xlane.f32.xlu0 %v5386
    %v5445 = vpop.xlane.xlu0 %5444
    %5446 = vadd.xlane.f32.xlu0 %v5387
    %v5447 = vpop.xlane.xlu0 %5446
    %5448 = vadd.xlane.f32.xlu0 %v5388
    %v5449 = vpop.xlane.xlu0 %5448
    %5450 = vadd.xlane.f32.xlu0 %v5389
    %v5451 = vpop.xlane.xlu0 %5450
    %5452 = vadd.xlane.f32.xlu0 %v5390
    %v5453 = vpop.xlane.xlu0 %5452
    %5454 = vadd.xlane.f32.xlu0 %v5391
    %v5455 = vpop.xlane.xlu0 %5454
    %v5456 = vsub.f32 0.0, %v5393
    %v5457 = vsub.f32 0.0, %v5395
    %v5458 = vsub.f32 0.0, %v5397
    %v5459 = vsub.f32 0.0, %v5399
    %v5460 = vsub.f32 0.0, %v5401
    %v5461 = vsub.f32 0.0, %v5403
    %v5462 = vsub.f32 0.0, %v5405
    %v5463 = vsub.f32 0.0, %v5407
    %v5464 = vsub.f32 0.0, %v5409
    %v5465 = vsub.f32 0.0, %v5411
    %v5466 = vsub.f32 0.0, %v5413
    %v5467 = vsub.f32 0.0, %v5415
    %v5468 = vsub.f32 0.0, %v5417
    %v5469 = vsub.f32 0.0, %v5419
    %v5470 = vsub.f32 0.0, %v5421
    %v5471 = vsub.f32 0.0, %v5423
    %v5472 = vsub.f32 0.0, %v5425
    %v5473 = vsub.f32 0.0, %v5427
    %v5474 = vsub.f32 0.0, %v5429
    %v5475 = vsub.f32 0.0, %v5431
    %v5476 = vsub.f32 0.0, %v5433
    %v5477 = vsub.f32 0.0, %v5435
    %v5478 = vsub.f32 0.0, %v5437
    %v5479 = vsub.f32 0.0, %v5439
    %v5480 = vsub.f32 0.0, %v5441
    %v5481 = vsub.f32 0.0, %v5443
    %v5482 = vsub.f32 0.0, %v5445
    %v5483 = vsub.f32 0.0, %v5447
    %v5484 = vsub.f32 0.0, %v5449
    %v5485 = vsub.f32 0.0, %v5451
    %v5486 = vsub.f32 0.0, %v5453
    %v5487 = vsub.f32 0.0, %v5455
    %v5488 = vadd.f32 %v5456, %v5457
    %v5489 = vadd.f32 %v5488, %v5458
    %v5490 = vadd.f32 %v5489, %v5459
    %v5491 = vadd.f32 %v5490, %v5460
    %v5492 = vadd.f32 %v5491, %v5461
    %v5493 = vadd.f32 %v5492, %v5462
    %v5494 = vadd.f32 %v5493, %v5463
    %v5495 = vadd.f32 %v5494, %v5464
    %v5496 = vadd.f32 %v5495, %v5465
    %v5497 = vadd.f32 %v5496, %v5466
    %v5498 = vadd.f32 %v5497, %v5467
    %v5499 = vadd.f32 %v5498, %v5468
    %v5500 = vadd.f32 %v5499, %v5469
    %v5501 = vadd.f32 %v5500, %v5470
    %v5502 = vadd.f32 %v5501, %v5471
    %v5503 = vadd.f32 %v5502, %v5472
    %v5504 = vadd.f32 %v5503, %v5473
    %v5505 = vadd.f32 %v5504, %v5474
    %v5506 = vadd.f32 %v5505, %v5475
    %v5507 = vadd.f32 %v5506, %v5476
    %v5508 = vadd.f32 %v5507, %v5477
    %v5509 = vadd.f32 %v5508, %v5478
    %v5510 = vadd.f32 %v5509, %v5479
    %v5511 = vadd.f32 %v5510, %v5480
    %v5512 = vadd.f32 %v5511, %v5481
    %v5513 = vadd.f32 %v5512, %v5482
    %v5514 = vadd.f32 %v5513, %v5483
    %v5515 = vadd.f32 %v5514, %v5484
    %v5516 = vadd.f32 %v5515, %v5485
    %v5517 = vadd.f32 %v5516, %v5486
    %v5518 = vadd.f32 %v5517, %v5487
    %v5519 = vrot.slane %v5518, 4
    %v5520 = vadd.f32 %v5518, %v5519
    %v5521 = vrot.slane %v5520, 2
    %v5522 = vadd.f32 %v5520, %v5521
    %v5523 = vrot.slane %v5522, 1
    %v5524 = vadd.f32 %v5522, %v5523
    %v5525 = vmul.f32 %v5524, 0.00390625
    %v5526 = vlaneseq
    %v5527 = vshrl.u32 %v5526, 7
    %v5528 = vsub.s32 4, %v5527
    %v5529 = vrot.slane %v87, %v5528
    %v5530 = vsub.f32 %v3565, %v5529
    %v5531 = vsub.f32 %v3566, %v5529
    %v5532 = vsub.f32 %v3567, %v5529
    %v5533 = vsub.f32 %v3568, %v5529
    %v5534 = vsub.f32 %v3569, %v5529
    %v5535 = vsub.f32 %v3570, %v5529
    %v5536 = vsub.f32 %v3571, %v5529
    %v5537 = vsub.f32 %v3572, %v5529
    %v5538 = vsub.f32 %v3573, %v5529
    %v5539 = vsub.f32 %v3574, %v5529
    %v5540 = vsub.f32 %v3575, %v5529
    %v5541 = vsub.f32 %v3576, %v5529
    %v5542 = vsub.f32 %v3577, %v5529
    %v5543 = vsub.f32 %v3578, %v5529
    %v5544 = vsub.f32 %v3579, %v5529
    %v5545 = vsub.f32 %v3580, %v5529
    %v5546 = vsub.f32 %v3581, %v5529
    %v5547 = vsub.f32 %v3582, %v5529
    %v5548 = vsub.f32 %v3583, %v5529
    %v5549 = vsub.f32 %v3584, %v5529
    %v5550 = vsub.f32 %v3585, %v5529
    %v5551 = vsub.f32 %v3586, %v5529
    %v5552 = vsub.f32 %v3587, %v5529
    %v5553 = vsub.f32 %v3588, %v5529
    %v5554 = vsub.f32 %v3589, %v5529
    %v5555 = vsub.f32 %v3590, %v5529
    %v5556 = vsub.f32 %v3591, %v5529
    %v5557 = vsub.f32 %v3592, %v5529
    %v5558 = vsub.f32 %v3593, %v5529
    %v5559 = vsub.f32 %v3594, %v5529
    %v5560 = vsub.f32 %v3595, %v5529
    %v5561 = vsub.f32 %v3596, %v5529
    %v5562 = vlaneseq
    %v5563 = vshrl.u32 %v5562, 7
    %v5564 = vsub.s32 6, %v5563
    %v5565 = vrot.slane %v87, %v5564
    %v5566 = vmul.f32 %v3931, %v5565
    %v5567 = vmul.f32 %v3932, %v5565
    %v5568 = vmul.f32 %v3933, %v5565
    %v5569 = vmul.f32 %v3934, %v5565
    %v5570 = vmul.f32 %v3935, %v5565
    %v5571 = vmul.f32 %v3936, %v5565
    %v5572 = vmul.f32 %v3937, %v5565
    %v5573 = vmul.f32 %v3938, %v5565
    %v5574 = vmul.f32 %v3939, %v5565
    %v5575 = vmul.f32 %v3940, %v5565
    %v5576 = vmul.f32 %v3941, %v5565
    %v5577 = vmul.f32 %v3942, %v5565
    %v5578 = vmul.f32 %v3943, %v5565
    %v5579 = vmul.f32 %v3944, %v5565
    %v5580 = vmul.f32 %v3945, %v5565
    %v5581 = vmul.f32 %v3946, %v5565
    %v5582 = vmul.f32 %v3947, %v5565
    %v5583 = vmul.f32 %v3948, %v5565
    %v5584 = vmul.f32 %v3949, %v5565
    %v5585 = vmul.f32 %v3950, %v5565
    %v5586 = vmul.f32 %v3951, %v5565
    %v5587 = vmul.f32 %v3952, %v5565
    %v5588 = vmul.f32 %v3953, %v5565
    %v5589 = vmul.f32 %v3954, %v5565
    %v5590 = vmul.f32 %v3955, %v5565
    %v5591 = vmul.f32 %v3956, %v5565
    %v5592 = vmul.f32 %v3957, %v5565
    %v5593 = vmul.f32 %v3958, %v5565
    %v5594 = vmul.f32 %v3959, %v5565
    %v5595 = vmul.f32 %v3960, %v5565
    %v5596 = vmul.f32 %v3961, %v5565
    %v5597 = vmul.f32 %v3962, %v5565
    %v5598 = vmul.f32 %v5530, %v5530
    %v5599 = vmul.f32 %v5531, %v5531
    %v5600 = vmul.f32 %v5532, %v5532
    %v5601 = vmul.f32 %v5533, %v5533
    %v5602 = vmul.f32 %v5534, %v5534
    %v5603 = vmul.f32 %v5535, %v5535
    %v5604 = vmul.f32 %v5536, %v5536
    %v5605 = vmul.f32 %v5537, %v5537
    %v5606 = vmul.f32 %v5538, %v5538
    %v5607 = vmul.f32 %v5539, %v5539
    %v5608 = vmul.f32 %v5540, %v5540
    %v5609 = vmul.f32 %v5541, %v5541
    %v5610 = vmul.f32 %v5542, %v5542
    %v5611 = vmul.f32 %v5543, %v5543
    %v5612 = vmul.f32 %v5544, %v5544
    %v5613 = vmul.f32 %v5545, %v5545
    %v5614 = vmul.f32 %v5546, %v5546
    %v5615 = vmul.f32 %v5547, %v5547
    %v5616 = vmul.f32 %v5548, %v5548
    %v5617 = vmul.f32 %v5549, %v5549
    %v5618 = vmul.f32 %v5550, %v5550
    %v5619 = vmul.f32 %v5551, %v5551
    %v5620 = vmul.f32 %v5552, %v5552
    %v5621 = vmul.f32 %v5553, %v5553
    %v5622 = vmul.f32 %v5554, %v5554
    %v5623 = vmul.f32 %v5555, %v5555
    %v5624 = vmul.f32 %v5556, %v5556
    %v5625 = vmul.f32 %v5557, %v5557
    %v5626 = vmul.f32 %v5558, %v5558
    %v5627 = vmul.f32 %v5559, %v5559
    %v5628 = vmul.f32 %v5560, %v5560
    %v5629 = vmul.f32 %v5561, %v5561
    %v5630 = vmul.f32 %v5598, %v5565
    %v5631 = vmul.f32 %v5599, %v5565
    %v5632 = vmul.f32 %v5600, %v5565
    %v5633 = vmul.f32 %v5601, %v5565
    %v5634 = vmul.f32 %v5602, %v5565
    %v5635 = vmul.f32 %v5603, %v5565
    %v5636 = vmul.f32 %v5604, %v5565
    %v5637 = vmul.f32 %v5605, %v5565
    %v5638 = vmul.f32 %v5606, %v5565
    %v5639 = vmul.f32 %v5607, %v5565
    %v5640 = vmul.f32 %v5608, %v5565
    %v5641 = vmul.f32 %v5609, %v5565
    %v5642 = vmul.f32 %v5610, %v5565
    %v5643 = vmul.f32 %v5611, %v5565
    %v5644 = vmul.f32 %v5612, %v5565
    %v5645 = vmul.f32 %v5613, %v5565
    %v5646 = vmul.f32 %v5614, %v5565
    %v5647 = vmul.f32 %v5615, %v5565
    %v5648 = vmul.f32 %v5616, %v5565
    %v5649 = vmul.f32 %v5617, %v5565
    %v5650 = vmul.f32 %v5618, %v5565
    %v5651 = vmul.f32 %v5619, %v5565
    %v5652 = vmul.f32 %v5620, %v5565
    %v5653 = vmul.f32 %v5621, %v5565
    %v5654 = vmul.f32 %v5622, %v5565
    %v5655 = vmul.f32 %v5623, %v5565
    %v5656 = vmul.f32 %v5624, %v5565
    %v5657 = vmul.f32 %v5625, %v5565
    %v5658 = vmul.f32 %v5626, %v5565
    %v5659 = vmul.f32 %v5627, %v5565
    %v5660 = vmul.f32 %v5628, %v5565
    %v5661 = vmul.f32 %v5629, %v5565
    %v5662 = vadd.f32 %v5566, %v5630
    %v5663 = vadd.f32 %v5567, %v5631
    %v5664 = vadd.f32 %v5568, %v5632
    %v5665 = vadd.f32 %v5569, %v5633
    %v5666 = vadd.f32 %v5570, %v5634
    %v5667 = vadd.f32 %v5571, %v5635
    %v5668 = vadd.f32 %v5572, %v5636
    %v5669 = vadd.f32 %v5573, %v5637
    %v5670 = vadd.f32 %v5574, %v5638
    %v5671 = vadd.f32 %v5575, %v5639
    %v5672 = vadd.f32 %v5576, %v5640
    %v5673 = vadd.f32 %v5577, %v5641
    %v5674 = vadd.f32 %v5578, %v5642
    %v5675 = vadd.f32 %v5579, %v5643
    %v5676 = vadd.f32 %v5580, %v5644
    %v5677 = vadd.f32 %v5581, %v5645
    %v5678 = vadd.f32 %v5582, %v5646
    %v5679 = vadd.f32 %v5583, %v5647
    %v5680 = vadd.f32 %v5584, %v5648
    %v5681 = vadd.f32 %v5585, %v5649
    %v5682 = vadd.f32 %v5586, %v5650
    %v5683 = vadd.f32 %v5587, %v5651
    %v5684 = vadd.f32 %v5588, %v5652
    %v5685 = vadd.f32 %v5589, %v5653
    %v5686 = vadd.f32 %v5590, %v5654
    %v5687 = vadd.f32 %v5591, %v5655
    %v5688 = vadd.f32 %v5592, %v5656
    %v5689 = vadd.f32 %v5593, %v5657
    %v5690 = vadd.f32 %v5594, %v5658
    %v5691 = vadd.f32 %v5595, %v5659
    %v5692 = vadd.f32 %v5596, %v5660
    %v5693 = vadd.f32 %v5597, %v5661
    %v5694 = vlaneseq
    %v5695 = vshrl.u32 %v5694, 7
    %v5696 = vsub.s32 5, %v5695
    %v5697 = vrot.slane %v87, %v5696
    %v5698 = vsub.f32 %v5697, %v3803
    %v5699 = vsub.f32 %v5697, %v3804
    %v5700 = vsub.f32 %v5697, %v3805
    %v5701 = vsub.f32 %v5697, %v3806
    %v5702 = vsub.f32 %v5697, %v3807
    %v5703 = vsub.f32 %v5697, %v3808
    %v5704 = vsub.f32 %v5697, %v3809
    %v5705 = vsub.f32 %v5697, %v3810
    %v5706 = vsub.f32 %v5697, %v3811
    %v5707 = vsub.f32 %v5697, %v3812
    %v5708 = vsub.f32 %v5697, %v3813
    %v5709 = vsub.f32 %v5697, %v3814
    %v5710 = vsub.f32 %v5697, %v3815
    %v5711 = vsub.f32 %v5697, %v3816
    %v5712 = vsub.f32 %v5697, %v3817
    %v5713 = vsub.f32 %v5697, %v3818
    %v5714 = vsub.f32 %v5697, %v3819
    %v5715 = vsub.f32 %v5697, %v3820
    %v5716 = vsub.f32 %v5697, %v3821
    %v5717 = vsub.f32 %v5697, %v3822
    %v5718 = vsub.f32 %v5697, %v3823
    %v5719 = vsub.f32 %v5697, %v3824
    %v5720 = vsub.f32 %v5697, %v3825
    %v5721 = vsub.f32 %v5697, %v3826
    %v5722 = vsub.f32 %v5697, %v3827
    %v5723 = vsub.f32 %v5697, %v3828
    %v5724 = vsub.f32 %v5697, %v3829
    %v5725 = vsub.f32 %v5697, %v3830
    %v5726 = vsub.f32 %v5697, %v3831
    %v5727 = vsub.f32 %v5697, %v3832
    %v5728 = vsub.f32 %v5697, %v3833
    %v5729 = vsub.f32 %v5697, %v3834
    %v5730 = vadd.f32 %v5662, %v5698
    %v5731 = vadd.f32 %v5663, %v5699
    %v5732 = vadd.f32 %v5664, %v5700
    %v5733 = vadd.f32 %v5665, %v5701
    %v5734 = vadd.f32 %v5666, %v5702
    %v5735 = vadd.f32 %v5667, %v5703
    %v5736 = vadd.f32 %v5668, %v5704
    %v5737 = vadd.f32 %v5669, %v5705
    %v5738 = vadd.f32 %v5670, %v5706
    %v5739 = vadd.f32 %v5671, %v5707
    %v5740 = vadd.f32 %v5672, %v5708
    %v5741 = vadd.f32 %v5673, %v5709
    %v5742 = vadd.f32 %v5674, %v5710
    %v5743 = vadd.f32 %v5675, %v5711
    %v5744 = vadd.f32 %v5676, %v5712
    %v5745 = vadd.f32 %v5677, %v5713
    %v5746 = vadd.f32 %v5678, %v5714
    %v5747 = vadd.f32 %v5679, %v5715
    %v5748 = vadd.f32 %v5680, %v5716
    %v5749 = vadd.f32 %v5681, %v5717
    %v5750 = vadd.f32 %v5682, %v5718
    %v5751 = vadd.f32 %v5683, %v5719
    %v5752 = vadd.f32 %v5684, %v5720
    %v5753 = vadd.f32 %v5685, %v5721
    %v5754 = vadd.f32 %v5686, %v5722
    %v5755 = vadd.f32 %v5687, %v5723
    %v5756 = vadd.f32 %v5688, %v5724
    %v5757 = vadd.f32 %v5689, %v5725
    %v5758 = vadd.f32 %v5690, %v5726
    %v5759 = vadd.f32 %v5691, %v5727
    %v5760 = vadd.f32 %v5692, %v5728
    %v5761 = vadd.f32 %v5693, %v5729
    %v5762 = vsel %vm3357, %v5730, 0.0
    %5763 = vadd.xlane.f32.xlu0 %v5762
    %v5764 = vpop.xlane.xlu0 %5763
    %v5765 = vsel %vm3357, %v5731, 0.0
    %5766 = vadd.xlane.f32.xlu0 %v5765
    %v5767 = vpop.xlane.xlu0 %5766
    %v5768 = vsel %vm3357, %v5732, 0.0
    %5769 = vadd.xlane.f32.xlu0 %v5768
    %v5770 = vpop.xlane.xlu0 %5769
    %v5771 = vsel %vm3357, %v5733, 0.0
    %5772 = vadd.xlane.f32.xlu0 %v5771
    %v5773 = vpop.xlane.xlu0 %5772
    %v5774 = vsel %vm3357, %v5734, 0.0
    %5775 = vadd.xlane.f32.xlu0 %v5774
    %v5776 = vpop.xlane.xlu0 %5775
    %v5777 = vsel %vm3357, %v5735, 0.0
    %5778 = vadd.xlane.f32.xlu0 %v5777
    %v5779 = vpop.xlane.xlu0 %5778
    %v5780 = vsel %vm3357, %v5736, 0.0
    %5781 = vadd.xlane.f32.xlu0 %v5780
    %v5782 = vpop.xlane.xlu0 %5781
    %v5783 = vsel %vm3357, %v5737, 0.0
    %5784 = vadd.xlane.f32.xlu0 %v5783
    %v5785 = vpop.xlane.xlu0 %5784
    %v5786 = vsel %vm3357, %v5738, 0.0
    %5787 = vadd.xlane.f32.xlu0 %v5786
    %v5788 = vpop.xlane.xlu0 %5787
    %v5789 = vsel %vm3357, %v5739, 0.0
    %5790 = vadd.xlane.f32.xlu0 %v5789
    %v5791 = vpop.xlane.xlu0 %5790
    %v5792 = vsel %vm3357, %v5740, 0.0
    %5793 = vadd.xlane.f32.xlu0 %v5792
    %v5794 = vpop.xlane.xlu0 %5793
    %v5795 = vsel %vm3357, %v5741, 0.0
    %5796 = vadd.xlane.f32.xlu0 %v5795
    %v5797 = vpop.xlane.xlu0 %5796
    %v5798 = vsel %vm3357, %v5742, 0.0
    %5799 = vadd.xlane.f32.xlu0 %v5798
    %v5800 = vpop.xlane.xlu0 %5799
    %v5801 = vsel %vm3357, %v5743, 0.0
    %5802 = vadd.xlane.f32.xlu0 %v5801
    %v5803 = vpop.xlane.xlu0 %5802
    %v5804 = vsel %vm3357, %v5744, 0.0
    %5805 = vadd.xlane.f32.xlu0 %v5804
    %v5806 = vpop.xlane.xlu0 %5805
    %v5807 = vsel %vm3357, %v5745, 0.0
    %5808 = vadd.xlane.f32.xlu0 %v5807
    %v5809 = vpop.xlane.xlu0 %5808
    %v5810 = vsel %vm3357, %v5746, 0.0
    %5811 = vadd.xlane.f32.xlu0 %v5810
    %v5812 = vpop.xlane.xlu0 %5811
    %v5813 = vsel %vm3357, %v5747, 0.0
    %5814 = vadd.xlane.f32.xlu0 %v5813
    %v5815 = vpop.xlane.xlu0 %5814
    %v5816 = vsel %vm3357, %v5748, 0.0
    %5817 = vadd.xlane.f32.xlu0 %v5816
    %v5818 = vpop.xlane.xlu0 %5817
    %v5819 = vsel %vm3357, %v5749, 0.0
    %5820 = vadd.xlane.f32.xlu0 %v5819
    %v5821 = vpop.xlane.xlu0 %5820
    %v5822 = vsel %vm3357, %v5750, 0.0
    %5823 = vadd.xlane.f32.xlu0 %v5822
    %v5824 = vpop.xlane.xlu0 %5823
    %v5825 = vsel %vm3357, %v5751, 0.0
    %5826 = vadd.xlane.f32.xlu0 %v5825
    %v5827 = vpop.xlane.xlu0 %5826
    %v5828 = vsel %vm3357, %v5752, 0.0
    %5829 = vadd.xlane.f32.xlu0 %v5828
    %v5830 = vpop.xlane.xlu0 %5829
    %v5831 = vsel %vm3357, %v5753, 0.0
    %5832 = vadd.xlane.f32.xlu0 %v5831
    %v5833 = vpop.xlane.xlu0 %5832
    %v5834 = vsel %vm3357, %v5754, 0.0
    %5835 = vadd.xlane.f32.xlu0 %v5834
    %v5836 = vpop.xlane.xlu0 %5835
    %v5837 = vsel %vm3357, %v5755, 0.0
    %5838 = vadd.xlane.f32.xlu0 %v5837
    %v5839 = vpop.xlane.xlu0 %5838
    %v5840 = vsel %vm3357, %v5756, 0.0
    %5841 = vadd.xlane.f32.xlu0 %v5840
    %v5842 = vpop.xlane.xlu0 %5841
    %v5843 = vsel %vm3357, %v5757, 0.0
    %5844 = vadd.xlane.f32.xlu0 %v5843
    %v5845 = vpop.xlane.xlu0 %5844
    %v5846 = vsel %vm3357, %v5758, 0.0
    %5847 = vadd.xlane.f32.xlu0 %v5846
    %v5848 = vpop.xlane.xlu0 %5847
    %v5849 = vsel %vm3357, %v5759, 0.0
    %5850 = vadd.xlane.f32.xlu0 %v5849
    %v5851 = vpop.xlane.xlu0 %5850
    %v5852 = vsel %vm3357, %v5760, 0.0
    %5853 = vadd.xlane.f32.xlu0 %v5852
    %v5854 = vpop.xlane.xlu0 %5853
    %v5855 = vsel %vm3357, %v5761, 0.0
    %5856 = vadd.xlane.f32.xlu0 %v5855
    %v5857 = vpop.xlane.xlu0 %5856
    %v5858 = vadd.f32 %v5764, %v5767
    %v5859 = vadd.f32 %v5858, %v5770
    %v5860 = vadd.f32 %v5859, %v5773
    %v5861 = vadd.f32 %v5860, %v5776
    %v5862 = vadd.f32 %v5861, %v5779
    %v5863 = vadd.f32 %v5862, %v5782
    %v5864 = vadd.f32 %v5863, %v5785
    %v5865 = vadd.f32 %v5864, %v5788
    %v5866 = vadd.f32 %v5865, %v5791
    %v5867 = vadd.f32 %v5866, %v5794
    %v5868 = vadd.f32 %v5867, %v5797
    %v5869 = vadd.f32 %v5868, %v5800
    %v5870 = vadd.f32 %v5869, %v5803
    %v5871 = vadd.f32 %v5870, %v5806
    %v5872 = vadd.f32 %v5871, %v5809
    %v5873 = vadd.f32 %v5872, %v5812
    %v5874 = vadd.f32 %v5873, %v5815
    %v5875 = vadd.f32 %v5874, %v5818
    %v5876 = vadd.f32 %v5875, %v5821
    %v5877 = vadd.f32 %v5876, %v5824
    %v5878 = vadd.f32 %v5877, %v5827
    %v5879 = vadd.f32 %v5878, %v5830
    %v5880 = vadd.f32 %v5879, %v5833
    %v5881 = vadd.f32 %v5880, %v5836
    %v5882 = vadd.f32 %v5881, %v5839
    %v5883 = vadd.f32 %v5882, %v5842
    %v5884 = vadd.f32 %v5883, %v5845
    %v5885 = vadd.f32 %v5884, %v5848
    %v5886 = vadd.f32 %v5885, %v5851
    %v5887 = vadd.f32 %v5886, %v5854
    %v5888 = vadd.f32 %v5887, %v5857
    %v5889 = vrot.slane %v5888, 4
    %v5890 = vadd.f32 %v5888, %v5889
    %v5891 = vrot.slane %v5890, 2
    %v5892 = vadd.f32 %v5890, %v5891
    %v5893 = vrot.slane %v5892, 1
    %v5894 = vadd.f32 %v5892, %v5893
    %v5895 = vmul.f32 %v5894, 0.00390625
    %v5896 = vsub.f32 %v5895, 16.0
    %v5897 = vmul.f32 %v5896, 0.5
    %v5898 = vlaneseq
    %v5899 = vand.u32 %v5898, 127
    %vm5900 = vcmp.eq.s32.totalorder %v5899, 0
    %v5901 = vsel %vm5900, %v5525, 0.0
    %vm5902 = vcmp.eq.s32.totalorder %v5899, 1
    %v5903 = vsel %vm5902, %v5897, 0.0
    %v5904 = vadd.f32 %v5901, %v5903
    %5905 = vst [vmem:[#allocation6] sm:$0x1] %v5904
    // Predicated region
    $region46: #{tpu_custom_call.1} parent=1 // pred_check
      _
    $region47: #{tpu_custom_call.1} parent=1 // pred_check_branch
      %5907 = sbr.rel (0) target = $region49
    $region48: #{tpu_custom_call.1} parent=1 // pred_region
      _
    $region49: #{tpu_custom_call.1} parent=1 // pred_fallthru
      _
    // Predicated region
    $region50: #{tpu_custom_call.1} parent=1 // pred_check
      _
    $region51: #{tpu_custom_call.1} parent=1 // pred_check_branch
      %5909 = sbr.rel (0) target = $region53
    $region52: #{tpu_custom_call.1} parent=1 // pred_region
      %s5911 = ssub.s32 4096, 4096
      %5912 = vsyncadd [#allocation4], %s5911
      %s5913 = sshll.u32 [#allocation5], 4
      %s5914 = int_to_ptr.vmem [resolvable:$true] %s5913
      %5919 = dma.vmem_to_hbm [thread:$0]  %s5914, 4096, %s11, [#allocation4], 128, 128, 8
    $region53: #{tpu_custom_call.1} parent=1 // pred_fallthru
      _
    // Predicated region
    $region54: #{tpu_custom_call.1} parent=1 // pred_check
      _
    $region55: #{tpu_custom_call.1} parent=1 // pred_check_branch
      %5921 = sbr.rel (0) target = $region57
    $region56: #{tpu_custom_call.1} parent=1 // pred_region
      %s5923 = ssub.s32 16, 16
      %5924 = vsyncadd [#allocation7], %s5923
      %s5926 = sshll.u32 [#allocation6], 4
      %s5927 = int_to_ptr.vmem [resolvable:$true] %s5926
      %5929 = dma.vmem_to_hbm [thread:$0]  %s5927, 16, %s12, [#allocation7]
    $region57: #{tpu_custom_call.1} parent=1 // pred_fallthru
      _
    // Predicated region
    $region58: #{tpu_custom_call.1} parent=1 // pred_check
      _
    $region59: #{tpu_custom_call.1} parent=1 // pred_check_branch
      %5931 = sbr.rel (0) target = $region61
    $region60: #{tpu_custom_call.1} parent=1 // pred_region
      _
    $region61: #{tpu_custom_call.1} parent=1 // pred_fallthru
      _
    // Predicated region
    $region62: #{tpu_custom_call.1} parent=1 // pred_check
      _
    $region63: #{tpu_custom_call.1} parent=1 // pred_check_branch
      %5933 = sbr.rel (0) target = $region65
    $region64: #{tpu_custom_call.1} parent=1 // pred_region
      %5934 = dma.done [#allocation4], 4096
    $region65: #{tpu_custom_call.1} parent=1 // pred_fallthru
      _
    // Predicated region
    $region66: #{tpu_custom_call.1} parent=1 // pred_check
      _
    $region67: #{tpu_custom_call.1} parent=1 // pred_check_branch
      %5936 = sbr.rel (0) target = $region69
    $region68: #{tpu_custom_call.1} parent=1 // pred_region
      %5937 = dma.done [#allocation7], 16
    $region69: #{tpu_custom_call.1} parent=1 // pred_fallthru
      _
    %5938 = vsyncpa [#allocation3], 1
    %5939 = vsyncpa [#allocation4], 1
    %5940 = vsyncpa [#allocation7], 1

</llo_original>
